<compile_context>
chip_gen: v6e
topology: v6e:2x2x1
jax: 0.10.0
libtpu: 0.0.40
codegen_flags: <defaults>
</compile_context>

<pallas_src>
import functools

import jax
import jax.numpy as jnp
from jax.experimental import pallas as pl
from jax.experimental.pallas import tpu as pltpu


def _leaky_relu(h, alpha):
    return jnp.where(h >= 0, h, alpha * h)


def _elu(h):
    # exp only sees the clamped value -> no inf on the discarded branch
    return jnp.where(h >= 0, h, jnp.exp(jnp.minimum(h, 0.0)) - 1.0)


def _round_up(v, m):
    return (v + m - 1) // m * m


def bidirectional_encoder_kernel(
        x_ref, a_ref,
        wlin_ref, blin_ref, opeps_ref,
        w1_ref, b1_ref, s1_ref, t1_ref,
        w2_ref, b2_ref, s2_ref, t2_ref,
        waggi_ref, waggo_ref, bagg_ref,
        wpool_ref, bpool_ref,
        out_ref, *, layer_num):
    f32 = jnp.float32
    bf16 = jnp.bfloat16
    n = a_ref.shape[0]
    enc_p = out_ref.shape[1]

    # x = self.linear(x): [N, in_dim] @ [in_dim, hid] + b
    x = jnp.dot(x_ref[...], wlin_ref[...], preferred_element_type=f32) + blin_ref[...]

    # Layer-invariant adjacency products, hoisted out of the layer loop.
    # bf16 operands (A is 0/1 -> exact), f32 accumulation.
    a = a_ref[...]                                   # bf16 [N, N]
    xb = x.astype(bf16)
    ax = jnp.dot(a, xb, preferred_element_type=f32)  # A   @ x
    atx = jax.lax.dot_general(                       # A.T @ x (no transposed copy of A)
        a, xb, dimension_numbers=(((0,), (0,)), ((), ())),
        preferred_element_type=f32)

    # Loop-invariant weight loads hoisted out of the unrolled layer loop.
    waggi = waggi_ref[...]
    waggo = waggo_ref[...]
    bagg = bagg_ref[...]

    def gin_mlp(support, idx):
        # GIN post_transformation: 2 FCLayers.
        # FCLayer = LeakyReLU(0.2)(Linear) -> Dropout(identity, eval) -> ELU(BatchNorm1d)
        h = jnp.dot(support, w1_ref[idx], preferred_element_type=f32) + b1_ref[idx]
        h = _leaky_relu(h, 0.2)
        h = _elu(h * s1_ref[idx] + t1_ref[idx])
        h = jnp.dot(h, w2_ref[idx], preferred_element_type=f32) + b2_ref[idx]
        h = _leaky_relu(h, 0.2)
        h = _elu(h * s2_ref[idx] + t2_ref[idx])
        return h

    # pooling(cat(hierarchy, dim=1)) == sum_l biflow_l @ Wpool[l] + bpool
    acc = jnp.zeros((n, enc_p), dtype=f32) + bpool_ref[...]
    for layer in range(layer_num):
        idx_in = layer                 # in-flow GIN (adjacency A)
        idx_out = layer_num + layer    # out-flow GIN (adjacency A.T)
        # support = (A + (1+eps)I) @ x == A@x + (1+eps)*x
        sup_in = ax + opeps_ref[idx_in] * x
        sup_out = atx + opeps_ref[idx_out] * x
        h_in = gin_mlp(sup_in, idx_in)
        h_out = gin_mlp(sup_out, idx_out)
        # aggregator(cat([h_in, h_out], dim=1)) == h_in @ Wagg[:hid] + h_out @ Wagg[hid:]
        biflow = (jnp.dot(h_in, waggi, preferred_element_type=f32)
                  + jnp.dot(h_out, waggo, preferred_element_type=f32)
                  + bagg)
        biflow = _leaky_relu(biflow, 0.01)  # F.leaky_relu default negative_slope
        acc = acc + jnp.dot(biflow, wpool_ref[layer], preferred_element_type=f32)

    out_ref[...] = acc


def bidirectional_encoder(x, A, params, *, layer_num, interpret=False):
    """x: [B, N, in_dim] (or [N, in_dim]); A: [B, N, N] (or [N, N]).
    Weights are shared across the batch (== vmapping the PyTorch module over graphs)."""
    squeeze = x.ndim == 2
    if squeeze:
        x, A = x[None], A[None]
    B, N, in_dim = x.shape
    f32 = jnp.float32
    hid = params["wlin"].shape[1]
    enc = params["wpool"].shape[1]
    enc_p = _round_up(enc, 128)  # lane-dense encode path / output store

    # (1 + eps) rows, one per GIN layer, read like a bias inside the kernel.
    opeps = jnp.tile((1.0 + params["eps"].astype(f32))[:, None, None], (1, 1, hid))

    # Split aggregator weight into in-flow / out-flow halves (cat == split matmul);
    # reshape pooling weight per hierarchy level; zero-pad encode dim to enc_p lanes.
    wagg = params["wagg"].astype(f32)
    waggi = jnp.zeros((hid, enc_p), f32).at[:, :enc].set(wagg[:hid])
    waggo = jnp.zeros((hid, enc_p), f32).at[:, :enc].set(wagg[hid:])
    bagg = jnp.zeros((1, enc_p), f32).at[:, :enc].set(params["bagg"].astype(f32))
    wpool = params["wpool"].astype(f32).reshape(layer_num, enc, enc)
    wpool_p = jnp.zeros((layer_num, enc_p, enc_p), f32).at[:, :enc, :enc].set(wpool)
    bpool = jnp.zeros((1, enc_p), f32).at[:, :enc].set(params["bpool"].astype(f32))

    a_bf16 = A.astype(jnp.bfloat16)  # 0/1 adjacency: exact in bf16, half the HBM/VMEM bytes

    def resident(arr):  # whole array, stays VMEM-resident across the graph grid
        zeros = (0,) * arr.ndim
        return pl.BlockSpec(arr.shape, lambda b, z=zeros: z)

    weights = (params["wlin"].astype(f32), params["blin"].astype(f32), opeps,
               params["w1"], params["b1"], params["s1"], params["t1"],
               params["w2"], params["b2"], params["s2"], params["t2"],
               waggi, waggo, bagg, wpool_p, bpool)

    kernel = functools.partial(bidirectional_encoder_kernel, layer_num=layer_num)
    out = pl.pallas_call(
        kernel,
        out_shape=jax.ShapeDtypeStruct((B, N, enc_p), f32),
        grid=(B,),
        in_specs=[pl.BlockSpec((None, N, in_dim), lambda b: (b, 0, 0)),
                  pl.BlockSpec((None, N, N), lambda b: (b, 0, 0))]
                 + [resident(w) for w in weights],
        out_specs=pl.BlockSpec((None, N, enc_p), lambda b: (b, 0, 0)),
        compiler_params=pltpu.CompilerParams(
            dimension_semantics=("parallel",),  # graphs shard across TCs (v7x megacore)
        ),
        interpret=interpret,
    )(x.astype(f32), a_bf16, *weights)

    out = out[..., :enc]  # drop lane padding
    return out[0] if squeeze else out


def init_params(key, in_dim, hid_dim, encode_dim, layer_num, hid_mlp=16):
    """Deterministic synthetic init mirroring the PyTorch module's parameter shapes."""
    n_gin = 2 * layer_num  # in-flow GIN layers first, then out-flow, stacked along axis 0
    keys = jax.random.split(key, 8)

    def u(k, shape, scale=0.1):
        return jax.random.uniform(k, shape, jnp.float32, -scale, scale)

    # BatchNorm1d eval with default buffers: y = x / sqrt(1 + 1e-5) (gamma=1, beta=0)
    bn_scale = float(1.0 / jnp.sqrt(1.0 + 1e-5))

    params = {
        "wlin": u(keys[0], (in_dim, hid_dim)),
        "blin": u(keys[1], (1, hid_dim)),
        "eps": jnp.full((n_gin,), 0.1, jnp.float32),                  # GINLayer.epsilon init
        "w1": u(keys[2], (n_gin, hid_dim, hid_mlp)),
        "b1": jnp.zeros((n_gin, 1, hid_mlp), jnp.float32),            # FCLayer bias zeroed
        "s1": jnp.full((n_gin, 1, hid_mlp), bn_scale, jnp.float32),
        "t1": jnp.zeros((n_gin, 1, hid_mlp), jnp.float32),
        "w2": u(keys[3], (n_gin, hid_mlp, hid_dim)),
        "b2": jnp.zeros((n_gin, 1, hid_dim), jnp.float32),
        "s2": jnp.full((n_gin, 1, hid_dim), bn_scale, jnp.float32),
        "t2": jnp.zeros((n_gin, 1, hid_dim), jnp.float32),
        "wagg": u(keys[4], (2 * hid_dim, encode_dim)),
        "bagg": u(keys[5], (1, encode_dim)),
        "wpool": u(keys[6], (encode_dim * layer_num, encode_dim)),
        "bpool": u(keys[7], (1, encode_dim)),
    }
    return params


if __name__ == "__main__":
    key = jax.random.PRNGKey(0)
    B, N, in_dim, hid_dim, encode_dim, layer_num = 4, 16, 8, 32, 16, 3

    kx, ka, kp = jax.random.split(key, 3)
    x = jax.random.normal(kx, (B, N, in_dim), jnp.float32)
    A = (jax.random.uniform(ka, (B, N, N)) < 0.3).astype(jnp.float32)  # synthetic adjacency

    params = init_params(kp, in_dim, hid_dim, encode_dim, layer_num)

    out = bidirectional_encoder(x, A, params, layer_num=layer_num)
    out = jax.block_until_ready(out)
    assert out.shape == (B, N, encode_dim), out.shape
    print("KERNEL_OK")
</pallas_src>

<mosaic_0001>
module attributes {stable_mosaic.version = 11 : i64} {
  func.func @bidirectional_encoder_kernel(%arg0: i32, %arg1: memref<1x16x8xf32, #tpu.memory_space<vmem>>, %arg2: memref<1x16x16xbf16, #tpu.memory_space<vmem>>, %arg3: memref<8x32xf32, #tpu.memory_space<vmem>>, %arg4: memref<1x32xf32, #tpu.memory_space<vmem>>, %arg5: memref<6x1x32xf32, #tpu.memory_space<vmem>>, %arg6: memref<6x32x16xf32, #tpu.memory_space<vmem>>, %arg7: memref<6x1x16xf32, #tpu.memory_space<vmem>>, %arg8: memref<6x1x16xf32, #tpu.memory_space<vmem>>, %arg9: memref<6x1x16xf32, #tpu.memory_space<vmem>>, %arg10: memref<6x16x32xf32, #tpu.memory_space<vmem>>, %arg11: memref<6x1x32xf32, #tpu.memory_space<vmem>>, %arg12: memref<6x1x32xf32, #tpu.memory_space<vmem>>, %arg13: memref<6x1x32xf32, #tpu.memory_space<vmem>>, %arg14: memref<32x128xf32, #tpu.memory_space<vmem>>, %arg15: memref<32x128xf32, #tpu.memory_space<vmem>>, %arg16: memref<1x128xf32, #tpu.memory_space<vmem>>, %arg17: memref<3x128x128xf32, #tpu.memory_space<vmem>>, %arg18: memref<1x128xf32, #tpu.memory_space<vmem>>, %arg19: memref<1x16x128xf32, #tpu.memory_space<vmem>>) attributes {dimension_semantics = [#tpu.dimension_semantics<parallel>], iteration_bounds = array<i64: 4>, scalar_prefetch = 0 : i64, scratch_operands = 0 : i64, tpu.core_type = #tpu.core_type<tc>, window_params = [{transform_indices = @transform_0, window_bounds = array<i64: 1, 16, 8>}, {transform_indices = @transform_1, window_bounds = array<i64: 1, 16, 16>}, {pipeline_mode = #tpu.pipeline_mode<synchronous>, transform_indices = @transform_2, window_bounds = array<i64: 8, 32>}, {pipeline_mode = #tpu.pipeline_mode<synchronous>, transform_indices = @transform_3, window_bounds = array<i64: 1, 32>}, {pipeline_mode = #tpu.pipeline_mode<synchronous>, transform_indices = @transform_4, window_bounds = array<i64: 6, 1, 32>}, {pipeline_mode = #tpu.pipeline_mode<synchronous>, transform_indices = @transform_5, window_bounds = array<i64: 6, 32, 16>}, {pipeline_mode = #tpu.pipeline_mode<synchronous>, transform_indices = @transform_6, window_bounds = array<i64: 6, 1, 16>}, {pipeline_mode = #tpu.pipeline_mode<synchronous>, transform_indices = @transform_7, window_bounds = array<i64: 6, 1, 16>}, {pipeline_mode = #tpu.pipeline_mode<synchronous>, transform_indices = @transform_8, window_bounds = array<i64: 6, 1, 16>}, {pipeline_mode = #tpu.pipeline_mode<synchronous>, transform_indices = @transform_9, window_bounds = array<i64: 6, 16, 32>}, {pipeline_mode = #tpu.pipeline_mode<synchronous>, transform_indices = @transform_10, window_bounds = array<i64: 6, 1, 32>}, {pipeline_mode = #tpu.pipeline_mode<synchronous>, transform_indices = @transform_11, window_bounds = array<i64: 6, 1, 32>}, {pipeline_mode = #tpu.pipeline_mode<synchronous>, transform_indices = @transform_12, window_bounds = array<i64: 6, 1, 32>}, {pipeline_mode = #tpu.pipeline_mode<synchronous>, transform_indices = @transform_13, window_bounds = array<i64: 32, 128>}, {pipeline_mode = #tpu.pipeline_mode<synchronous>, transform_indices = @transform_14, window_bounds = array<i64: 32, 128>}, {pipeline_mode = #tpu.pipeline_mode<synchronous>, transform_indices = @transform_15, window_bounds = array<i64: 1, 128>}, {pipeline_mode = #tpu.pipeline_mode<synchronous>, transform_indices = @transform_16, window_bounds = array<i64: 3, 128, 128>}, {pipeline_mode = #tpu.pipeline_mode<synchronous>, transform_indices = @transform_17, window_bounds = array<i64: 1, 128>}, {transform_indices = @transform_18, window_bounds = array<i64: 1, 16, 128>}]} {
    %c0 = arith.constant 0 : index
    %c0_0 = arith.constant 0 : index
    %c0_1 = arith.constant 0 : index
    %0 = vector.load %arg1[%c0, %c0_0, %c0_1] : memref<1x16x8xf32, #tpu.memory_space<vmem>>, vector<1x16x8xf32>
    %1 = vector.shape_cast %0 : vector<1x16x8xf32> to vector<16x8xf32>
    %c0_2 = arith.constant 0 : index
    %c0_3 = arith.constant 0 : index
    %2 = vector.load %arg3[%c0_2, %c0_3] : memref<8x32xf32, #tpu.memory_space<vmem>>, vector<8x32xf32>
    %cst = arith.constant dense<0.000000e+00> : vector<16x32xf32>
    %3 = tpu.matmul %1, %2, %cst {dimension_numbers = #tpu.dot_dimension_numbers<[1], [0], [0], [1], [0, 0, 1, 1], [], []>} : vector<16x8xf32>, vector<8x32xf32>, vector<16x32xf32> -> vector<16x32xf32>
    %c0_4 = arith.constant 0 : index
    %c0_5 = arith.constant 0 : index
    %4 = vector.load %arg4[%c0_4, %c0_5] : memref<1x32xf32, #tpu.memory_space<vmem>>, vector<1x32xf32>
    %5 = vector.broadcast %4 : vector<1x32xf32> to vector<16x32xf32>
    %6 = arith.addf %3, %5 : vector<16x32xf32>
    %c0_6 = arith.constant 0 : index
    %c0_7 = arith.constant 0 : index
    %c0_8 = arith.constant 0 : index
    %7 = vector.load %arg2[%c0_6, %c0_7, %c0_8] : memref<1x16x16xbf16, #tpu.memory_space<vmem>>, vector<1x16x16xbf16>
    %8 = vector.shape_cast %7 : vector<1x16x16xbf16> to vector<16x16xbf16>
    %9 = arith.truncf %6 : vector<16x32xf32> to vector<16x32xbf16>
    %cst_9 = arith.constant dense<0.000000e+00> : vector<16x32xf32>
    %10 = tpu.matmul %8, %9, %cst_9 {dimension_numbers = #tpu.dot_dimension_numbers<[1], [0], [0], [1], [0, 0, 1, 1], [], []>} : vector<16x16xbf16>, vector<16x32xbf16>, vector<16x32xf32> -> vector<16x32xf32>
    %cst_10 = arith.constant dense<0.000000e+00> : vector<16x32xf32>
    %11 = tpu.matmul %8, %9, %cst_10 {dimension_numbers = #tpu.dot_dimension_numbers<[0], [0], [1], [1], [0, 1, 1, 1], [], []>} : vector<16x16xbf16>, vector<16x32xbf16>, vector<16x32xf32> -> vector<16x32xf32>
    %c0_11 = arith.constant 0 : index
    %c0_12 = arith.constant 0 : index
    %12 = vector.load %arg14[%c0_11, %c0_12] : memref<32x128xf32, #tpu.memory_space<vmem>>, vector<32x128xf32>
    %c0_13 = arith.constant 0 : index
    %c0_14 = arith.constant 0 : index
    %13 = vector.load %arg15[%c0_13, %c0_14] : memref<32x128xf32, #tpu.memory_space<vmem>>, vector<32x128xf32>
    %c0_15 = arith.constant 0 : index
    %c0_16 = arith.constant 0 : index
    %14 = vector.load %arg16[%c0_15, %c0_16] : memref<1x128xf32, #tpu.memory_space<vmem>>, vector<1x128xf32>
    %cst_17 = arith.constant 0.000000e+00 : f32
    %15 = vector.broadcast %cst_17 : f32 to vector<16x128xf32>
    %c0_18 = arith.constant 0 : index
    %c0_19 = arith.constant 0 : index
    %16 = vector.load %arg18[%c0_18, %c0_19] : memref<1x128xf32, #tpu.memory_space<vmem>>, vector<1x128xf32>
    %17 = vector.broadcast %16 : vector<1x128xf32> to vector<16x128xf32>
    %18 = arith.addf %15, %17 : vector<16x128xf32>
    %c0_20 = arith.constant 0 : index
    %c0_21 = arith.constant 0 : index
    %c0_22 = arith.constant 0 : index
    %19 = vector.load %arg5[%c0_20, %c0_21, %c0_22] : memref<6x1x32xf32, #tpu.memory_space<vmem>>, vector<1x1x32xf32>
    %20 = vector.shape_cast %19 : vector<1x1x32xf32> to vector<1x32xf32>
    %21 = vector.broadcast %20 : vector<1x32xf32> to vector<16x32xf32>
    %22 = arith.mulf %21, %6 : vector<16x32xf32>
    %23 = arith.addf %10, %22 : vector<16x32xf32>
    %c3 = arith.constant 3 : index
    %c0_23 = arith.constant 0 : index
    %c0_24 = arith.constant 0 : index
    %24 = vector.load %arg5[%c3, %c0_23, %c0_24] : memref<6x1x32xf32, #tpu.memory_space<vmem>>, vector<1x1x32xf32>
    %25 = vector.shape_cast %24 : vector<1x1x32xf32> to vector<1x32xf32>
    %26 = vector.broadcast %25 : vector<1x32xf32> to vector<16x32xf32>
    %27 = arith.mulf %26, %6 : vector<16x32xf32>
    %28 = arith.addf %11, %27 : vector<16x32xf32>
    %c0_25 = arith.constant 0 : index
    %c0_26 = arith.constant 0 : index
    %c0_27 = arith.constant 0 : index
    %29 = vector.load %arg6[%c0_25, %c0_26, %c0_27] : memref<6x32x16xf32, #tpu.memory_space<vmem>>, vector<1x32x16xf32>
    %30 = vector.shape_cast %29 : vector<1x32x16xf32> to vector<32x16xf32>
    %cst_28 = arith.constant dense<0.000000e+00> : vector<16x16xf32>
    %31 = tpu.matmul %23, %30, %cst_28 {dimension_numbers = #tpu.dot_dimension_numbers<[1], [0], [0], [1], [0, 0, 1, 1], [], []>} : vector<16x32xf32>, vector<32x16xf32>, vector<16x16xf32> -> vector<16x16xf32>
    %c0_29 = arith.constant 0 : index
    %c0_30 = arith.constant 0 : index
    %c0_31 = arith.constant 0 : index
    %32 = vector.load %arg7[%c0_29, %c0_30, %c0_31] : memref<6x1x16xf32, #tpu.memory_space<vmem>>, vector<1x1x16xf32>
    %33 = vector.shape_cast %32 : vector<1x1x16xf32> to vector<1x16xf32>
    %34 = vector.broadcast %33 : vector<1x16xf32> to vector<16x16xf32>
    %35 = arith.addf %31, %34 : vector<16x16xf32>
    %cst_32 = arith.constant 0.000000e+00 : f32
    %36 = vector.broadcast %cst_32 : f32 to vector<16x16xf32>
    %37 = arith.cmpf oge, %35, %36 : vector<16x16xf32>
    %cst_33 = arith.constant 2.000000e-01 : f32
    %38 = vector.broadcast %cst_33 : f32 to vector<16x16xf32>
    %39 = arith.mulf %38, %35 : vector<16x16xf32>
    %40 = arith.select %37, %35, %39 : vector<16x16xi1>, vector<16x16xf32>
    %c0_34 = arith.constant 0 : index
    %c0_35 = arith.constant 0 : index
    %c0_36 = arith.constant 0 : index
    %41 = vector.load %arg8[%c0_34, %c0_35, %c0_36] : memref<6x1x16xf32, #tpu.memory_space<vmem>>, vector<1x1x16xf32>
    %42 = vector.shape_cast %41 : vector<1x1x16xf32> to vector<1x16xf32>
    %43 = vector.broadcast %42 : vector<1x16xf32> to vector<16x16xf32>
    %44 = arith.mulf %40, %43 : vector<16x16xf32>
    %c0_37 = arith.constant 0 : index
    %c0_38 = arith.constant 0 : index
    %c0_39 = arith.constant 0 : index
    %45 = vector.load %arg9[%c0_37, %c0_38, %c0_39] : memref<6x1x16xf32, #tpu.memory_space<vmem>>, vector<1x1x16xf32>
    %46 = vector.shape_cast %45 : vector<1x1x16xf32> to vector<1x16xf32>
    %47 = vector.broadcast %46 : vector<1x16xf32> to vector<16x16xf32>
    %48 = arith.addf %44, %47 : vector<16x16xf32>
    %cst_40 = arith.constant 0.000000e+00 : f32
    %49 = vector.broadcast %cst_40 : f32 to vector<16x16xf32>
    %50 = arith.cmpf oge, %48, %49 : vector<16x16xf32>
    %cst_41 = arith.constant 0.000000e+00 : f32
    %51 = vector.broadcast %cst_41 : f32 to vector<16x16xf32>
    %52 = arith.minimumf %48, %51 : vector<16x16xf32>
    %53 = math.exp %52 : vector<16x16xf32>
    %cst_42 = arith.constant 1.000000e+00 : f32
    %54 = vector.broadcast %cst_42 : f32 to vector<16x16xf32>
    %55 = arith.subf %53, %54 : vector<16x16xf32>
    %56 = arith.select %50, %48, %55 : vector<16x16xi1>, vector<16x16xf32>
    %c0_43 = arith.constant 0 : index
    %c0_44 = arith.constant 0 : index
    %c0_45 = arith.constant 0 : index
    %57 = vector.load %arg10[%c0_43, %c0_44, %c0_45] : memref<6x16x32xf32, #tpu.memory_space<vmem>>, vector<1x16x32xf32>
    %58 = vector.shape_cast %57 : vector<1x16x32xf32> to vector<16x32xf32>
    %cst_46 = arith.constant dense<0.000000e+00> : vector<16x32xf32>
    %59 = tpu.matmul %56, %58, %cst_46 {dimension_numbers = #tpu.dot_dimension_numbers<[1], [0], [0], [1], [0, 0, 1, 1], [], []>} : vector<16x16xf32>, vector<16x32xf32>, vector<16x32xf32> -> vector<16x32xf32>
    %c0_47 = arith.constant 0 : index
    %c0_48 = arith.constant 0 : index
    %c0_49 = arith.constant 0 : index
    %60 = vector.load %arg11[%c0_47, %c0_48, %c0_49] : memref<6x1x32xf32, #tpu.memory_space<vmem>>, vector<1x1x32xf32>
    %61 = vector.shape_cast %60 : vector<1x1x32xf32> to vector<1x32xf32>
    %62 = vector.broadcast %61 : vector<1x32xf32> to vector<16x32xf32>
    %63 = arith.addf %59, %62 : vector<16x32xf32>
    %cst_50 = arith.constant 0.000000e+00 : f32
    %64 = vector.broadcast %cst_50 : f32 to vector<16x32xf32>
    %65 = arith.cmpf oge, %63, %64 : vector<16x32xf32>
    %cst_51 = arith.constant 2.000000e-01 : f32
    %66 = vector.broadcast %cst_51 : f32 to vector<16x32xf32>
    %67 = arith.mulf %66, %63 : vector<16x32xf32>
    %68 = arith.select %65, %63, %67 : vector<16x32xi1>, vector<16x32xf32>
    %c0_52 = arith.constant 0 : index
    %c0_53 = arith.constant 0 : index
    %c0_54 = arith.constant 0 : index
    %69 = vector.load %arg12[%c0_52, %c0_53, %c0_54] : memref<6x1x32xf32, #tpu.memory_space<vmem>>, vector<1x1x32xf32>
    %70 = vector.shape_cast %69 : vector<1x1x32xf32> to vector<1x32xf32>
    %71 = vector.broadcast %70 : vector<1x32xf32> to vector<16x32xf32>
    %72 = arith.mulf %68, %71 : vector<16x32xf32>
    %c0_55 = arith.constant 0 : index
    %c0_56 = arith.constant 0 : index
    %c0_57 = arith.constant 0 : index
    %73 = vector.load %arg13[%c0_55, %c0_56, %c0_57] : memref<6x1x32xf32, #tpu.memory_space<vmem>>, vector<1x1x32xf32>
    %74 = vector.shape_cast %73 : vector<1x1x32xf32> to vector<1x32xf32>
    %75 = vector.broadcast %74 : vector<1x32xf32> to vector<16x32xf32>
    %76 = arith.addf %72, %75 : vector<16x32xf32>
    %cst_58 = arith.constant 0.000000e+00 : f32
    %77 = vector.broadcast %cst_58 : f32 to vector<16x32xf32>
    %78 = arith.cmpf oge, %76, %77 : vector<16x32xf32>
    %cst_59 = arith.constant 0.000000e+00 : f32
    %79 = vector.broadcast %cst_59 : f32 to vector<16x32xf32>
    %80 = arith.minimumf %76, %79 : vector<16x32xf32>
    %81 = math.exp %80 : vector<16x32xf32>
    %cst_60 = arith.constant 1.000000e+00 : f32
    %82 = vector.broadcast %cst_60 : f32 to vector<16x32xf32>
    %83 = arith.subf %81, %82 : vector<16x32xf32>
    %84 = arith.select %78, %76, %83 : vector<16x32xi1>, vector<16x32xf32>
    %c3_61 = arith.constant 3 : index
    %c0_62 = arith.constant 0 : index
    %c0_63 = arith.constant 0 : index
    %85 = vector.load %arg6[%c3_61, %c0_62, %c0_63] : memref<6x32x16xf32, #tpu.memory_space<vmem>>, vector<1x32x16xf32>
    %86 = vector.shape_cast %85 : vector<1x32x16xf32> to vector<32x16xf32>
    %cst_64 = arith.constant dense<0.000000e+00> : vector<16x16xf32>
    %87 = tpu.matmul %28, %86, %cst_64 {dimension_numbers = #tpu.dot_dimension_numbers<[1], [0], [0], [1], [0, 0, 1, 1], [], []>} : vector<16x32xf32>, vector<32x16xf32>, vector<16x16xf32> -> vector<16x16xf32>
    %c3_65 = arith.constant 3 : index
    %c0_66 = arith.constant 0 : index
    %c0_67 = arith.constant 0 : index
    %88 = vector.load %arg7[%c3_65, %c0_66, %c0_67] : memref<6x1x16xf32, #tpu.memory_space<vmem>>, vector<1x1x16xf32>
    %89 = vector.shape_cast %88 : vector<1x1x16xf32> to vector<1x16xf32>
    %90 = vector.broadcast %89 : vector<1x16xf32> to vector<16x16xf32>
    %91 = arith.addf %87, %90 : vector<16x16xf32>
    %cst_68 = arith.constant 0.000000e+00 : f32
    %92 = vector.broadcast %cst_68 : f32 to vector<16x16xf32>
    %93 = arith.cmpf oge, %91, %92 : vector<16x16xf32>
    %cst_69 = arith.constant 2.000000e-01 : f32
    %94 = vector.broadcast %cst_69 : f32 to vector<16x16xf32>
    %95 = arith.mulf %94, %91 : vector<16x16xf32>
    %96 = arith.select %93, %91, %95 : vector<16x16xi1>, vector<16x16xf32>
    %c3_70 = arith.constant 3 : index
    %c0_71 = arith.constant 0 : index
    %c0_72 = arith.constant 0 : index
    %97 = vector.load %arg8[%c3_70, %c0_71, %c0_72] : memref<6x1x16xf32, #tpu.memory_space<vmem>>, vector<1x1x16xf32>
    %98 = vector.shape_cast %97 : vector<1x1x16xf32> to vector<1x16xf32>
    %99 = vector.broadcast %98 : vector<1x16xf32> to vector<16x16xf32>
    %100 = arith.mulf %96, %99 : vector<16x16xf32>
    %c3_73 = arith.constant 3 : index
    %c0_74 = arith.constant 0 : index
    %c0_75 = arith.constant 0 : index
    %101 = vector.load %arg9[%c3_73, %c0_74, %c0_75] : memref<6x1x16xf32, #tpu.memory_space<vmem>>, vector<1x1x16xf32>
    %102 = vector.shape_cast %101 : vector<1x1x16xf32> to vector<1x16xf32>
    %103 = vector.broadcast %102 : vector<1x16xf32> to vector<16x16xf32>
    %104 = arith.addf %100, %103 : vector<16x16xf32>
    %cst_76 = arith.constant 0.000000e+00 : f32
    %105 = vector.broadcast %cst_76 : f32 to vector<16x16xf32>
    %106 = arith.cmpf oge, %104, %105 : vector<16x16xf32>
    %cst_77 = arith.constant 0.000000e+00 : f32
    %107 = vector.broadcast %cst_77 : f32 to vector<16x16xf32>
    %108 = arith.minimumf %104, %107 : vector<16x16xf32>
    %109 = math.exp %108 : vector<16x16xf32>
    %cst_78 = arith.constant 1.000000e+00 : f32
    %110 = vector.broadcast %cst_78 : f32 to vector<16x16xf32>
    %111 = arith.subf %109, %110 : vector<16x16xf32>
    %112 = arith.select %106, %104, %111 : vector<16x16xi1>, vector<16x16xf32>
    %c3_79 = arith.constant 3 : index
    %c0_80 = arith.constant 0 : index
    %c0_81 = arith.constant 0 : index
    %113 = vector.load %arg10[%c3_79, %c0_80, %c0_81] : memref<6x16x32xf32, #tpu.memory_space<vmem>>, vector<1x16x32xf32>
    %114 = vector.shape_cast %113 : vector<1x16x32xf32> to vector<16x32xf32>
    %cst_82 = arith.constant dense<0.000000e+00> : vector<16x32xf32>
    %115 = tpu.matmul %112, %114, %cst_82 {dimension_numbers = #tpu.dot_dimension_numbers<[1], [0], [0], [1], [0, 0, 1, 1], [], []>} : vector<16x16xf32>, vector<16x32xf32>, vector<16x32xf32> -> vector<16x32xf32>
    %c3_83 = arith.constant 3 : index
    %c0_84 = arith.constant 0 : index
    %c0_85 = arith.constant 0 : index
    %116 = vector.load %arg11[%c3_83, %c0_84, %c0_85] : memref<6x1x32xf32, #tpu.memory_space<vmem>>, vector<1x1x32xf32>
    %117 = vector.shape_cast %116 : vector<1x1x32xf32> to vector<1x32xf32>
    %118 = vector.broadcast %117 : vector<1x32xf32> to vector<16x32xf32>
    %119 = arith.addf %115, %118 : vector<16x32xf32>
    %cst_86 = arith.constant 0.000000e+00 : f32
    %120 = vector.broadcast %cst_86 : f32 to vector<16x32xf32>
    %121 = arith.cmpf oge, %119, %120 : vector<16x32xf32>
    %cst_87 = arith.constant 2.000000e-01 : f32
    %122 = vector.broadcast %cst_87 : f32 to vector<16x32xf32>
    %123 = arith.mulf %122, %119 : vector<16x32xf32>
    %124 = arith.select %121, %119, %123 : vector<16x32xi1>, vector<16x32xf32>
    %c3_88 = arith.constant 3 : index
    %c0_89 = arith.constant 0 : index
    %c0_90 = arith.constant 0 : index
    %125 = vector.load %arg12[%c3_88, %c0_89, %c0_90] : memref<6x1x32xf32, #tpu.memory_space<vmem>>, vector<1x1x32xf32>
    %126 = vector.shape_cast %125 : vector<1x1x32xf32> to vector<1x32xf32>
    %127 = vector.broadcast %126 : vector<1x32xf32> to vector<16x32xf32>
    %128 = arith.mulf %124, %127 : vector<16x32xf32>
    %c3_91 = arith.constant 3 : index
    %c0_92 = arith.constant 0 : index
    %c0_93 = arith.constant 0 : index
    %129 = vector.load %arg13[%c3_91, %c0_92, %c0_93] : memref<6x1x32xf32, #tpu.memory_space<vmem>>, vector<1x1x32xf32>
    %130 = vector.shape_cast %129 : vector<1x1x32xf32> to vector<1x32xf32>
    %131 = vector.broadcast %130 : vector<1x32xf32> to vector<16x32xf32>
    %132 = arith.addf %128, %131 : vector<16x32xf32>
    %cst_94 = arith.constant 0.000000e+00 : f32
    %133 = vector.broadcast %cst_94 : f32 to vector<16x32xf32>
    %134 = arith.cmpf oge, %132, %133 : vector<16x32xf32>
    %cst_95 = arith.constant 0.000000e+00 : f32
    %135 = vector.broadcast %cst_95 : f32 to vector<16x32xf32>
    %136 = arith.minimumf %132, %135 : vector<16x32xf32>
    %137 = math.exp %136 : vector<16x32xf32>
    %cst_96 = arith.constant 1.000000e+00 : f32
    %138 = vector.broadcast %cst_96 : f32 to vector<16x32xf32>
    %139 = arith.subf %137, %138 : vector<16x32xf32>
    %140 = arith.select %134, %132, %139 : vector<16x32xi1>, vector<16x32xf32>
    %cst_97 = arith.constant dense<0.000000e+00> : vector<16x128xf32>
    %141 = tpu.matmul %84, %12, %cst_97 {dimension_numbers = #tpu.dot_dimension_numbers<[1], [0], [0], [1], [0, 0, 1, 1], [], []>} : vector<16x32xf32>, vector<32x128xf32>, vector<16x128xf32> -> vector<16x128xf32>
    %cst_98 = arith.constant dense<0.000000e+00> : vector<16x128xf32>
    %142 = tpu.matmul %140, %13, %cst_98 {dimension_numbers = #tpu.dot_dimension_numbers<[1], [0], [0], [1], [0, 0, 1, 1], [], []>} : vector<16x32xf32>, vector<32x128xf32>, vector<16x128xf32> -> vector<16x128xf32>
    %143 = arith.addf %141, %142 : vector<16x128xf32>
    %144 = vector.broadcast %14 : vector<1x128xf32> to vector<16x128xf32>
    %145 = arith.addf %143, %144 : vector<16x128xf32>
    %cst_99 = arith.constant 0.000000e+00 : f32
    %146 = vector.broadcast %cst_99 : f32 to vector<16x128xf32>
    %147 = arith.cmpf oge, %145, %146 : vector<16x128xf32>
    %cst_100 = arith.constant 0.00999999977 : f32
    %148 = vector.broadcast %cst_100 : f32 to vector<16x128xf32>
    %149 = arith.mulf %148, %145 : vector<16x128xf32>
    %150 = arith.select %147, %145, %149 : vector<16x128xi1>, vector<16x128xf32>
    %c0_101 = arith.constant 0 : index
    %c0_102 = arith.constant 0 : index
    %c0_103 = arith.constant 0 : index
    %151 = vector.load %arg17[%c0_101, %c0_102, %c0_103] : memref<3x128x128xf32, #tpu.memory_space<vmem>>, vector<1x128x128xf32>
    %152 = vector.shape_cast %151 : vector<1x128x128xf32> to vector<128x128xf32>
    %cst_104 = arith.constant dense<0.000000e+00> : vector<16x128xf32>
    %153 = tpu.matmul %150, %152, %cst_104 {dimension_numbers = #tpu.dot_dimension_numbers<[1], [0], [0], [1], [0, 0, 1, 1], [], []>} : vector<16x128xf32>, vector<128x128xf32>, vector<16x128xf32> -> vector<16x128xf32>
    %154 = arith.addf %18, %153 : vector<16x128xf32>
    %c1 = arith.constant 1 : index
    %c0_105 = arith.constant 0 : index
    %c0_106 = arith.constant 0 : index
    %155 = vector.load %arg5[%c1, %c0_105, %c0_106] : memref<6x1x32xf32, #tpu.memory_space<vmem>>, vector<1x1x32xf32>
    %156 = vector.shape_cast %155 : vector<1x1x32xf32> to vector<1x32xf32>
    %157 = vector.broadcast %156 : vector<1x32xf32> to vector<16x32xf32>
    %158 = arith.mulf %157, %6 : vector<16x32xf32>
    %159 = arith.addf %10, %158 : vector<16x32xf32>
    %c4 = arith.constant 4 : index
    %c0_107 = arith.constant 0 : index
    %c0_108 = arith.constant 0 : index
    %160 = vector.load %arg5[%c4, %c0_107, %c0_108] : memref<6x1x32xf32, #tpu.memory_space<vmem>>, vector<1x1x32xf32>
    %161 = vector.shape_cast %160 : vector<1x1x32xf32> to vector<1x32xf32>
    %162 = vector.broadcast %161 : vector<1x32xf32> to vector<16x32xf32>
    %163 = arith.mulf %162, %6 : vector<16x32xf32>
    %164 = arith.addf %11, %163 : vector<16x32xf32>
    %c1_109 = arith.constant 1 : index
    %c0_110 = arith.constant 0 : index
    %c0_111 = arith.constant 0 : index
    %165 = vector.load %arg6[%c1_109, %c0_110, %c0_111] : memref<6x32x16xf32, #tpu.memory_space<vmem>>, vector<1x32x16xf32>
    %166 = vector.shape_cast %165 : vector<1x32x16xf32> to vector<32x16xf32>
    %cst_112 = arith.constant dense<0.000000e+00> : vector<16x16xf32>
    %167 = tpu.matmul %159, %166, %cst_112 {dimension_numbers = #tpu.dot_dimension_numbers<[1], [0], [0], [1], [0, 0, 1, 1], [], []>} : vector<16x32xf32>, vector<32x16xf32>, vector<16x16xf32> -> vector<16x16xf32>
    %c1_113 = arith.constant 1 : index
    %c0_114 = arith.constant 0 : index
    %c0_115 = arith.constant 0 : index
    %168 = vector.load %arg7[%c1_113, %c0_114, %c0_115] : memref<6x1x16xf32, #tpu.memory_space<vmem>>, vector<1x1x16xf32>
    %169 = vector.shape_cast %168 : vector<1x1x16xf32> to vector<1x16xf32>
    %170 = vector.broadcast %169 : vector<1x16xf32> to vector<16x16xf32>
    %171 = arith.addf %167, %170 : vector<16x16xf32>
    %cst_116 = arith.constant 0.000000e+00 : f32
    %172 = vector.broadcast %cst_116 : f32 to vector<16x16xf32>
    %173 = arith.cmpf oge, %171, %172 : vector<16x16xf32>
    %cst_117 = arith.constant 2.000000e-01 : f32
    %174 = vector.broadcast %cst_117 : f32 to vector<16x16xf32>
    %175 = arith.mulf %174, %171 : vector<16x16xf32>
    %176 = arith.select %173, %171, %175 : vector<16x16xi1>, vector<16x16xf32>
    %c1_118 = arith.constant 1 : index
    %c0_119 = arith.constant 0 : index
    %c0_120 = arith.constant 0 : index
    %177 = vector.load %arg8[%c1_118, %c0_119, %c0_120] : memref<6x1x16xf32, #tpu.memory_space<vmem>>, vector<1x1x16xf32>
    %178 = vector.shape_cast %177 : vector<1x1x16xf32> to vector<1x16xf32>
    %179 = vector.broadcast %178 : vector<1x16xf32> to vector<16x16xf32>
    %180 = arith.mulf %176, %179 : vector<16x16xf32>
    %c1_121 = arith.constant 1 : index
    %c0_122 = arith.constant 0 : index
    %c0_123 = arith.constant 0 : index
    %181 = vector.load %arg9[%c1_121, %c0_122, %c0_123] : memref<6x1x16xf32, #tpu.memory_space<vmem>>, vector<1x1x16xf32>
    %182 = vector.shape_cast %181 : vector<1x1x16xf32> to vector<1x16xf32>
    %183 = vector.broadcast %182 : vector<1x16xf32> to vector<16x16xf32>
    %184 = arith.addf %180, %183 : vector<16x16xf32>
    %cst_124 = arith.constant 0.000000e+00 : f32
    %185 = vector.broadcast %cst_124 : f32 to vector<16x16xf32>
    %186 = arith.cmpf oge, %184, %185 : vector<16x16xf32>
    %cst_125 = arith.constant 0.000000e+00 : f32
    %187 = vector.broadcast %cst_125 : f32 to vector<16x16xf32>
    %188 = arith.minimumf %184, %187 : vector<16x16xf32>
    %189 = math.exp %188 : vector<16x16xf32>
    %cst_126 = arith.constant 1.000000e+00 : f32
    %190 = vector.broadcast %cst_126 : f32 to vector<16x16xf32>
    %191 = arith.subf %189, %190 : vector<16x16xf32>
    %192 = arith.select %186, %184, %191 : vector<16x16xi1>, vector<16x16xf32>
    %c1_127 = arith.constant 1 : index
    %c0_128 = arith.constant 0 : index
    %c0_129 = arith.constant 0 : index
    %193 = vector.load %arg10[%c1_127, %c0_128, %c0_129] : memref<6x16x32xf32, #tpu.memory_space<vmem>>, vector<1x16x32xf32>
    %194 = vector.shape_cast %193 : vector<1x16x32xf32> to vector<16x32xf32>
    %cst_130 = arith.constant dense<0.000000e+00> : vector<16x32xf32>
    %195 = tpu.matmul %192, %194, %cst_130 {dimension_numbers = #tpu.dot_dimension_numbers<[1], [0], [0], [1], [0, 0, 1, 1], [], []>} : vector<16x16xf32>, vector<16x32xf32>, vector<16x32xf32> -> vector<16x32xf32>
    %c1_131 = arith.constant 1 : index
    %c0_132 = arith.constant 0 : index
    %c0_133 = arith.constant 0 : index
    %196 = vector.load %arg11[%c1_131, %c0_132, %c0_133] : memref<6x1x32xf32, #tpu.memory_space<vmem>>, vector<1x1x32xf32>
    %197 = vector.shape_cast %196 : vector<1x1x32xf32> to vector<1x32xf32>
    %198 = vector.broadcast %197 : vector<1x32xf32> to vector<16x32xf32>
    %199 = arith.addf %195, %198 : vector<16x32xf32>
    %cst_134 = arith.constant 0.000000e+00 : f32
    %200 = vector.broadcast %cst_134 : f32 to vector<16x32xf32>
    %201 = arith.cmpf oge, %199, %200 : vector<16x32xf32>
    %cst_135 = arith.constant 2.000000e-01 : f32
    %202 = vector.broadcast %cst_135 : f32 to vector<16x32xf32>
    %203 = arith.mulf %202, %199 : vector<16x32xf32>
    %204 = arith.select %201, %199, %203 : vector<16x32xi1>, vector<16x32xf32>
    %c1_136 = arith.constant 1 : index
    %c0_137 = arith.constant 0 : index
    %c0_138 = arith.constant 0 : index
    %205 = vector.load %arg12[%c1_136, %c0_137, %c0_138] : memref<6x1x32xf32, #tpu.memory_space<vmem>>, vector<1x1x32xf32>
    %206 = vector.shape_cast %205 : vector<1x1x32xf32> to vector<1x32xf32>
    %207 = vector.broadcast %206 : vector<1x32xf32> to vector<16x32xf32>
    %208 = arith.mulf %204, %207 : vector<16x32xf32>
    %c1_139 = arith.constant 1 : index
    %c0_140 = arith.constant 0 : index
    %c0_141 = arith.constant 0 : index
    %209 = vector.load %arg13[%c1_139, %c0_140, %c0_141] : memref<6x1x32xf32, #tpu.memory_space<vmem>>, vector<1x1x32xf32>
    %210 = vector.shape_cast %209 : vector<1x1x32xf32> to vector<1x32xf32>
    %211 = vector.broadcast %210 : vector<1x32xf32> to vector<16x32xf32>
    %212 = arith.addf %208, %211 : vector<16x32xf32>
    %cst_142 = arith.constant 0.000000e+00 : f32
    %213 = vector.broadcast %cst_142 : f32 to vector<16x32xf32>
    %214 = arith.cmpf oge, %212, %213 : vector<16x32xf32>
    %cst_143 = arith.constant 0.000000e+00 : f32
    %215 = vector.broadcast %cst_143 : f32 to vector<16x32xf32>
    %216 = arith.minimumf %212, %215 : vector<16x32xf32>
    %217 = math.exp %216 : vector<16x32xf32>
    %cst_144 = arith.constant 1.000000e+00 : f32
    %218 = vector.broadcast %cst_144 : f32 to vector<16x32xf32>
    %219 = arith.subf %217, %218 : vector<16x32xf32>
    %220 = arith.select %214, %212, %219 : vector<16x32xi1>, vector<16x32xf32>
    %c4_145 = arith.constant 4 : index
    %c0_146 = arith.constant 0 : index
    %c0_147 = arith.constant 0 : index
    %221 = vector.load %arg6[%c4_145, %c0_146, %c0_147] : memref<6x32x16xf32, #tpu.memory_space<vmem>>, vector<1x32x16xf32>
    %222 = vector.shape_cast %221 : vector<1x32x16xf32> to vector<32x16xf32>
    %cst_148 = arith.constant dense<0.000000e+00> : vector<16x16xf32>
    %223 = tpu.matmul %164, %222, %cst_148 {dimension_numbers = #tpu.dot_dimension_numbers<[1], [0], [0], [1], [0, 0, 1, 1], [], []>} : vector<16x32xf32>, vector<32x16xf32>, vector<16x16xf32> -> vector<16x16xf32>
    %c4_149 = arith.constant 4 : index
    %c0_150 = arith.constant 0 : index
    %c0_151 = arith.constant 0 : index
    %224 = vector.load %arg7[%c4_149, %c0_150, %c0_151] : memref<6x1x16xf32, #tpu.memory_space<vmem>>, vector<1x1x16xf32>
    %225 = vector.shape_cast %224 : vector<1x1x16xf32> to vector<1x16xf32>
    %226 = vector.broadcast %225 : vector<1x16xf32> to vector<16x16xf32>
    %227 = arith.addf %223, %226 : vector<16x16xf32>
    %cst_152 = arith.constant 0.000000e+00 : f32
    %228 = vector.broadcast %cst_152 : f32 to vector<16x16xf32>
    %229 = arith.cmpf oge, %227, %228 : vector<16x16xf32>
    %cst_153 = arith.constant 2.000000e-01 : f32
    %230 = vector.broadcast %cst_153 : f32 to vector<16x16xf32>
    %231 = arith.mulf %230, %227 : vector<16x16xf32>
    %232 = arith.select %229, %227, %231 : vector<16x16xi1>, vector<16x16xf32>
    %c4_154 = arith.constant 4 : index
    %c0_155 = arith.constant 0 : index
    %c0_156 = arith.constant 0 : index
    %233 = vector.load %arg8[%c4_154, %c0_155, %c0_156] : memref<6x1x16xf32, #tpu.memory_space<vmem>>, vector<1x1x16xf32>
    %234 = vector.shape_cast %233 : vector<1x1x16xf32> to vector<1x16xf32>
    %235 = vector.broadcast %234 : vector<1x16xf32> to vector<16x16xf32>
    %236 = arith.mulf %232, %235 : vector<16x16xf32>
    %c4_157 = arith.constant 4 : index
    %c0_158 = arith.constant 0 : index
    %c0_159 = arith.constant 0 : index
    %237 = vector.load %arg9[%c4_157, %c0_158, %c0_159] : memref<6x1x16xf32, #tpu.memory_space<vmem>>, vector<1x1x16xf32>
    %238 = vector.shape_cast %237 : vector<1x1x16xf32> to vector<1x16xf32>
    %239 = vector.broadcast %238 : vector<1x16xf32> to vector<16x16xf32>
    %240 = arith.addf %236, %239 : vector<16x16xf32>
    %cst_160 = arith.constant 0.000000e+00 : f32
    %241 = vector.broadcast %cst_160 : f32 to vector<16x16xf32>
    %242 = arith.cmpf oge, %240, %241 : vector<16x16xf32>
    %cst_161 = arith.constant 0.000000e+00 : f32
    %243 = vector.broadcast %cst_161 : f32 to vector<16x16xf32>
    %244 = arith.minimumf %240, %243 : vector<16x16xf32>
    %245 = math.exp %244 : vector<16x16xf32>
    %cst_162 = arith.constant 1.000000e+00 : f32
    %246 = vector.broadcast %cst_162 : f32 to vector<16x16xf32>
    %247 = arith.subf %245, %246 : vector<16x16xf32>
    %248 = arith.select %242, %240, %247 : vector<16x16xi1>, vector<16x16xf32>
    %c4_163 = arith.constant 4 : index
    %c0_164 = arith.constant 0 : index
    %c0_165 = arith.constant 0 : index
    %249 = vector.load %arg10[%c4_163, %c0_164, %c0_165] : memref<6x16x32xf32, #tpu.memory_space<vmem>>, vector<1x16x32xf32>
    %250 = vector.shape_cast %249 : vector<1x16x32xf32> to vector<16x32xf32>
    %cst_166 = arith.constant dense<0.000000e+00> : vector<16x32xf32>
    %251 = tpu.matmul %248, %250, %cst_166 {dimension_numbers = #tpu.dot_dimension_numbers<[1], [0], [0], [1], [0, 0, 1, 1], [], []>} : vector<16x16xf32>, vector<16x32xf32>, vector<16x32xf32> -> vector<16x32xf32>
    %c4_167 = arith.constant 4 : index
    %c0_168 = arith.constant 0 : index
    %c0_169 = arith.constant 0 : index
    %252 = vector.load %arg11[%c4_167, %c0_168, %c0_169] : memref<6x1x32xf32, #tpu.memory_space<vmem>>, vector<1x1x32xf32>
    %253 = vector.shape_cast %252 : vector<1x1x32xf32> to vector<1x32xf32>
    %254 = vector.broadcast %253 : vector<1x32xf32> to vector<16x32xf32>
    %255 = arith.addf %251, %254 : vector<16x32xf32>
    %cst_170 = arith.constant 0.000000e+00 : f32
    %256 = vector.broadcast %cst_170 : f32 to vector<16x32xf32>
    %257 = arith.cmpf oge, %255, %256 : vector<16x32xf32>
    %cst_171 = arith.constant 2.000000e-01 : f32
    %258 = vector.broadcast %cst_171 : f32 to vector<16x32xf32>
    %259 = arith.mulf %258, %255 : vector<16x32xf32>
    %260 = arith.select %257, %255, %259 : vector<16x32xi1>, vector<16x32xf32>
    %c4_172 = arith.constant 4 : index
    %c0_173 = arith.constant 0 : index
    %c0_174 = arith.constant 0 : index
    %261 = vector.load %arg12[%c4_172, %c0_173, %c0_174] : memref<6x1x32xf32, #tpu.memory_space<vmem>>, vector<1x1x32xf32>
    %262 = vector.shape_cast %261 : vector<1x1x32xf32> to vector<1x32xf32>
    %263 = vector.broadcast %262 : vector<1x32xf32> to vector<16x32xf32>
    %264 = arith.mulf %260, %263 : vector<16x32xf32>
    %c4_175 = arith.constant 4 : index
    %c0_176 = arith.constant 0 : index
    %c0_177 = arith.constant 0 : index
    %265 = vector.load %arg13[%c4_175, %c0_176, %c0_177] : memref<6x1x32xf32, #tpu.memory_space<vmem>>, vector<1x1x32xf32>
    %266 = vector.shape_cast %265 : vector<1x1x32xf32> to vector<1x32xf32>
    %267 = vector.broadcast %266 : vector<1x32xf32> to vector<16x32xf32>
    %268 = arith.addf %264, %267 : vector<16x32xf32>
    %cst_178 = arith.constant 0.000000e+00 : f32
    %269 = vector.broadcast %cst_178 : f32 to vector<16x32xf32>
    %270 = arith.cmpf oge, %268, %269 : vector<16x32xf32>
    %cst_179 = arith.constant 0.000000e+00 : f32
    %271 = vector.broadcast %cst_179 : f32 to vector<16x32xf32>
    %272 = arith.minimumf %268, %271 : vector<16x32xf32>
    %273 = math.exp %272 : vector<16x32xf32>
    %cst_180 = arith.constant 1.000000e+00 : f32
    %274 = vector.broadcast %cst_180 : f32 to vector<16x32xf32>
    %275 = arith.subf %273, %274 : vector<16x32xf32>
    %276 = arith.select %270, %268, %275 : vector<16x32xi1>, vector<16x32xf32>
    %cst_181 = arith.constant dense<0.000000e+00> : vector<16x128xf32>
    %277 = tpu.matmul %220, %12, %cst_181 {dimension_numbers = #tpu.dot_dimension_numbers<[1], [0], [0], [1], [0, 0, 1, 1], [], []>} : vector<16x32xf32>, vector<32x128xf32>, vector<16x128xf32> -> vector<16x128xf32>
    %cst_182 = arith.constant dense<0.000000e+00> : vector<16x128xf32>
    %278 = tpu.matmul %276, %13, %cst_182 {dimension_numbers = #tpu.dot_dimension_numbers<[1], [0], [0], [1], [0, 0, 1, 1], [], []>} : vector<16x32xf32>, vector<32x128xf32>, vector<16x128xf32> -> vector<16x128xf32>
    %279 = arith.addf %277, %278 : vector<16x128xf32>
    %280 = vector.broadcast %14 : vector<1x128xf32> to vector<16x128xf32>
    %281 = arith.addf %279, %280 : vector<16x128xf32>
    %cst_183 = arith.constant 0.000000e+00 : f32
    %282 = vector.broadcast %cst_183 : f32 to vector<16x128xf32>
    %283 = arith.cmpf oge, %281, %282 : vector<16x128xf32>
    %cst_184 = arith.constant 0.00999999977 : f32
    %284 = vector.broadcast %cst_184 : f32 to vector<16x128xf32>
    %285 = arith.mulf %284, %281 : vector<16x128xf32>
    %286 = arith.select %283, %281, %285 : vector<16x128xi1>, vector<16x128xf32>
    %c1_185 = arith.constant 1 : index
    %c0_186 = arith.constant 0 : index
    %c0_187 = arith.constant 0 : index
    %287 = vector.load %arg17[%c1_185, %c0_186, %c0_187] : memref<3x128x128xf32, #tpu.memory_space<vmem>>, vector<1x128x128xf32>
    %288 = vector.shape_cast %287 : vector<1x128x128xf32> to vector<128x128xf32>
    %cst_188 = arith.constant dense<0.000000e+00> : vector<16x128xf32>
    %289 = tpu.matmul %286, %288, %cst_188 {dimension_numbers = #tpu.dot_dimension_numbers<[1], [0], [0], [1], [0, 0, 1, 1], [], []>} : vector<16x128xf32>, vector<128x128xf32>, vector<16x128xf32> -> vector<16x128xf32>
    %290 = arith.addf %154, %289 : vector<16x128xf32>
    %c2 = arith.constant 2 : index
    %c0_189 = arith.constant 0 : index
    %c0_190 = arith.constant 0 : index
    %291 = vector.load %arg5[%c2, %c0_189, %c0_190] : memref<6x1x32xf32, #tpu.memory_space<vmem>>, vector<1x1x32xf32>
    %292 = vector.shape_cast %291 : vector<1x1x32xf32> to vector<1x32xf32>
    %293 = vector.broadcast %292 : vector<1x32xf32> to vector<16x32xf32>
    %294 = arith.mulf %293, %6 : vector<16x32xf32>
    %295 = arith.addf %10, %294 : vector<16x32xf32>
    %c5 = arith.constant 5 : index
    %c0_191 = arith.constant 0 : index
    %c0_192 = arith.constant 0 : index
    %296 = vector.load %arg5[%c5, %c0_191, %c0_192] : memref<6x1x32xf32, #tpu.memory_space<vmem>>, vector<1x1x32xf32>
    %297 = vector.shape_cast %296 : vector<1x1x32xf32> to vector<1x32xf32>
    %298 = vector.broadcast %297 : vector<1x32xf32> to vector<16x32xf32>
    %299 = arith.mulf %298, %6 : vector<16x32xf32>
    %300 = arith.addf %11, %299 : vector<16x32xf32>
    %c2_193 = arith.constant 2 : index
    %c0_194 = arith.constant 0 : index
    %c0_195 = arith.constant 0 : index
    %301 = vector.load %arg6[%c2_193, %c0_194, %c0_195] : memref<6x32x16xf32, #tpu.memory_space<vmem>>, vector<1x32x16xf32>
    %302 = vector.shape_cast %301 : vector<1x32x16xf32> to vector<32x16xf32>
    %cst_196 = arith.constant dense<0.000000e+00> : vector<16x16xf32>
    %303 = tpu.matmul %295, %302, %cst_196 {dimension_numbers = #tpu.dot_dimension_numbers<[1], [0], [0], [1], [0, 0, 1, 1], [], []>} : vector<16x32xf32>, vector<32x16xf32>, vector<16x16xf32> -> vector<16x16xf32>
    %c2_197 = arith.constant 2 : index
    %c0_198 = arith.constant 0 : index
    %c0_199 = arith.constant 0 : index
    %304 = vector.load %arg7[%c2_197, %c0_198, %c0_199] : memref<6x1x16xf32, #tpu.memory_space<vmem>>, vector<1x1x16xf32>
    %305 = vector.shape_cast %304 : vector<1x1x16xf32> to vector<1x16xf32>
    %306 = vector.broadcast %305 : vector<1x16xf32> to vector<16x16xf32>
    %307 = arith.addf %303, %306 : vector<16x16xf32>
    %cst_200 = arith.constant 0.000000e+00 : f32
    %308 = vector.broadcast %cst_200 : f32 to vector<16x16xf32>
    %309 = arith.cmpf oge, %307, %308 : vector<16x16xf32>
    %cst_201 = arith.constant 2.000000e-01 : f32
    %310 = vector.broadcast %cst_201 : f32 to vector<16x16xf32>
    %311 = arith.mulf %310, %307 : vector<16x16xf32>
    %312 = arith.select %309, %307, %311 : vector<16x16xi1>, vector<16x16xf32>
    %c2_202 = arith.constant 2 : index
    %c0_203 = arith.constant 0 : index
    %c0_204 = arith.constant 0 : index
    %313 = vector.load %arg8[%c2_202, %c0_203, %c0_204] : memref<6x1x16xf32, #tpu.memory_space<vmem>>, vector<1x1x16xf32>
    %314 = vector.shape_cast %313 : vector<1x1x16xf32> to vector<1x16xf32>
    %315 = vector.broadcast %314 : vector<1x16xf32> to vector<16x16xf32>
    %316 = arith.mulf %312, %315 : vector<16x16xf32>
    %c2_205 = arith.constant 2 : index
    %c0_206 = arith.constant 0 : index
    %c0_207 = arith.constant 0 : index
    %317 = vector.load %arg9[%c2_205, %c0_206, %c0_207] : memref<6x1x16xf32, #tpu.memory_space<vmem>>, vector<1x1x16xf32>
    %318 = vector.shape_cast %317 : vector<1x1x16xf32> to vector<1x16xf32>
    %319 = vector.broadcast %318 : vector<1x16xf32> to vector<16x16xf32>
    %320 = arith.addf %316, %319 : vector<16x16xf32>
    %cst_208 = arith.constant 0.000000e+00 : f32
    %321 = vector.broadcast %cst_208 : f32 to vector<16x16xf32>
    %322 = arith.cmpf oge, %320, %321 : vector<16x16xf32>
    %cst_209 = arith.constant 0.000000e+00 : f32
    %323 = vector.broadcast %cst_209 : f32 to vector<16x16xf32>
    %324 = arith.minimumf %320, %323 : vector<16x16xf32>
    %325 = math.exp %324 : vector<16x16xf32>
    %cst_210 = arith.constant 1.000000e+00 : f32
    %326 = vector.broadcast %cst_210 : f32 to vector<16x16xf32>
    %327 = arith.subf %325, %326 : vector<16x16xf32>
    %328 = arith.select %322, %320, %327 : vector<16x16xi1>, vector<16x16xf32>
    %c2_211 = arith.constant 2 : index
    %c0_212 = arith.constant 0 : index
    %c0_213 = arith.constant 0 : index
    %329 = vector.load %arg10[%c2_211, %c0_212, %c0_213] : memref<6x16x32xf32, #tpu.memory_space<vmem>>, vector<1x16x32xf32>
    %330 = vector.shape_cast %329 : vector<1x16x32xf32> to vector<16x32xf32>
    %cst_214 = arith.constant dense<0.000000e+00> : vector<16x32xf32>
    %331 = tpu.matmul %328, %330, %cst_214 {dimension_numbers = #tpu.dot_dimension_numbers<[1], [0], [0], [1], [0, 0, 1, 1], [], []>} : vector<16x16xf32>, vector<16x32xf32>, vector<16x32xf32> -> vector<16x32xf32>
    %c2_215 = arith.constant 2 : index
    %c0_216 = arith.constant 0 : index
    %c0_217 = arith.constant 0 : index
    %332 = vector.load %arg11[%c2_215, %c0_216, %c0_217] : memref<6x1x32xf32, #tpu.memory_space<vmem>>, vector<1x1x32xf32>
    %333 = vector.shape_cast %332 : vector<1x1x32xf32> to vector<1x32xf32>
    %334 = vector.broadcast %333 : vector<1x32xf32> to vector<16x32xf32>
    %335 = arith.addf %331, %334 : vector<16x32xf32>
    %cst_218 = arith.constant 0.000000e+00 : f32
    %336 = vector.broadcast %cst_218 : f32 to vector<16x32xf32>
    %337 = arith.cmpf oge, %335, %336 : vector<16x32xf32>
    %cst_219 = arith.constant 2.000000e-01 : f32
    %338 = vector.broadcast %cst_219 : f32 to vector<16x32xf32>
    %339 = arith.mulf %338, %335 : vector<16x32xf32>
    %340 = arith.select %337, %335, %339 : vector<16x32xi1>, vector<16x32xf32>
    %c2_220 = arith.constant 2 : index
    %c0_221 = arith.constant 0 : index
    %c0_222 = arith.constant 0 : index
    %341 = vector.load %arg12[%c2_220, %c0_221, %c0_222] : memref<6x1x32xf32, #tpu.memory_space<vmem>>, vector<1x1x32xf32>
    %342 = vector.shape_cast %341 : vector<1x1x32xf32> to vector<1x32xf32>
    %343 = vector.broadcast %342 : vector<1x32xf32> to vector<16x32xf32>
    %344 = arith.mulf %340, %343 : vector<16x32xf32>
    %c2_223 = arith.constant 2 : index
    %c0_224 = arith.constant 0 : index
    %c0_225 = arith.constant 0 : index
    %345 = vector.load %arg13[%c2_223, %c0_224, %c0_225] : memref<6x1x32xf32, #tpu.memory_space<vmem>>, vector<1x1x32xf32>
    %346 = vector.shape_cast %345 : vector<1x1x32xf32> to vector<1x32xf32>
    %347 = vector.broadcast %346 : vector<1x32xf32> to vector<16x32xf32>
    %348 = arith.addf %344, %347 : vector<16x32xf32>
    %cst_226 = arith.constant 0.000000e+00 : f32
    %349 = vector.broadcast %cst_226 : f32 to vector<16x32xf32>
    %350 = arith.cmpf oge, %348, %349 : vector<16x32xf32>
    %cst_227 = arith.constant 0.000000e+00 : f32
    %351 = vector.broadcast %cst_227 : f32 to vector<16x32xf32>
    %352 = arith.minimumf %348, %351 : vector<16x32xf32>
    %353 = math.exp %352 : vector<16x32xf32>
    %cst_228 = arith.constant 1.000000e+00 : f32
    %354 = vector.broadcast %cst_228 : f32 to vector<16x32xf32>
    %355 = arith.subf %353, %354 : vector<16x32xf32>
    %356 = arith.select %350, %348, %355 : vector<16x32xi1>, vector<16x32xf32>
    %c5_229 = arith.constant 5 : index
    %c0_230 = arith.constant 0 : index
    %c0_231 = arith.constant 0 : index
    %357 = vector.load %arg6[%c5_229, %c0_230, %c0_231] : memref<6x32x16xf32, #tpu.memory_space<vmem>>, vector<1x32x16xf32>
    %358 = vector.shape_cast %357 : vector<1x32x16xf32> to vector<32x16xf32>
    %cst_232 = arith.constant dense<0.000000e+00> : vector<16x16xf32>
    %359 = tpu.matmul %300, %358, %cst_232 {dimension_numbers = #tpu.dot_dimension_numbers<[1], [0], [0], [1], [0, 0, 1, 1], [], []>} : vector<16x32xf32>, vector<32x16xf32>, vector<16x16xf32> -> vector<16x16xf32>
    %c5_233 = arith.constant 5 : index
    %c0_234 = arith.constant 0 : index
    %c0_235 = arith.constant 0 : index
    %360 = vector.load %arg7[%c5_233, %c0_234, %c0_235] : memref<6x1x16xf32, #tpu.memory_space<vmem>>, vector<1x1x16xf32>
    %361 = vector.shape_cast %360 : vector<1x1x16xf32> to vector<1x16xf32>
    %362 = vector.broadcast %361 : vector<1x16xf32> to vector<16x16xf32>
    %363 = arith.addf %359, %362 : vector<16x16xf32>
    %cst_236 = arith.constant 0.000000e+00 : f32
    %364 = vector.broadcast %cst_236 : f32 to vector<16x16xf32>
    %365 = arith.cmpf oge, %363, %364 : vector<16x16xf32>
    %cst_237 = arith.constant 2.000000e-01 : f32
    %366 = vector.broadcast %cst_237 : f32 to vector<16x16xf32>
    %367 = arith.mulf %366, %363 : vector<16x16xf32>
    %368 = arith.select %365, %363, %367 : vector<16x16xi1>, vector<16x16xf32>
    %c5_238 = arith.constant 5 : index
    %c0_239 = arith.constant 0 : index
    %c0_240 = arith.constant 0 : index
    %369 = vector.load %arg8[%c5_238, %c0_239, %c0_240] : memref<6x1x16xf32, #tpu.memory_space<vmem>>, vector<1x1x16xf32>
    %370 = vector.shape_cast %369 : vector<1x1x16xf32> to vector<1x16xf32>
    %371 = vector.broadcast %370 : vector<1x16xf32> to vector<16x16xf32>
    %372 = arith.mulf %368, %371 : vector<16x16xf32>
    %c5_241 = arith.constant 5 : index
    %c0_242 = arith.constant 0 : index
    %c0_243 = arith.constant 0 : index
    %373 = vector.load %arg9[%c5_241, %c0_242, %c0_243] : memref<6x1x16xf32, #tpu.memory_space<vmem>>, vector<1x1x16xf32>
    %374 = vector.shape_cast %373 : vector<1x1x16xf32> to vector<1x16xf32>
    %375 = vector.broadcast %374 : vector<1x16xf32> to vector<16x16xf32>
    %376 = arith.addf %372, %375 : vector<16x16xf32>
    %cst_244 = arith.constant 0.000000e+00 : f32
    %377 = vector.broadcast %cst_244 : f32 to vector<16x16xf32>
    %378 = arith.cmpf oge, %376, %377 : vector<16x16xf32>
    %cst_245 = arith.constant 0.000000e+00 : f32
    %379 = vector.broadcast %cst_245 : f32 to vector<16x16xf32>
    %380 = arith.minimumf %376, %379 : vector<16x16xf32>
    %381 = math.exp %380 : vector<16x16xf32>
    %cst_246 = arith.constant 1.000000e+00 : f32
    %382 = vector.broadcast %cst_246 : f32 to vector<16x16xf32>
    %383 = arith.subf %381, %382 : vector<16x16xf32>
    %384 = arith.select %378, %376, %383 : vector<16x16xi1>, vector<16x16xf32>
    %c5_247 = arith.constant 5 : index
    %c0_248 = arith.constant 0 : index
    %c0_249 = arith.constant 0 : index
    %385 = vector.load %arg10[%c5_247, %c0_248, %c0_249] : memref<6x16x32xf32, #tpu.memory_space<vmem>>, vector<1x16x32xf32>
    %386 = vector.shape_cast %385 : vector<1x16x32xf32> to vector<16x32xf32>
    %cst_250 = arith.constant dense<0.000000e+00> : vector<16x32xf32>
    %387 = tpu.matmul %384, %386, %cst_250 {dimension_numbers = #tpu.dot_dimension_numbers<[1], [0], [0], [1], [0, 0, 1, 1], [], []>} : vector<16x16xf32>, vector<16x32xf32>, vector<16x32xf32> -> vector<16x32xf32>
    %c5_251 = arith.constant 5 : index
    %c0_252 = arith.constant 0 : index
    %c0_253 = arith.constant 0 : index
    %388 = vector.load %arg11[%c5_251, %c0_252, %c0_253] : memref<6x1x32xf32, #tpu.memory_space<vmem>>, vector<1x1x32xf32>
    %389 = vector.shape_cast %388 : vector<1x1x32xf32> to vector<1x32xf32>
    %390 = vector.broadcast %389 : vector<1x32xf32> to vector<16x32xf32>
    %391 = arith.addf %387, %390 : vector<16x32xf32>
    %cst_254 = arith.constant 0.000000e+00 : f32
    %392 = vector.broadcast %cst_254 : f32 to vector<16x32xf32>
    %393 = arith.cmpf oge, %391, %392 : vector<16x32xf32>
    %cst_255 = arith.constant 2.000000e-01 : f32
    %394 = vector.broadcast %cst_255 : f32 to vector<16x32xf32>
    %395 = arith.mulf %394, %391 : vector<16x32xf32>
    %396 = arith.select %393, %391, %395 : vector<16x32xi1>, vector<16x32xf32>
    %c5_256 = arith.constant 5 : index
    %c0_257 = arith.constant 0 : index
    %c0_258 = arith.constant 0 : index
    %397 = vector.load %arg12[%c5_256, %c0_257, %c0_258] : memref<6x1x32xf32, #tpu.memory_space<vmem>>, vector<1x1x32xf32>
    %398 = vector.shape_cast %397 : vector<1x1x32xf32> to vector<1x32xf32>
    %399 = vector.broadcast %398 : vector<1x32xf32> to vector<16x32xf32>
    %400 = arith.mulf %396, %399 : vector<16x32xf32>
    %c5_259 = arith.constant 5 : index
    %c0_260 = arith.constant 0 : index
    %c0_261 = arith.constant 0 : index
    %401 = vector.load %arg13[%c5_259, %c0_260, %c0_261] : memref<6x1x32xf32, #tpu.memory_space<vmem>>, vector<1x1x32xf32>
    %402 = vector.shape_cast %401 : vector<1x1x32xf32> to vector<1x32xf32>
    %403 = vector.broadcast %402 : vector<1x32xf32> to vector<16x32xf32>
    %404 = arith.addf %400, %403 : vector<16x32xf32>
    %cst_262 = arith.constant 0.000000e+00 : f32
    %405 = vector.broadcast %cst_262 : f32 to vector<16x32xf32>
    %406 = arith.cmpf oge, %404, %405 : vector<16x32xf32>
    %cst_263 = arith.constant 0.000000e+00 : f32
    %407 = vector.broadcast %cst_263 : f32 to vector<16x32xf32>
    %408 = arith.minimumf %404, %407 : vector<16x32xf32>
    %409 = math.exp %408 : vector<16x32xf32>
    %cst_264 = arith.constant 1.000000e+00 : f32
    %410 = vector.broadcast %cst_264 : f32 to vector<16x32xf32>
    %411 = arith.subf %409, %410 : vector<16x32xf32>
    %412 = arith.select %406, %404, %411 : vector<16x32xi1>, vector<16x32xf32>
    %cst_265 = arith.constant dense<0.000000e+00> : vector<16x128xf32>
    %413 = tpu.matmul %356, %12, %cst_265 {dimension_numbers = #tpu.dot_dimension_numbers<[1], [0], [0], [1], [0, 0, 1, 1], [], []>} : vector<16x32xf32>, vector<32x128xf32>, vector<16x128xf32> -> vector<16x128xf32>
    %cst_266 = arith.constant dense<0.000000e+00> : vector<16x128xf32>
    %414 = tpu.matmul %412, %13, %cst_266 {dimension_numbers = #tpu.dot_dimension_numbers<[1], [0], [0], [1], [0, 0, 1, 1], [], []>} : vector<16x32xf32>, vector<32x128xf32>, vector<16x128xf32> -> vector<16x128xf32>
    %415 = arith.addf %413, %414 : vector<16x128xf32>
    %416 = vector.broadcast %14 : vector<1x128xf32> to vector<16x128xf32>
    %417 = arith.addf %415, %416 : vector<16x128xf32>
    %cst_267 = arith.constant 0.000000e+00 : f32
    %418 = vector.broadcast %cst_267 : f32 to vector<16x128xf32>
    %419 = arith.cmpf oge, %417, %418 : vector<16x128xf32>
    %cst_268 = arith.constant 0.00999999977 : f32
    %420 = vector.broadcast %cst_268 : f32 to vector<16x128xf32>
    %421 = arith.mulf %420, %417 : vector<16x128xf32>
    %422 = arith.select %419, %417, %421 : vector<16x128xi1>, vector<16x128xf32>
    %c2_269 = arith.constant 2 : index
    %c0_270 = arith.constant 0 : index
    %c0_271 = arith.constant 0 : index
    %423 = vector.load %arg17[%c2_269, %c0_270, %c0_271] : memref<3x128x128xf32, #tpu.memory_space<vmem>>, vector<1x128x128xf32>
    %424 = vector.shape_cast %423 : vector<1x128x128xf32> to vector<128x128xf32>
    %cst_272 = arith.constant dense<0.000000e+00> : vector<16x128xf32>
    %425 = tpu.matmul %422, %424, %cst_272 {dimension_numbers = #tpu.dot_dimension_numbers<[1], [0], [0], [1], [0, 0, 1, 1], [], []>} : vector<16x128xf32>, vector<128x128xf32>, vector<16x128xf32> -> vector<16x128xf32>
    %426 = arith.addf %290, %425 : vector<16x128xf32>
    %c0_273 = arith.constant 0 : index
    %c0_274 = arith.constant 0 : index
    %c0_275 = arith.constant 0 : index
    %427 = vector.load %arg19[%c0_273, %c0_274, %c0_275] : memref<1x16x128xf32, #tpu.memory_space<vmem>>, vector<1x16x128xf32>
    %428 = vector.shape_cast %427 : vector<1x16x128xf32> to vector<16x128xf32>
    %429 = vector.shape_cast %426 : vector<16x128xf32> to vector<1x16x128xf32>
    tpu.vector_store %arg19[%c0_273, %c0_274, %c0_275], %429 {strides = array<i32>} : memref<1x16x128xf32, #tpu.memory_space<vmem>>, vector<1x16x128xf32>,
    return
  }
  func.func @transform_0(%arg0: i32) -> (i32, i32, i32) {
    %c0_i32 = arith.constant 0 : i32
    %c0_i32_0 = arith.constant 0 : i32
    %c0_i32_1 = arith.constant 0 : i32
    return %arg0, %c0_i32, %c0_i32_0 : i32, i32, i32
  }
  func.func @transform_1(%arg0: i32) -> (i32, i32, i32) {
    %c0_i32 = arith.constant 0 : i32
    %c0_i32_0 = arith.constant 0 : i32
    %c0_i32_1 = arith.constant 0 : i32
    return %arg0, %c0_i32, %c0_i32_0 : i32, i32, i32
  }
  func.func @transform_2(%arg0: i32) -> (i32, i32) {
    %c0_i32 = arith.constant 0 : i32
    %c0_i32_0 = arith.constant 0 : i32
    %c0_i32_1 = arith.constant 0 : i32
    return %c0_i32, %c0_i32_0 : i32, i32
  }
  func.func @transform_3(%arg0: i32) -> (i32, i32) {
    %c0_i32 = arith.constant 0 : i32
    %c0_i32_0 = arith.constant 0 : i32
    %c0_i32_1 = arith.constant 0 : i32
    return %c0_i32, %c0_i32_0 : i32, i32
  }
  func.func @transform_4(%arg0: i32) -> (i32, i32, i32) {
    %c0_i32 = arith.constant 0 : i32
    %c0_i32_0 = arith.constant 0 : i32
    %c0_i32_1 = arith.constant 0 : i32
    %c0_i32_2 = arith.constant 0 : i32
    return %c0_i32, %c0_i32_0, %c0_i32_1 : i32, i32, i32
  }
  func.func @transform_5(%arg0: i32) -> (i32, i32, i32) {
    %c0_i32 = arith.constant 0 : i32
    %c0_i32_0 = arith.constant 0 : i32
    %c0_i32_1 = arith.constant 0 : i32
    %c0_i32_2 = arith.constant 0 : i32
    return %c0_i32, %c0_i32_0, %c0_i32_1 : i32, i32, i32
  }
  func.func @transform_6(%arg0: i32) -> (i32, i32, i32) {
    %c0_i32 = arith.constant 0 : i32
    %c0_i32_0 = arith.constant 0 : i32
    %c0_i32_1 = arith.constant 0 : i32
    %c0_i32_2 = arith.constant 0 : i32
    return %c0_i32, %c0_i32_0, %c0_i32_1 : i32, i32, i32
  }
  func.func @transform_7(%arg0: i32) -> (i32, i32, i32) {
    %c0_i32 = arith.constant 0 : i32
    %c0_i32_0 = arith.constant 0 : i32
    %c0_i32_1 = arith.constant 0 : i32
    %c0_i32_2 = arith.constant 0 : i32
    return %c0_i32, %c0_i32_0, %c0_i32_1 : i32, i32, i32
  }
  func.func @transform_8(%arg0: i32) -> (i32, i32, i32) {
    %c0_i32 = arith.constant 0 : i32
    %c0_i32_0 = arith.constant 0 : i32
    %c0_i32_1 = arith.constant 0 : i32
    %c0_i32_2 = arith.constant 0 : i32
    return %c0_i32, %c0_i32_0, %c0_i32_1 : i32, i32, i32
  }
  func.func @transform_9(%arg0: i32) -> (i32, i32, i32) {
    %c0_i32 = arith.constant 0 : i32
    %c0_i32_0 = arith.constant 0 : i32
    %c0_i32_1 = arith.constant 0 : i32
    %c0_i32_2 = arith.constant 0 : i32
    return %c0_i32, %c0_i32_0, %c0_i32_1 : i32, i32, i32
  }
  func.func @transform_10(%arg0: i32) -> (i32, i32, i32) {
    %c0_i32 = arith.constant 0 : i32
    %c0_i32_0 = arith.constant 0 : i32
    %c0_i32_1 = arith.constant 0 : i32
    %c0_i32_2 = arith.constant 0 : i32
    return %c0_i32, %c0_i32_0, %c0_i32_1 : i32, i32, i32
  }
  func.func @transform_11(%arg0: i32) -> (i32, i32, i32) {
    %c0_i32 = arith.constant 0 : i32
    %c0_i32_0 = arith.constant 0 : i32
    %c0_i32_1 = arith.constant 0 : i32
    %c0_i32_2 = arith.constant 0 : i32
    return %c0_i32, %c0_i32_0, %c0_i32_1 : i32, i32, i32
  }
  func.func @transform_12(%arg0: i32) -> (i32, i32, i32) {
    %c0_i32 = arith.constant 0 : i32
    %c0_i32_0 = arith.constant 0 : i32
    %c0_i32_1 = arith.constant 0 : i32
    %c0_i32_2 = arith.constant 0 : i32
    return %c0_i32, %c0_i32_0, %c0_i32_1 : i32, i32, i32
  }
  func.func @transform_13(%arg0: i32) -> (i32, i32) {
    %c0_i32 = arith.constant 0 : i32
    %c0_i32_0 = arith.constant 0 : i32
    %c0_i32_1 = arith.constant 0 : i32
    return %c0_i32, %c0_i32_0 : i32, i32
  }
  func.func @transform_14(%arg0: i32) -> (i32, i32) {
    %c0_i32 = arith.constant 0 : i32
    %c0_i32_0 = arith.constant 0 : i32
    %c0_i32_1 = arith.constant 0 : i32
    return %c0_i32, %c0_i32_0 : i32, i32
  }
  func.func @transform_15(%arg0: i32) -> (i32, i32) {
    %c0_i32 = arith.constant 0 : i32
    %c0_i32_0 = arith.constant 0 : i32
    %c0_i32_1 = arith.constant 0 : i32
    return %c0_i32, %c0_i32_0 : i32, i32
  }
  func.func @transform_16(%arg0: i32) -> (i32, i32, i32) {
    %c0_i32 = arith.constant 0 : i32
    %c0_i32_0 = arith.constant 0 : i32
    %c0_i32_1 = arith.constant 0 : i32
    %c0_i32_2 = arith.constant 0 : i32
    return %c0_i32, %c0_i32_0, %c0_i32_1 : i32, i32, i32
  }
  func.func @transform_17(%arg0: i32) -> (i32, i32) {
    %c0_i32 = arith.constant 0 : i32
    %c0_i32_0 = arith.constant 0 : i32
    %c0_i32_1 = arith.constant 0 : i32
    return %c0_i32, %c0_i32_0 : i32, i32
  }
  func.func @transform_18(%arg0: i32) -> (i32, i32, i32) {
    %c0_i32 = arith.constant 0 : i32
    %c0_i32_0 = arith.constant 0 : i32
    %c0_i32_1 = arith.constant 0 : i32
    return %arg0, %c0_i32, %c0_i32_0 : i32, i32, i32
  }
}

</mosaic_0001>

<llo_original>
// kernel: tpu_custom_call.1
$region0: #{tpu_custom_call.1}
  #allocation0 [shape = 'u32[]', space=smem, size = 0x4, offset = 0x4, fixed_abs, tag = 'smem constant byte address 0x4 - core index']
  #allocation1 [shape = 'u32[144,128]{1,0:T(1,128)}', space=vmem, size = 0x12000, scoped, tag = 'internal scratch']
  %s0 = inlined_call_operand.vmem [shape: f32[4,16,8], index: 0, kind: input, shape index: {}]
  %s1 = inlined_call_operand.hbm [shape: bf16[4,16,16], index: 1, kind: input, shape index: {}]
  %s2 = inlined_call_operand.vmem [shape: f32[8,32], index: 2, kind: input, shape index: {}]
  %s3 = inlined_call_operand.vmem [shape: f32[1,32], index: 3, kind: input, shape index: {}]
  %s4 = inlined_call_operand.vmem [shape: f32[6,1,32], index: 4, kind: input, shape index: {}]
  %s5 = inlined_call_operand.vmem [shape: f32[6,32,16], index: 5, kind: input, shape index: {}]
  %s6 = inlined_call_operand.vmem [shape: f32[6,1,16], index: 6, kind: input, shape index: {}]
  %s7 = inlined_call_operand.vmem [shape: f32[6,1,16], index: 7, kind: input, shape index: {}]
  %s8 = inlined_call_operand.hbm [shape: f32[6,1,16], index: 8, kind: input, shape index: {}]
  %s9 = inlined_call_operand.hbm [shape: f32[6,16,32], index: 9, kind: input, shape index: {}]
  %s10 = inlined_call_operand.hbm [shape: f32[6,1,32], index: 10, kind: input, shape index: {}]
  %s11 = inlined_call_operand.hbm [shape: f32[6,1,32], index: 11, kind: input, shape index: {}]
  %s12 = inlined_call_operand.hbm [shape: f32[6,1,32], index: 12, kind: input, shape index: {}]
  %s13 = inlined_call_operand.hbm [shape: f32[32,128], index: 13, kind: input, shape index: {}]
  %s14 = inlined_call_operand.hbm [shape: f32[32,128], index: 14, kind: input, shape index: {}]
  %s15 = inlined_call_operand.vmem [shape: f32[1,128], index: 15, kind: input, shape index: {}]
  %s16 = inlined_call_operand.vmem [shape: f32[3,128,128], index: 16, kind: input, shape index: {}]
  %s17 = inlined_call_operand.vmem [shape: f32[1,128], index: 17, kind: input, shape index: {}]
  %s18 = inlined_call_operand.hbm [shape: f32[4,16,128], index: 18, kind: output, shape index: {}]
  %s19 = sld [smem:[#allocation0]]
  $region137: #{tpu_custom_call.1} parent=0
    _
  %s21 = ssub.s32 1, %s19
  %s22 = scalar_select 0, %s21, %s19
  $region1: #{tpu_custom_call.1} parent=0
    #allocation2 [shape = 'u8[8192]{0}', space=vmem, size = 0x2000, scoped, tag = 'input window, operand 1']
    #allocation3 [shape = 's32[2]{0}', space=sflag, size = 0x8, scoped, tag = 'scoped memory for tpu_custom_call.1']
    #allocation4 [shape = 's32[2]{0}', space=sflag, size = 0x8, scoped, tag = 'scoped memory for tpu_custom_call.1']
    #allocation5 [shape = 'u8[3072]{0}', space=vmem, size = 0xc00, scoped, tag = 'input window, operand 8, single buffered']
    #allocation6 [shape = 's32[1]{0}', space=sflag, size = 0x4, scoped, tag = 'scoped memory for tpu_custom_call.1']
    #allocation7 [shape = 'u8[49152]{0}', space=vmem, size = 0xc000, scoped, tag = 'input window, operand 9, single buffered']
    #allocation8 [shape = 'u8[3072]{0}', space=vmem, size = 0xc00, scoped, tag = 'input window, operand 10, single buffered']
    #allocation9 [shape = 's32[1]{0}', space=sflag, size = 0x4, scoped, tag = 'scoped memory for tpu_custom_call.1']
    #allocation10 [shape = 'u8[3072]{0}', space=vmem, size = 0xc00, scoped, tag = 'input window, operand 11, single buffered']
    #allocation11 [shape = 'u8[3072]{0}', space=vmem, size = 0xc00, scoped, tag = 'input window, operand 12, single buffered']
    #allocation12 [shape = 's32[1]{0}', space=sflag, size = 0x4, scoped, tag = 'scoped memory for tpu_custom_call.1']
    #allocation13 [shape = 'u8[16384]{0}', space=vmem, size = 0x4000, scoped, tag = 'input window, operand 13, single buffered']
    #allocation14 [shape = 'u8[16384]{0}', space=vmem, size = 0x4000, scoped, tag = 'input window, operand 14, single buffered']
    #allocation15 [shape = 's32[1]{0}', space=sflag, size = 0x4, scoped, tag = 'scoped memory for tpu_custom_call.1']
    #allocation16 [shape = 'u8[16384]{0}', space=vmem, size = 0x4000, scoped, tag = 'output window, operand 0']
    %23 = vsyncpa [#allocation3], 0
    %s24 = scalar_lea.sflag [#allocation3], 1
    %25 = vsyncpa %s24, 0
    %26 = vsyncpa [#allocation6], 0
    %27 = vsyncpa [#allocation9], 0
    %28 = vsyncpa [#allocation12], 0
    %29 = vsyncpa [#allocation15], 0
    %30 = vsyncpa [#allocation4], 0
    %s31 = scalar_lea.sflag [#allocation4], 1
    %32 = vsyncpa %s31, 0
    loop: start=0, step=1, limit=6
    $region2: #{tpu_custom_call.1} parent=1 // loop_pre_header
      _
    $region3: #{tpu_custom_call.1} parent=1 // loop_header
      %s34 = sphi 0, %s38
      %p35 = scmp.ge.s32.totalorder %s34, 6
      %s44 = sphi 0, %s46
      %s47 = sphi 0, %s44
      %s48 = sphi 0, %s47
      %s64 = sphi 0, %s48
      %s70 = sphi 0, %s72
      %s73 = sphi 0, %s70
      %s74 = sphi 0, %s73
      %s90 = sphi 0, %s74
      %s94 = sphi 0, %s94
      %s96 = sphi 0, %s94
      %s97 = sphi 0, %s96
      %s111 = sphi 0, %s97
      %s115 = sphi 0, %s115
      %s117 = sphi 0, %s115
      %s118 = sphi 0, %s117
      %s132 = sphi 0, %s118
      %s136 = sphi 0, %s136
      %s138 = sphi 0, %s136
      %s139 = sphi 0, %s138
      %s153 = sphi 0, %s139
      %s157 = sphi 0, %s157
      %s159 = sphi 0, %s157
      %s160 = sphi 0, %s159
      %s174 = sphi 0, %s160
      %s178 = sphi 0, %s178
      %s180 = sphi 0, %s178
      %s181 = sphi 0, %s180
      %s195 = sphi 0, %s181
      %s199 = sphi 0, %s199
      %s201 = sphi 0, %s199
      %s202 = sphi 0, %s201
      %s216 = sphi 0, %s202
      %s220 = sphi 0, %s220
      %s222 = sphi 0, %s220
      %s223 = sphi 0, %s222
      %s237 = sphi 0, %s223
      %s241 = sphi 0, %s241
      %s243 = sphi 0, %s241
      %s244 = sphi 0, %s243
      %s258 = sphi 0, %s244
      %s262 = sphi 0, %s262
      %s264 = sphi 0, %s262
      %s265 = sphi 0, %s264
      %s279 = sphi 0, %s265
      %s283 = sphi 0, %s283
      %s285 = sphi 0, %s283
      %s286 = sphi 0, %s285
      %s300 = sphi 0, %s286
      %s304 = sphi 0, %s304
      %s306 = sphi 0, %s304
      %s307 = sphi 0, %s306
      %s321 = sphi 0, %s307
      %s325 = sphi 0, %s325
      %s327 = sphi 0, %s325
      %s328 = sphi 0, %s327
      %s342 = sphi 0, %s328
      %s346 = sphi 0, %s346
      %s348 = sphi 0, %s346
      %s349 = sphi 0, %s348
      %s363 = sphi 0, %s349
      %s367 = sphi 0, %s367
      %s369 = sphi 0, %s367
      %s370 = sphi 0, %s369
      %s384 = sphi 0, %s370
      %s388 = sphi 0, %s388
      %s390 = sphi 0, %s388
      %s391 = sphi 0, %s390
      %s405 = sphi 0, %s391
      %s409 = sphi 0, %s409
      %s411 = sphi 0, %s409
      %s412 = sphi 0, %s411
      %s426 = sphi 0, %s412
      %s432 = sphi 0, %s434
      %s435 = sphi 0, %s432
      %s436 = sphi 0, %s435
      %s452 = sphi 0, %s436
    $region4: #{tpu_custom_call.1} parent=1 // loop_header_branch
      %37 = sbr.rel (%p35) target = $region8
    $region5: #{tpu_custom_call.1} parent=1 // loop_body
      %s39 = ssub.s32 %s34, 1
      %s40 = ssub.s32 %s34, 2
      %s41 = sadd.s32 %s34, 1
      %s42 = ssub.s32 %s34, %s41
      %p43 = scmp.eq.s32.totalorder %s42, 0
      %s45 = sadd.s32 %s44, 1
      %s46 = scalar_select %p43, %s44, %s45
      %p49 = pneg %p43
      %p50 = scmp.eq.s32.totalorder %s34, 3
      %p51 = por %p49, %p50
      %p52 = scmp.ne.s32.totalorder %s44, %s47
      %p53 = scmp.eq.s32.totalorder %s34, 0
      %p54 = por %p52, %p53
      %p55 = scmp.ne.s32.totalorder %s44, %s47
      %p56 = scmp.eq.s32.totalorder %s39, 3
      %p57 = por %p55, %p56
      %p58 = scmp.ne.s32.totalorder %s47, %s48
      %p59 = scmp.eq.s32.totalorder %s39, 0
      %p60 = por %p58, %p59
      %p61 = scmp.ne.s32.totalorder %s47, %s48
      %p62 = scmp.eq.s32.totalorder %s40, 3
      %p63 = por %p61, %p62
      %p65 = scmp.ne.s32.totalorder %s48, %s64
      %p66 = scmp.eq.s32.totalorder %s40, 0
      %p67 = por %p65, %p66
      %s68 = ssub.s32 %s34, %s41
      %p69 = scmp.eq.s32.totalorder %s68, 0
      %s71 = sadd.s32 %s70, 1
      %s72 = scalar_select %p69, %s70, %s71
      %p75 = pneg %p69
      %p76 = scmp.eq.s32.totalorder %s34, 3
      %p77 = por %p75, %p76
      %p78 = scmp.ne.s32.totalorder %s70, %s73
      %p79 = scmp.eq.s32.totalorder %s34, 0
      %p80 = por %p78, %p79
      %p81 = scmp.ne.s32.totalorder %s70, %s73
      %p82 = scmp.eq.s32.totalorder %s39, 3
      %p83 = por %p81, %p82
      %p84 = scmp.ne.s32.totalorder %s73, %s74
      %p85 = scmp.eq.s32.totalorder %s39, 0
      %p86 = por %p84, %p85
      %p87 = scmp.ne.s32.totalorder %s73, %s74
      %p88 = scmp.eq.s32.totalorder %s40, 3
      %p89 = por %p87, %p88
      %p91 = scmp.ne.s32.totalorder %s74, %s90
      %p92 = scmp.eq.s32.totalorder %s40, 0
      %p93 = por %p91, %p92
      %s95 = sadd.s32 %s94, 1
      %p98 = scmp.eq.s32.totalorder %s34, 3
      %p99 = scmp.ne.s32.totalorder %s94, %s96
      %p100 = scmp.eq.s32.totalorder %s34, 0
      %p101 = por %p99, %p100
      %p102 = scmp.ne.s32.totalorder %s94, %s96
      %p103 = scmp.eq.s32.totalorder %s39, 3
      %p104 = por %p102, %p103
      %p105 = scmp.ne.s32.totalorder %s96, %s97
      %p106 = scmp.eq.s32.totalorder %s39, 0
      %p107 = por %p105, %p106
      %p108 = scmp.ne.s32.totalorder %s96, %s97
      %p109 = scmp.eq.s32.totalorder %s40, 3
      %p110 = por %p108, %p109
      %p112 = scmp.ne.s32.totalorder %s97, %s111
      %p113 = scmp.eq.s32.totalorder %s40, 0
      %p114 = por %p112, %p113
      %s116 = sadd.s32 %s115, 1
      %p119 = scmp.eq.s32.totalorder %s34, 3
      %p120 = scmp.ne.s32.totalorder %s115, %s117
      %p121 = scmp.eq.s32.totalorder %s34, 0
      %p122 = por %p120, %p121
      %p123 = scmp.ne.s32.totalorder %s115, %s117
      %p124 = scmp.eq.s32.totalorder %s39, 3
      %p125 = por %p123, %p124
      %p126 = scmp.ne.s32.totalorder %s117, %s118
      %p127 = scmp.eq.s32.totalorder %s39, 0
      %p128 = por %p126, %p127
      %p129 = scmp.ne.s32.totalorder %s117, %s118
      %p130 = scmp.eq.s32.totalorder %s40, 3
      %p131 = por %p129, %p130
      %p133 = scmp.ne.s32.totalorder %s118, %s132
      %p134 = scmp.eq.s32.totalorder %s40, 0
      %p135 = por %p133, %p134
      %s137 = sadd.s32 %s136, 1
      %p140 = scmp.eq.s32.totalorder %s34, 3
      %p141 = scmp.ne.s32.totalorder %s136, %s138
      %p142 = scmp.eq.s32.totalorder %s34, 0
      %p143 = por %p141, %p142
      %p144 = scmp.ne.s32.totalorder %s136, %s138
      %p145 = scmp.eq.s32.totalorder %s39, 3
      %p146 = por %p144, %p145
      %p147 = scmp.ne.s32.totalorder %s138, %s139
      %p148 = scmp.eq.s32.totalorder %s39, 0
      %p149 = por %p147, %p148
      %p150 = scmp.ne.s32.totalorder %s138, %s139
      %p151 = scmp.eq.s32.totalorder %s40, 3
      %p152 = por %p150, %p151
      %p154 = scmp.ne.s32.totalorder %s139, %s153
      %p155 = scmp.eq.s32.totalorder %s40, 0
      %p156 = por %p154, %p155
      %s158 = sadd.s32 %s157, 1
      %p161 = scmp.eq.s32.totalorder %s34, 3
      %p162 = scmp.ne.s32.totalorder %s157, %s159
      %p163 = scmp.eq.s32.totalorder %s34, 0
      %p164 = por %p162, %p163
      %p165 = scmp.ne.s32.totalorder %s157, %s159
      %p166 = scmp.eq.s32.totalorder %s39, 3
      %p167 = por %p165, %p166
      %p168 = scmp.ne.s32.totalorder %s159, %s160
      %p169 = scmp.eq.s32.totalorder %s39, 0
      %p170 = por %p168, %p169
      %p171 = scmp.ne.s32.totalorder %s159, %s160
      %p172 = scmp.eq.s32.totalorder %s40, 3
      %p173 = por %p171, %p172
      %p175 = scmp.ne.s32.totalorder %s160, %s174
      %p176 = scmp.eq.s32.totalorder %s40, 0
      %p177 = por %p175, %p176
      %s179 = sadd.s32 %s178, 1
      %p182 = scmp.eq.s32.totalorder %s34, 3
      %p183 = scmp.ne.s32.totalorder %s178, %s180
      %p184 = scmp.eq.s32.totalorder %s34, 0
      %p185 = por %p183, %p184
      %p186 = scmp.ne.s32.totalorder %s178, %s180
      %p187 = scmp.eq.s32.totalorder %s39, 3
      %p188 = por %p186, %p187
      %p189 = scmp.ne.s32.totalorder %s180, %s181
      %p190 = scmp.eq.s32.totalorder %s39, 0
      %p191 = por %p189, %p190
      %p192 = scmp.ne.s32.totalorder %s180, %s181
      %p193 = scmp.eq.s32.totalorder %s40, 3
      %p194 = por %p192, %p193
      %p196 = scmp.ne.s32.totalorder %s181, %s195
      %p197 = scmp.eq.s32.totalorder %s40, 0
      %p198 = por %p196, %p197
      %s200 = sadd.s32 %s199, 1
      %p203 = scmp.eq.s32.totalorder %s34, 3
      %p204 = scmp.ne.s32.totalorder %s199, %s201
      %p205 = scmp.eq.s32.totalorder %s34, 0
      %p206 = por %p204, %p205
      %p207 = scmp.ne.s32.totalorder %s199, %s201
      %p208 = scmp.eq.s32.totalorder %s39, 3
      %p209 = por %p207, %p208
      %p210 = scmp.ne.s32.totalorder %s201, %s202
      %p211 = scmp.eq.s32.totalorder %s39, 0
      %p212 = por %p210, %p211
      %p213 = scmp.ne.s32.totalorder %s201, %s202
      %p214 = scmp.eq.s32.totalorder %s40, 3
      %p215 = por %p213, %p214
      %p217 = scmp.ne.s32.totalorder %s202, %s216
      %p218 = scmp.eq.s32.totalorder %s40, 0
      %p219 = por %p217, %p218
      %s221 = sadd.s32 %s220, 1
      %p224 = scmp.eq.s32.totalorder %s34, 3
      %p225 = scmp.ne.s32.totalorder %s220, %s222
      %p226 = scmp.eq.s32.totalorder %s34, 0
      %p227 = por %p225, %p226
      %p228 = scmp.ne.s32.totalorder %s220, %s222
      %p229 = scmp.eq.s32.totalorder %s39, 3
      %p230 = por %p228, %p229
      %p231 = scmp.ne.s32.totalorder %s222, %s223
      %p232 = scmp.eq.s32.totalorder %s39, 0
      %p233 = por %p231, %p232
      %p234 = scmp.ne.s32.totalorder %s222, %s223
      %p235 = scmp.eq.s32.totalorder %s40, 3
      %p236 = por %p234, %p235
      %p238 = scmp.ne.s32.totalorder %s223, %s237
      %p239 = scmp.eq.s32.totalorder %s40, 0
      %p240 = por %p238, %p239
      %s242 = sadd.s32 %s241, 1
      %p245 = scmp.eq.s32.totalorder %s34, 3
      %p246 = scmp.ne.s32.totalorder %s241, %s243
      %p247 = scmp.eq.s32.totalorder %s34, 0
      %p248 = por %p246, %p247
      %p249 = scmp.ne.s32.totalorder %s241, %s243
      %p250 = scmp.eq.s32.totalorder %s39, 3
      %p251 = por %p249, %p250
      %p252 = scmp.ne.s32.totalorder %s243, %s244
      %p253 = scmp.eq.s32.totalorder %s39, 0
      %p254 = por %p252, %p253
      %p255 = scmp.ne.s32.totalorder %s243, %s244
      %p256 = scmp.eq.s32.totalorder %s40, 3
      %p257 = por %p255, %p256
      %p259 = scmp.ne.s32.totalorder %s244, %s258
      %p260 = scmp.eq.s32.totalorder %s40, 0
      %p261 = por %p259, %p260
      %s263 = sadd.s32 %s262, 1
      %p266 = scmp.eq.s32.totalorder %s34, 3
      %p267 = scmp.ne.s32.totalorder %s262, %s264
      %p268 = scmp.eq.s32.totalorder %s34, 0
      %p269 = por %p267, %p268
      %p270 = scmp.ne.s32.totalorder %s262, %s264
      %p271 = scmp.eq.s32.totalorder %s39, 3
      %p272 = por %p270, %p271
      %p273 = scmp.ne.s32.totalorder %s264, %s265
      %p274 = scmp.eq.s32.totalorder %s39, 0
      %p275 = por %p273, %p274
      %p276 = scmp.ne.s32.totalorder %s264, %s265
      %p277 = scmp.eq.s32.totalorder %s40, 3
      %p278 = por %p276, %p277
      %p280 = scmp.ne.s32.totalorder %s265, %s279
      %p281 = scmp.eq.s32.totalorder %s40, 0
      %p282 = por %p280, %p281
      %s284 = sadd.s32 %s283, 1
      %p287 = scmp.eq.s32.totalorder %s34, 3
      %p288 = scmp.ne.s32.totalorder %s283, %s285
      %p289 = scmp.eq.s32.totalorder %s34, 0
      %p290 = por %p288, %p289
      %p291 = scmp.ne.s32.totalorder %s283, %s285
      %p292 = scmp.eq.s32.totalorder %s39, 3
      %p293 = por %p291, %p292
      %p294 = scmp.ne.s32.totalorder %s285, %s286
      %p295 = scmp.eq.s32.totalorder %s39, 0
      %p296 = por %p294, %p295
      %p297 = scmp.ne.s32.totalorder %s285, %s286
      %p298 = scmp.eq.s32.totalorder %s40, 3
      %p299 = por %p297, %p298
      %p301 = scmp.ne.s32.totalorder %s286, %s300
      %p302 = scmp.eq.s32.totalorder %s40, 0
      %p303 = por %p301, %p302
      %s305 = sadd.s32 %s304, 1
      %p308 = scmp.eq.s32.totalorder %s34, 3
      %p309 = scmp.ne.s32.totalorder %s304, %s306
      %p310 = scmp.eq.s32.totalorder %s34, 0
      %p311 = por %p309, %p310
      %p312 = scmp.ne.s32.totalorder %s304, %s306
      %p313 = scmp.eq.s32.totalorder %s39, 3
      %p314 = por %p312, %p313
      %p315 = scmp.ne.s32.totalorder %s306, %s307
      %p316 = scmp.eq.s32.totalorder %s39, 0
      %p317 = por %p315, %p316
      %p318 = scmp.ne.s32.totalorder %s306, %s307
      %p319 = scmp.eq.s32.totalorder %s40, 3
      %p320 = por %p318, %p319
      %p322 = scmp.ne.s32.totalorder %s307, %s321
      %p323 = scmp.eq.s32.totalorder %s40, 0
      %p324 = por %p322, %p323
      %s326 = sadd.s32 %s325, 1
      %p329 = scmp.eq.s32.totalorder %s34, 3
      %p330 = scmp.ne.s32.totalorder %s325, %s327
      %p331 = scmp.eq.s32.totalorder %s34, 0
      %p332 = por %p330, %p331
      %p333 = scmp.ne.s32.totalorder %s325, %s327
      %p334 = scmp.eq.s32.totalorder %s39, 3
      %p335 = por %p333, %p334
      %p336 = scmp.ne.s32.totalorder %s327, %s328
      %p337 = scmp.eq.s32.totalorder %s39, 0
      %p338 = por %p336, %p337
      %p339 = scmp.ne.s32.totalorder %s327, %s328
      %p340 = scmp.eq.s32.totalorder %s40, 3
      %p341 = por %p339, %p340
      %p343 = scmp.ne.s32.totalorder %s328, %s342
      %p344 = scmp.eq.s32.totalorder %s40, 0
      %p345 = por %p343, %p344
      %s347 = sadd.s32 %s346, 1
      %p350 = scmp.eq.s32.totalorder %s34, 3
      %p351 = scmp.ne.s32.totalorder %s346, %s348
      %p352 = scmp.eq.s32.totalorder %s34, 0
      %p353 = por %p351, %p352
      %p354 = scmp.ne.s32.totalorder %s346, %s348
      %p355 = scmp.eq.s32.totalorder %s39, 3
      %p356 = por %p354, %p355
      %p357 = scmp.ne.s32.totalorder %s348, %s349
      %p358 = scmp.eq.s32.totalorder %s39, 0
      %p359 = por %p357, %p358
      %p360 = scmp.ne.s32.totalorder %s348, %s349
      %p361 = scmp.eq.s32.totalorder %s40, 3
      %p362 = por %p360, %p361
      %p364 = scmp.ne.s32.totalorder %s349, %s363
      %p365 = scmp.eq.s32.totalorder %s40, 0
      %p366 = por %p364, %p365
      %s368 = sadd.s32 %s367, 1
      %p371 = scmp.eq.s32.totalorder %s34, 3
      %p372 = scmp.ne.s32.totalorder %s367, %s369
      %p373 = scmp.eq.s32.totalorder %s34, 0
      %p374 = por %p372, %p373
      %p375 = scmp.ne.s32.totalorder %s367, %s369
      %p376 = scmp.eq.s32.totalorder %s39, 3
      %p377 = por %p375, %p376
      %p378 = scmp.ne.s32.totalorder %s369, %s370
      %p379 = scmp.eq.s32.totalorder %s39, 0
      %p380 = por %p378, %p379
      %p381 = scmp.ne.s32.totalorder %s369, %s370
      %p382 = scmp.eq.s32.totalorder %s40, 3
      %p383 = por %p381, %p382
      %p385 = scmp.ne.s32.totalorder %s370, %s384
      %p386 = scmp.eq.s32.totalorder %s40, 0
      %p387 = por %p385, %p386
      %s389 = sadd.s32 %s388, 1
      %p392 = scmp.eq.s32.totalorder %s34, 3
      %p393 = scmp.ne.s32.totalorder %s388, %s390
      %p394 = scmp.eq.s32.totalorder %s34, 0
      %p395 = por %p393, %p394
      %p396 = scmp.ne.s32.totalorder %s388, %s390
      %p397 = scmp.eq.s32.totalorder %s39, 3
      %p398 = por %p396, %p397
      %p399 = scmp.ne.s32.totalorder %s390, %s391
      %p400 = scmp.eq.s32.totalorder %s39, 0
      %p401 = por %p399, %p400
      %p402 = scmp.ne.s32.totalorder %s390, %s391
      %p403 = scmp.eq.s32.totalorder %s40, 3
      %p404 = por %p402, %p403
      %p406 = scmp.ne.s32.totalorder %s391, %s405
      %p407 = scmp.eq.s32.totalorder %s40, 0
      %p408 = por %p406, %p407
      %s410 = sadd.s32 %s409, 1
      %p413 = scmp.eq.s32.totalorder %s34, 3
      %p414 = scmp.ne.s32.totalorder %s409, %s411
      %p415 = scmp.eq.s32.totalorder %s34, 0
      %p416 = por %p414, %p415
      %p417 = scmp.ne.s32.totalorder %s409, %s411
      %p418 = scmp.eq.s32.totalorder %s39, 3
      %p419 = por %p417, %p418
      %p420 = scmp.ne.s32.totalorder %s411, %s412
      %p421 = scmp.eq.s32.totalorder %s39, 0
      %p422 = por %p420, %p421
      %p423 = scmp.ne.s32.totalorder %s411, %s412
      %p424 = scmp.eq.s32.totalorder %s40, 3
      %p425 = por %p423, %p424
      %p427 = scmp.ne.s32.totalorder %s412, %s426
      %p428 = scmp.eq.s32.totalorder %s40, 0
      %p429 = por %p427, %p428
      %s430 = ssub.s32 %s34, %s41
      %p431 = scmp.eq.s32.totalorder %s430, 0
      %s433 = sadd.s32 %s432, 1
      %s434 = scalar_select %p431, %s432, %s433
      %p437 = pneg %p431
      %p438 = scmp.eq.s32.totalorder %s34, 3
      %p439 = por %p437, %p438
      %p440 = scmp.ne.s32.totalorder %s432, %s435
      %p441 = scmp.eq.s32.totalorder %s34, 0
      %p442 = por %p440, %p441
      %p443 = scmp.ne.s32.totalorder %s432, %s435
      %p444 = scmp.eq.s32.totalorder %s39, 3
      %p445 = por %p443, %p444
      %p446 = scmp.ne.s32.totalorder %s435, %s436
      %p447 = scmp.eq.s32.totalorder %s39, 0
      %p448 = por %p446, %p447
      %p449 = scmp.ne.s32.totalorder %s435, %s436
      %p450 = scmp.eq.s32.totalorder %s40, 3
      %p451 = por %p449, %p450
      %p453 = scmp.ne.s32.totalorder %s436, %s452
      %p454 = scmp.eq.s32.totalorder %s40, 0
      %p455 = por %p453, %p454
      %p456 = scmp.le.s32.totalorder 1, %s34
      %p457 = scmp.lt.s32.totalorder %s34, 5
      %p458 = pnand %p456, %p457
      %p459 = pneg %p458
      // Predicated region
      $region9: #{tpu_custom_call.1} parent=5 // pred_check
        _
      $region10: #{tpu_custom_call.1} parent=5 // pred_check_branch
        %461 = sbr.rel (%p458) target = $region12
      $region11: #{tpu_custom_call.1} parent=5 // pred_region
        %s462 = ssub.s32 %s34, 1
        // Predicated region
        $region13: #{tpu_custom_call.1} parent=11 // pred_check
          %p463 = pneg %p107
        $region14: #{tpu_custom_call.1} parent=11 // pred_check_branch
          %465 = sbr.rel (%p463) target = $region16
        $region15: #{tpu_custom_call.1} parent=11 // pred_region
          _
        $region16: #{tpu_custom_call.1} parent=11 // pred_fallthru
          _
        // Predicated region
        $region17: #{tpu_custom_call.1} parent=11 // pred_check
          %p466 = pneg %p128
        $region18: #{tpu_custom_call.1} parent=11 // pred_check_branch
          %468 = sbr.rel (%p466) target = $region20
        $region19: #{tpu_custom_call.1} parent=11 // pred_region
          _
        $region20: #{tpu_custom_call.1} parent=11 // pred_fallthru
          _
        // Predicated region
        $region21: #{tpu_custom_call.1} parent=11 // pred_check
          %p469 = pneg %p149
        $region22: #{tpu_custom_call.1} parent=11 // pred_check_branch
          %471 = sbr.rel (%p469) target = $region24
        $region23: #{tpu_custom_call.1} parent=11 // pred_region
          _
        $region24: #{tpu_custom_call.1} parent=11 // pred_fallthru
          _
        // Predicated region
        $region25: #{tpu_custom_call.1} parent=11 // pred_check
          %p472 = pneg %p170
        $region26: #{tpu_custom_call.1} parent=11 // pred_check_branch
          %474 = sbr.rel (%p472) target = $region28
        $region27: #{tpu_custom_call.1} parent=11 // pred_region
          _
        $region28: #{tpu_custom_call.1} parent=11 // pred_fallthru
          _
        // Predicated region
        $region29: #{tpu_custom_call.1} parent=11 // pred_check
          %p475 = pneg %p191
        $region30: #{tpu_custom_call.1} parent=11 // pred_check_branch
          %477 = sbr.rel (%p475) target = $region32
        $region31: #{tpu_custom_call.1} parent=11 // pred_region
          _
        $region32: #{tpu_custom_call.1} parent=11 // pred_fallthru
          _
        // Predicated region
        $region33: #{tpu_custom_call.1} parent=11 // pred_check
          %p478 = pneg %p212
        $region34: #{tpu_custom_call.1} parent=11 // pred_check_branch
          %480 = sbr.rel (%p478) target = $region36
        $region35: #{tpu_custom_call.1} parent=11 // pred_region
          _
        $region36: #{tpu_custom_call.1} parent=11 // pred_fallthru
          _
        // Predicated region
        $region37: #{tpu_custom_call.1} parent=11 // pred_check
          %p481 = pneg %p233
        $region38: #{tpu_custom_call.1} parent=11 // pred_check_branch
          %483 = sbr.rel (%p481) target = $region40
        $region39: #{tpu_custom_call.1} parent=11 // pred_region
          %s485 = ssub.s32 96, 96
          %486 = vsyncadd [#allocation6], %s485
          %s487 = sshll.u32 [#allocation5], 4
          %s488 = int_to_ptr.vmem [resolvable:$true] %s487
          %493 = dma.hbm_to_vmem [thread:$0]  %s8, 96, %s488, [#allocation6], 16, 16, 1
        $region40: #{tpu_custom_call.1} parent=11 // pred_fallthru
          _
        // Predicated region
        $region41: #{tpu_custom_call.1} parent=11 // pred_check
          %p494 = pneg %p254
        $region42: #{tpu_custom_call.1} parent=11 // pred_check_branch
          %496 = sbr.rel (%p494) target = $region44
        $region43: #{tpu_custom_call.1} parent=11 // pred_region
          %s498 = ssub.s32 1536, 1536
          %499 = vsyncadd [#allocation6], %s498
          %s500 = sshll.u32 [#allocation7], 4
          %s501 = int_to_ptr.vmem [resolvable:$true] %s500
          %506 = dma.hbm_to_vmem [thread:$0]  %s9, 1536, %s501, [#allocation6], 128, 128, 8
        $region44: #{tpu_custom_call.1} parent=11 // pred_fallthru
          _
        // Predicated region
        $region45: #{tpu_custom_call.1} parent=11 // pred_check
          %p507 = pneg %p275
        $region46: #{tpu_custom_call.1} parent=11 // pred_check_branch
          %509 = sbr.rel (%p507) target = $region48
        $region47: #{tpu_custom_call.1} parent=11 // pred_region
          %s511 = ssub.s32 96, 96
          %512 = vsyncadd [#allocation9], %s511
          %s513 = sshll.u32 [#allocation8], 4
          %s514 = int_to_ptr.vmem [resolvable:$true] %s513
          %519 = dma.hbm_to_vmem [thread:$0]  %s10, 96, %s514, [#allocation9], 16, 16, 1
        $region48: #{tpu_custom_call.1} parent=11 // pred_fallthru
          _
        // Predicated region
        $region49: #{tpu_custom_call.1} parent=11 // pred_check
          %p520 = pneg %p296
        $region50: #{tpu_custom_call.1} parent=11 // pred_check_branch
          %522 = sbr.rel (%p520) target = $region52
        $region51: #{tpu_custom_call.1} parent=11 // pred_region
          %s524 = ssub.s32 96, 96
          %525 = vsyncadd [#allocation9], %s524
          %s526 = sshll.u32 [#allocation10], 4
          %s527 = int_to_ptr.vmem [resolvable:$true] %s526
          %532 = dma.hbm_to_vmem [thread:$0]  %s11, 96, %s527, [#allocation9], 16, 16, 1
        $region52: #{tpu_custom_call.1} parent=11 // pred_fallthru
          _
        // Predicated region
        $region53: #{tpu_custom_call.1} parent=11 // pred_check
          %p533 = pneg %p317
        $region54: #{tpu_custom_call.1} parent=11 // pred_check_branch
          %535 = sbr.rel (%p533) target = $region56
        $region55: #{tpu_custom_call.1} parent=11 // pred_region
          %s537 = ssub.s32 96, 96
          %538 = vsyncadd [#allocation12], %s537
          %s539 = sshll.u32 [#allocation11], 4
          %s540 = int_to_ptr.vmem [resolvable:$true] %s539
          %545 = dma.hbm_to_vmem [thread:$0]  %s12, 96, %s540, [#allocation12], 16, 16, 1
        $region56: #{tpu_custom_call.1} parent=11 // pred_fallthru
          _
        // Predicated region
        $region57: #{tpu_custom_call.1} parent=11 // pred_check
          %p546 = pneg %p338
        $region58: #{tpu_custom_call.1} parent=11 // pred_check_branch
          %548 = sbr.rel (%p546) target = $region60
        $region59: #{tpu_custom_call.1} parent=11 // pred_region
          %s550 = ssub.s32 512, 512
          %551 = vsyncadd [#allocation12], %s550
          %s552 = sshll.u32 [#allocation13], 4
          %s553 = int_to_ptr.vmem [resolvable:$true] %s552
          %558 = dma.hbm_to_vmem [thread:$0]  %s13, 512, %s553, [#allocation12], 128, 128, 8
        $region60: #{tpu_custom_call.1} parent=11 // pred_fallthru
          _
        // Predicated region
        $region61: #{tpu_custom_call.1} parent=11 // pred_check
          %p559 = pneg %p359
        $region62: #{tpu_custom_call.1} parent=11 // pred_check_branch
          %561 = sbr.rel (%p559) target = $region64
        $region63: #{tpu_custom_call.1} parent=11 // pred_region
          %s563 = ssub.s32 512, 512
          %564 = vsyncadd [#allocation15], %s563
          %s565 = sshll.u32 [#allocation14], 4
          %s566 = int_to_ptr.vmem [resolvable:$true] %s565
          %571 = dma.hbm_to_vmem [thread:$0]  %s14, 512, %s566, [#allocation15], 128, 128, 8
        $region64: #{tpu_custom_call.1} parent=11 // pred_fallthru
          _
        // Predicated region
        $region65: #{tpu_custom_call.1} parent=11 // pred_check
          %p572 = pneg %p380
        $region66: #{tpu_custom_call.1} parent=11 // pred_check_branch
          %574 = sbr.rel (%p572) target = $region68
        $region67: #{tpu_custom_call.1} parent=11 // pred_region
          _
        $region68: #{tpu_custom_call.1} parent=11 // pred_fallthru
          _
        // Predicated region
        $region69: #{tpu_custom_call.1} parent=11 // pred_check
          %p575 = pneg %p401
        $region70: #{tpu_custom_call.1} parent=11 // pred_check_branch
          %577 = sbr.rel (%p575) target = $region72
        $region71: #{tpu_custom_call.1} parent=11 // pred_region
          _
        $region72: #{tpu_custom_call.1} parent=11 // pred_fallthru
          _
        // Predicated region
        $region73: #{tpu_custom_call.1} parent=11 // pred_check
          %p578 = pneg %p422
        $region74: #{tpu_custom_call.1} parent=11 // pred_check_branch
          %580 = sbr.rel (%p578) target = $region76
        $region75: #{tpu_custom_call.1} parent=11 // pred_region
          _
        $region76: #{tpu_custom_call.1} parent=11 // pred_fallthru
          _
      $region12: #{tpu_custom_call.1} parent=5 // pred_fallthru
        _
      %p581 = scmp.lt.s32.totalorder %s34, 4
      // Predicated region
      $region77: #{tpu_custom_call.1} parent=5 // pred_check
        %p582 = pneg %p581
      $region78: #{tpu_custom_call.1} parent=5 // pred_check_branch
        %584 = sbr.rel (%p582) target = $region80
      $region79: #{tpu_custom_call.1} parent=5 // pred_region
        // Predicated region
        $region81: #{tpu_custom_call.1} parent=79 // pred_check
          %p585 = pneg %p54
        $region82: #{tpu_custom_call.1} parent=79 // pred_check_branch
          %587 = sbr.rel (%p585) target = $region84
        $region83: #{tpu_custom_call.1} parent=79 // pred_region
          %p588 = scmp.lt.s32.totalorder %s34, 3
          %s589 = scalar_select %p588, %s34, 3
          %s590 = smul.addr %s589, 2
          %s591 = smul.addr %s590, 8
          %s592 = scalar_lea.vmem %s0, %s591
        $region84: #{tpu_custom_call.1} parent=79 // pred_fallthru
          _
        // Predicated region
        $region85: #{tpu_custom_call.1} parent=79 // pred_check
          %p593 = pneg %p80
        $region86: #{tpu_custom_call.1} parent=79 // pred_check_branch
          %595 = sbr.rel (%p593) target = $region88
        $region87: #{tpu_custom_call.1} parent=79 // pred_region
          %s596 = sand.u32 %s70, 1
          %s597 = scalar_lea.sflag [#allocation3], %s596
          %s598 = sand.u32 %s70, 1
          %s599 = smul.addr %s598, 8
          %s600 = scalar_lea.vmem [#allocation2], %s599
          %s602 = ssub.s32 128, 128
          %603 = vsyncadd %s597, %s602
          %s604 = smul.addr %s34, 2
          %s605 = smul.addr %s604, 64
          %s606 = scalar_lea.hbm %s1, %s605
          %s607 = sshll.u32 %s600, 4
          %s608 = int_to_ptr.vmem [resolvable:$true] %s607
          %613 = dma.hbm_to_vmem [thread:$0]  %s606, 128, %s608, %s597, 64, 64, 4
        $region88: #{tpu_custom_call.1} parent=79 // pred_fallthru
          _
      $region80: #{tpu_custom_call.1} parent=5 // pred_fallthru
        _
      %p614 = scmp.le.s32.totalorder 1, %s34
      %p615 = scmp.lt.s32.totalorder %s34, 5
      %p616 = pnand %p614, %p615
      %p617 = pneg %p616
      // Predicated region
      $region89: #{tpu_custom_call.1} parent=5 // pred_check
        _
      $region90: #{tpu_custom_call.1} parent=5 // pred_check_branch
        %619 = sbr.rel (%p616) target = $region92
      $region91: #{tpu_custom_call.1} parent=5 // pred_region
        %s620 = ssub.s32 %s34, 1
        %s621 = sand.u32 %s73, 1
        %s622 = scalar_lea.sflag [#allocation3], %s621
        %s623 = sand.u32 %s73, 1
        %s624 = smul.addr %s623, 8
        %s625 = scalar_lea.vmem [#allocation2], %s624
        // Predicated region
        $region93: #{tpu_custom_call.1} parent=91 // pred_check
          %p626 = pneg %p86
        $region94: #{tpu_custom_call.1} parent=91 // pred_check_branch
          %628 = sbr.rel (%p626) target = $region96
        $region95: #{tpu_custom_call.1} parent=91 // pred_region
          %629 = dma.done %s622, 128
        $region96: #{tpu_custom_call.1} parent=91 // pred_fallthru
          _
        // Predicated region
        $region97: #{tpu_custom_call.1} parent=91 // pred_check
          %p630 = pneg %p233
        $region98: #{tpu_custom_call.1} parent=91 // pred_check_branch
          %632 = sbr.rel (%p630) target = $region100
        $region99: #{tpu_custom_call.1} parent=91 // pred_region
          %633 = dma.done [#allocation6], 96
        $region100: #{tpu_custom_call.1} parent=91 // pred_fallthru
          _
        // Predicated region
        $region101: #{tpu_custom_call.1} parent=91 // pred_check
          %p634 = pneg %p254
        $region102: #{tpu_custom_call.1} parent=91 // pred_check_branch
          %636 = sbr.rel (%p634) target = $region104
        $region103: #{tpu_custom_call.1} parent=91 // pred_region
          %637 = dma.done [#allocation6], 1536
        $region104: #{tpu_custom_call.1} parent=91 // pred_fallthru
          _
        // Predicated region
        $region105: #{tpu_custom_call.1} parent=91 // pred_check
          %p638 = pneg %p275
        $region106: #{tpu_custom_call.1} parent=91 // pred_check_branch
          %640 = sbr.rel (%p638) target = $region108
        $region107: #{tpu_custom_call.1} parent=91 // pred_region
          %641 = dma.done [#allocation9], 96
        $region108: #{tpu_custom_call.1} parent=91 // pred_fallthru
          _
        // Predicated region
        $region109: #{tpu_custom_call.1} parent=91 // pred_check
          %p642 = pneg %p296
        $region110: #{tpu_custom_call.1} parent=91 // pred_check_branch
          %644 = sbr.rel (%p642) target = $region112
        $region111: #{tpu_custom_call.1} parent=91 // pred_region
          %645 = dma.done [#allocation9], 96
        $region112: #{tpu_custom_call.1} parent=91 // pred_fallthru
          _
        // Predicated region
        $region113: #{tpu_custom_call.1} parent=91 // pred_check
          %p646 = pneg %p317
        $region114: #{tpu_custom_call.1} parent=91 // pred_check_branch
          %648 = sbr.rel (%p646) target = $region116
        $region115: #{tpu_custom_call.1} parent=91 // pred_region
          %649 = dma.done [#allocation12], 96
        $region116: #{tpu_custom_call.1} parent=91 // pred_fallthru
          _
        // Predicated region
        $region117: #{tpu_custom_call.1} parent=91 // pred_check
          %p650 = pneg %p338
        $region118: #{tpu_custom_call.1} parent=91 // pred_check_branch
          %652 = sbr.rel (%p650) target = $region120
        $region119: #{tpu_custom_call.1} parent=91 // pred_region
          %653 = dma.done [#allocation12], 512
        $region120: #{tpu_custom_call.1} parent=91 // pred_fallthru
          _
        // Predicated region
        $region121: #{tpu_custom_call.1} parent=91 // pred_check
          %p654 = pneg %p359
        $region122: #{tpu_custom_call.1} parent=91 // pred_check_branch
          %656 = sbr.rel (%p654) target = $region124
        $region123: #{tpu_custom_call.1} parent=91 // pred_region
          %657 = dma.done [#allocation15], 512
        $region124: #{tpu_custom_call.1} parent=91 // pred_fallthru
          _
        %p658 = scmp.lt.s32.totalorder %s39, 3
        %s659 = scalar_select %p658, %s39, 3
        %s660 = smul.addr %s659, 2
        %s661 = smul.addr %s660, 8
        %s662 = scalar_lea.vmem %s0, %s661
        %p663 = pneg %p60
        %p664 = pneg %p57
        %s665 = sand.u32 %s73, 1
        %s666 = scalar_lea.sflag [#allocation3], %s665
        %s667 = sand.u32 %s73, 1
        %s668 = smul.addr %s667, 8
        %s669 = scalar_lea.vmem [#allocation2], %s668
        %p670 = pneg %p86
        %p671 = pneg %p83
        %p672 = pneg %p107
        %p673 = pneg %p104
        %p674 = pneg %p128
        %p675 = pneg %p125
        %p676 = pneg %p149
        %p677 = pneg %p146
        %p678 = pneg %p170
        %p679 = pneg %p167
        %p680 = pneg %p191
        %p681 = pneg %p188
        %p682 = pneg %p212
        %p683 = pneg %p209
        %p684 = pneg %p233
        %p685 = pneg %p230
        %p686 = pneg %p254
        %p687 = pneg %p251
        %p688 = pneg %p275
        %p689 = pneg %p272
        %p690 = pneg %p296
        %p691 = pneg %p293
        %p692 = pneg %p317
        %p693 = pneg %p314
        %p694 = pneg %p338
        %p695 = pneg %p335
        %p696 = pneg %p359
        %p697 = pneg %p356
        %p698 = pneg %p380
        %p699 = pneg %p377
        %p700 = pneg %p401
        %p701 = pneg %p398
        %p702 = pneg %p422
        %p703 = pneg %p419
        %p704 = pneg %p448
        %p705 = pneg %p445
        %s706 = sand.u32 %s435, 1
        %s707 = scalar_lea.sflag [#allocation4], %s706
        %s708 = sand.u32 %s435, 1
        %s709 = smul.addr %s708, 16
        %s710 = scalar_lea.vmem [#allocation16], %s709
        %p711 = scmp.lt.s32.totalorder %s39, 3
        %s712 = scalar_select %p711, %s39, 3
        %s713 = smul.addr %s712, 2
        %s714 = smul.addr %s713, 8
        %s715 = scalar_lea.vmem %s0, %s714
        %v717 = vld [vmem:[%s715] sm:$0xff]
        %v718 = vld [vmem:[%s715 + $0x8] sm:$0xff]
        %v719 = vld [vmem:[%s2] sm:$0xff]
        %v720 = vld [vmem:[%s3] sm:$0x1]
        %v722 = vlaneseq
        %v723 = vshrl.u32 %v722, 7
        %v724 = vsub.s32 0, %v723
        %v725 = vrot.slane %v720, %v724
        %vm727 = vcmask 64512
        %v729 = vsel %vm727, %v717, 0
        %v732 = vsel %vm727, %v718, 0
        %734 = vmatprep.subr.mxu0 0.0
        %735 = vmatpush1.msra.mxu0 0.0
        %736 = vmatprep.subr.mxu0 0.0
        %737 = vmatpush1.msra.mxu0 0.0
        %738 = vmatprep.subr.mxu0 0.0
        %739 = vmatpush1.msra.mxu0 0.0
        %740 = vmatprep.subr.mxu0 0.0
        %741 = vmatpush1.msra.mxu0 0.0
        %742 = vmatprep.subr.mxu0 0.0
        %743 = vmatpush1.msra.mxu0 0.0
        %744 = vmatprep.subr.mxu0 0.0
        %745 = vmatpush1.msra.mxu0 0.0
        %746 = vmatprep.subr.mxu0 0.0
        %747 = vmatpush1.msra.mxu0 0.0
        %748 = vmatprep.subr.mxu0 0.0
        %749 = vmatpush1.msra.mxu0 0.0
        %750 = vmatprep.subr.mxu0 0.0
        %751 = vmatpush1.msra.mxu0 0.0
        %752 = vmatprep.subr.mxu0 0.0
        %753 = vmatpush1.msra.mxu0 0.0
        %754 = vmatprep.subr.mxu0 0.0
        %755 = vmatpush1.msra.mxu0 0.0
        %756 = vmatprep.subr.mxu0 0.0
        %757 = vmatpush1.msra.mxu0 0.0
        %758 = vmatprep.subr.mxu0 0.0
        %759 = vmatpush1.msra.mxu0 0.0
        %760 = vmatprep.subr.mxu0 0.0
        %761 = vmatpush1.msra.mxu0 0.0
        %762 = vmatprep.subr.mxu0 0.0
        %763 = vmatpush1.msra.mxu0 0.0
        %764 = vmatprep.subr.mxu0 0.0
        %765 = vmatpush1.msra.mxu0 %v719
        %766 = vmatprep.subr.mxu0 0.0
        %767 = vmatpush2.msra.mxu0 0.0
        %768 = vmatprep.subr.mxu0 0.0
        %769 = vmatpush2.msra.mxu0 0.0
        %770 = vmatprep.subr.mxu0 0.0
        %771 = vmatpush2.msra.mxu0 0.0
        %772 = vmatprep.subr.mxu0 0.0
        %773 = vmatpush2.msra.mxu0 0.0
        %774 = vmatprep.subr.mxu0 0.0
        %775 = vmatpush2.msra.mxu0 0.0
        %776 = vmatprep.subr.mxu0 0.0
        %777 = vmatpush2.msra.mxu0 0.0
        %778 = vmatprep.subr.mxu0 0.0
        %779 = vmatpush2.msra.mxu0 0.0
        %780 = vmatprep.subr.mxu0 0.0
        %781 = vmatpush2.msra.mxu0 0.0
        %782 = vmatprep.subr.mxu0 0.0
        %783 = vmatpush2.msra.mxu0 0.0
        %784 = vmatprep.subr.mxu0 0.0
        %785 = vmatpush2.msra.mxu0 0.0
        %786 = vmatprep.subr.mxu0 0.0
        %787 = vmatpush2.msra.mxu0 0.0
        %788 = vmatprep.subr.mxu0 0.0
        %789 = vmatpush2.msra.mxu0 0.0
        %790 = vmatprep.subr.mxu0 0.0
        %791 = vmatpush2.msra.mxu0 0.0
        %792 = vmatprep.subr.mxu0 0.0
        %793 = vmatpush2.msra.mxu0 0.0
        %794 = vmatprep.subr.mxu0 0.0
        %795 = vmatpush2.msra.mxu0 0.0
        %796 = vmatprep.subr.mxu0 0.0
        %797 = vmatpush2.msra.mxu0 0.0
        %798 = vmatprep.mubr.f32.mxu0 0.0
        %799 = vmatmul.mubr.f32.gmra.mxu0 %v729
        %v800 = vpop.f32.mrf.mxu0
        %v801 = vadd.f32 %v725, %v800
        %v802 = vpop.f32.mrf.mxu0
        %803 = vmatprep.mubr.f32.mxu0 0.0
        %804 = vmatmul.mubr.f32.gmra.mxu0 %v732
        %v805 = vpop.f32.mrf.mxu0
        %v806 = vadd.f32 %v725, %v805
        %v807 = vpop.f32.mrf.mxu0
        %808 = vdwg.mxu0
        %v809 = vld [vmem:[%s625] sm:$0xf]
        %v810 = vld [vmem:[%s625 + $0x4] sm:$0xf]
        %v811 = vpack.c.bf16 %v806, %v801
        %v814 = vunpack.c.l.b16 %v809
        %v815 = vunpack.c.l.b16 %v810
        %v816 = vpack.c.b16 %v815, %v814
        %vm817 = vcmask 130048
        %v819 = vsel %vm817, %v816, 0
        %821 = vmatprep.subr.bf16.mxu0 0
        %822 = vmatpush1.bf16.msra.mxu0 0
        %823 = vmatprep.subr.bf16.mxu0 0
        %824 = vmatpush1.bf16.msra.mxu0 0
        %825 = vmatprep.subr.bf16.mxu0 0
        %826 = vmatpush1.bf16.msra.mxu0 0
        %827 = vmatprep.subr.bf16.mxu0 0
        %828 = vmatpush1.bf16.msra.mxu0 0
        %829 = vmatprep.subr.bf16.mxu0 0
        %830 = vmatpush1.bf16.msra.mxu0 0
        %831 = vmatprep.subr.bf16.mxu0 0
        %832 = vmatpush1.bf16.msra.mxu0 0
        %833 = vmatprep.subr.bf16.mxu0 0
        %834 = vmatpush1.bf16.msra.mxu0 0
        %835 = vmatprep.subr.bf16.mxu0 0
        %836 = vmatpush1.bf16.msra.mxu0 %v811
        %837 = vmatprep.subr.bf16.mxu0 0
        %838 = vmatpush2.bf16.msra.mxu0 0
        %839 = vmatprep.subr.bf16.mxu0 0
        %840 = vmatpush2.bf16.msra.mxu0 0
        %841 = vmatprep.subr.bf16.mxu0 0
        %842 = vmatpush2.bf16.msra.mxu0 0
        %843 = vmatprep.subr.bf16.mxu0 0
        %844 = vmatpush2.bf16.msra.mxu0 0
        %845 = vmatprep.subr.bf16.mxu0 0
        %846 = vmatpush2.bf16.msra.mxu0 0
        %847 = vmatprep.subr.bf16.mxu0 0
        %848 = vmatpush2.bf16.msra.mxu0 0
        %849 = vmatprep.subr.bf16.mxu0 0
        %850 = vmatpush2.bf16.msra.mxu0 0
        %851 = vmatprep.subr.bf16.mxu0 0
        %852 = vmatpush2.bf16.msra.mxu0 0
        %853 = vmatprep.mubr.bf16.mxu0 0
        %854 = vmatmul.mubr.bf16.gmra.mxu0 %v819
        %v855 = vpop.f32.mrf.mxu0
        %v856 = vadd.f32 0.0, %v855
        %v857 = vpop.f32.mrf.mxu0
        %v858 = vpop.f32.mrf.mxu0
        %v859 = vadd.f32 0.0, %v858
        %v860 = vpop.f32.mrf.mxu0
        %861 = vdwg.mxu0
        %863 = vxpose.xlu0.c.b16.start [1/8] %v816, 128
        %864 = vxpose.xlu0.c.b16.cont [2/8] 0, 128
        %865 = vxpose.xlu0.c.b16.cont [3/8] 0, 128
        %866 = vxpose.xlu0.c.b16.cont [4/8] 0, 128
        %867 = vxpose.xlu0.c.b16.cont [5/8] 0, 128
        %868 = vxpose.xlu0.c.b16.cont [6/8] 0, 128
        %869 = vxpose.xlu0.c.b16.cont [7/8] 0, 128
        %870 = vxpose.xlu0.c.b16.end [8/8] 0, 128
        %v871 = vpop.trf.xlu0
        %v872 = vpop.trf.xlu0
        %v873 = vpop.trf.xlu0
        %v874 = vpop.trf.xlu0
        %v875 = vpop.trf.xlu0
        %v876 = vpop.trf.xlu0
        %v877 = vpop.trf.xlu0
        %v878 = vpop.trf.xlu0
        %v880 = vsel %vm817, %v871, 0
        %882 = vmatprep.subr.bf16.mxu0 0
        %883 = vmatpush1.bf16.msra.mxu0 0
        %884 = vmatprep.subr.bf16.mxu0 0
        %885 = vmatpush1.bf16.msra.mxu0 0
        %886 = vmatprep.subr.bf16.mxu0 0
        %887 = vmatpush1.bf16.msra.mxu0 0
        %888 = vmatprep.subr.bf16.mxu0 0
        %889 = vmatpush1.bf16.msra.mxu0 0
        %890 = vmatprep.subr.bf16.mxu0 0
        %891 = vmatpush1.bf16.msra.mxu0 0
        %892 = vmatprep.subr.bf16.mxu0 0
        %893 = vmatpush1.bf16.msra.mxu0 0
        %894 = vmatprep.subr.bf16.mxu0 0
        %895 = vmatpush1.bf16.msra.mxu0 0
        %896 = vmatprep.subr.bf16.mxu0 0
        %897 = vmatpush1.bf16.msra.mxu0 %v811
        %898 = vmatprep.subr.bf16.mxu0 0
        %899 = vmatpush2.bf16.msra.mxu0 0
        %900 = vmatprep.subr.bf16.mxu0 0
        %901 = vmatpush2.bf16.msra.mxu0 0
        %902 = vmatprep.subr.bf16.mxu0 0
        %903 = vmatpush2.bf16.msra.mxu0 0
        %904 = vmatprep.subr.bf16.mxu0 0
        %905 = vmatpush2.bf16.msra.mxu0 0
        %906 = vmatprep.subr.bf16.mxu0 0
        %907 = vmatpush2.bf16.msra.mxu0 0
        %908 = vmatprep.subr.bf16.mxu0 0
        %909 = vmatpush2.bf16.msra.mxu0 0
        %910 = vmatprep.subr.bf16.mxu0 0
        %911 = vmatpush2.bf16.msra.mxu0 0
        %912 = vmatprep.subr.bf16.mxu0 0
        %913 = vmatpush2.bf16.msra.mxu0 0
        %914 = vmatprep.mubr.bf16.mxu0 0
        %915 = vmatmul.mubr.bf16.gmra.mxu0 %v880
        %v916 = vpop.f32.mrf.mxu0
        %v917 = vadd.f32 0.0, %v916
        %v918 = vpop.f32.mrf.mxu0
        %v919 = vpop.f32.mrf.mxu0
        %v920 = vadd.f32 0.0, %v919
        %v921 = vpop.f32.mrf.mxu0
        %922 = vdwg.mxu0
        %v923 = vld [vmem:[#allocation13] sm:$0xff]
        %v924 = vld [vmem:[#allocation13 + $0x8] sm:$0xff]
        %v925 = vld [vmem:[#allocation13 + $0x10] sm:$0xff]
        %v926 = vld [vmem:[#allocation13 + $0x18] sm:$0xff]
        %v927 = vld [vmem:[#allocation14] sm:$0xff]
        %v928 = vld [vmem:[#allocation14 + $0x8] sm:$0xff]
        %v929 = vld [vmem:[#allocation14 + $0x10] sm:$0xff]
        %v930 = vld [vmem:[#allocation14 + $0x18] sm:$0xff]
        %v931 = vld [vmem:[%s15] sm:$0x1]
        %v932 = vld [vmem:[%s17] sm:$0x1]
        %v934 = vlaneseq
        %v935 = vshrl.u32 %v934, 7
        %v936 = vsub.s32 0, %v935
        %v937 = vrot.slane %v932, %v936
        %v939 = vadd.f32 %v937, 0.0
        %v940 = vld [vmem:[%s4] sm:$0x1]
        %v942 = vlaneseq
        %v943 = vshrl.u32 %v942, 7
        %v944 = vsub.s32 0, %v943
        %v945 = vrot.slane %v940, %v944
        %v947 = vmul.f32 %v945, %v801
        %v948 = vmul.f32 %v945, %v806
        %v949 = vadd.f32 %v856, %v947
        %v950 = vadd.f32 %v859, %v948
        %s951 = scalar_lea.vmem %s4, 3
        %v952 = vld [vmem:[%s951] sm:$0x1]
        %v954 = vlaneseq
        %v955 = vshrl.u32 %v954, 7
        %v956 = vsub.s32 0, %v955
        %v957 = vrot.slane %v952, %v956
        %v959 = vmul.f32 %v957, %v801
        %v960 = vmul.f32 %v957, %v806
        %v961 = vadd.f32 %v917, %v959
        %v962 = vadd.f32 %v920, %v960
        %v963 = vld [vmem:[%s5] sm:$0xff]
        %v964 = vld [vmem:[%s5 + $0x8] sm:$0xff]
        %v965 = vld [vmem:[%s5 + $0x10] sm:$0xff]
        %v966 = vld [vmem:[%s5 + $0x18] sm:$0xff]
        %v967 = vld [vmem:[%s6] sm:$0x1]
        %v969 = vlaneseq
        %v970 = vshrl.u32 %v969, 7
        %v971 = vsub.s32 0, %v970
        %v972 = vrot.slane %v967, %v971
        %vm974 = vcmask 261120
        %v976 = vsel %vm974, %v949, 0
        %v979 = vsel %vm974, %v950, 0
        %981 = vmatprep.subr.mxu0 0.0
        %982 = vmatpush1.msra.mxu0 0.0
        %983 = vmatprep.subr.mxu0 0.0
        %984 = vmatpush1.msra.mxu0 0.0
        %985 = vmatprep.subr.mxu0 0.0
        %986 = vmatpush1.msra.mxu0 0.0
        %987 = vmatprep.subr.mxu0 0.0
        %988 = vmatpush1.msra.mxu0 0.0
        %989 = vmatprep.subr.mxu0 0.0
        %990 = vmatpush1.msra.mxu0 0.0
        %991 = vmatprep.subr.mxu0 0.0
        %992 = vmatpush1.msra.mxu0 0.0
        %993 = vmatprep.subr.mxu0 0.0
        %994 = vmatpush1.msra.mxu0 0.0
        %995 = vmatprep.subr.mxu0 0.0
        %996 = vmatpush1.msra.mxu0 0.0
        %997 = vmatprep.subr.mxu0 0.0
        %998 = vmatpush1.msra.mxu0 0.0
        %999 = vmatprep.subr.mxu0 0.0
        %1000 = vmatpush1.msra.mxu0 0.0
        %1001 = vmatprep.subr.mxu0 0.0
        %1002 = vmatpush1.msra.mxu0 0.0
        %1003 = vmatprep.subr.mxu0 0.0
        %1004 = vmatpush1.msra.mxu0 0.0
        %1005 = vmatprep.subr.mxu0 0.0
        %1006 = vmatpush1.msra.mxu0 %v966
        %1007 = vmatprep.subr.mxu0 0.0
        %1008 = vmatpush1.msra.mxu0 %v965
        %1009 = vmatprep.subr.mxu0 0.0
        %1010 = vmatpush1.msra.mxu0 %v964
        %1011 = vmatprep.subr.mxu0 0.0
        %1012 = vmatpush1.msra.mxu0 %v963
        %1013 = vmatprep.subr.mxu0 0.0
        %1014 = vmatpush2.msra.mxu0 0.0
        %1015 = vmatprep.subr.mxu0 0.0
        %1016 = vmatpush2.msra.mxu0 0.0
        %1017 = vmatprep.subr.mxu0 0.0
        %1018 = vmatpush2.msra.mxu0 0.0
        %1019 = vmatprep.subr.mxu0 0.0
        %1020 = vmatpush2.msra.mxu0 0.0
        %1021 = vmatprep.subr.mxu0 0.0
        %1022 = vmatpush2.msra.mxu0 0.0
        %1023 = vmatprep.subr.mxu0 0.0
        %1024 = vmatpush2.msra.mxu0 0.0
        %1025 = vmatprep.subr.mxu0 0.0
        %1026 = vmatpush2.msra.mxu0 0.0
        %1027 = vmatprep.subr.mxu0 0.0
        %1028 = vmatpush2.msra.mxu0 0.0
        %1029 = vmatprep.subr.mxu0 0.0
        %1030 = vmatpush2.msra.mxu0 0.0
        %1031 = vmatprep.subr.mxu0 0.0
        %1032 = vmatpush2.msra.mxu0 0.0
        %1033 = vmatprep.subr.mxu0 0.0
        %1034 = vmatpush2.msra.mxu0 0.0
        %1035 = vmatprep.subr.mxu0 0.0
        %1036 = vmatpush2.msra.mxu0 0.0
        %1037 = vmatprep.subr.mxu0 0.0
        %1038 = vmatpush2.msra.mxu0 0.0
        %1039 = vmatprep.subr.mxu0 0.0
        %1040 = vmatpush2.msra.mxu0 0.0
        %1041 = vmatprep.subr.mxu0 0.0
        %1042 = vmatpush2.msra.mxu0 0.0
        %1043 = vmatprep.subr.mxu0 0.0
        %1044 = vmatpush2.msra.mxu0 0.0
        %1045 = vmatprep.mubr.f32.mxu0 0.0
        %1046 = vmatmul.mubr.f32.gmra.mxu0 %v976
        %v1047 = vpop.f32.mrf.mxu0
        %v1048 = vadd.f32 %v972, %v1047
        %v1049 = vpop.f32.mrf.mxu0
        %1050 = vmatprep.mubr.f32.mxu0 0.0
        %1051 = vmatmul.mubr.f32.gmra.mxu0 %v979
        %v1052 = vpop.f32.mrf.mxu0
        %v1053 = vadd.f32 %v972, %v1052
        %v1054 = vpop.f32.mrf.mxu0
        %1055 = vdwg.mxu0
        %vm1056 = vcmp.ge.f32.partialorder %v1048, 0.0
        %vm1057 = vcmp.ge.f32.partialorder %v1053, 0.0
        %v1058 = vmul.f32 %v1048, 0.2
        %v1059 = vmul.f32 %v1053, 0.2
        %v1060 = vsel %vm1056, %v1048, %v1058
        %v1061 = vsel %vm1057, %v1053, %v1059
        %v1062 = vld [vmem:[%s7] sm:$0x1]
        %v1064 = vlaneseq
        %v1065 = vshrl.u32 %v1064, 7
        %v1066 = vsub.s32 0, %v1065
        %v1067 = vrot.slane %v1062, %v1066
        %v1069 = vmul.f32 %v1060, %v1067
        %v1070 = vmul.f32 %v1061, %v1067
        %v1071 = vld [vmem:[#allocation5] sm:$0x1]
        %v1073 = vlaneseq
        %v1074 = vshrl.u32 %v1073, 7
        %v1075 = vsub.s32 0, %v1074
        %v1076 = vrot.slane %v1071, %v1075
        %v1078 = vadd.f32 %v1069, %v1076
        %v1079 = vadd.f32 %v1070, %v1076
        %vm1080 = vcmp.ge.f32.partialorder %v1078, 0.0
        %vm1081 = vcmp.ge.f32.partialorder %v1079, 0.0
        %v1082 = vmin.f32 %v1078, 0.0
        %v1083 = vmin.f32 %v1079, 0.0
        %v1084 = vmul.f32 %v1082, 1.442695
        %v1085 = vpow.pop %v1084
        %v1086 = vmul.f32 %v1083, 1.442695
        %v1087 = vpow.pop %v1086
        %v1088 = vsub.f32 %v1085, 1.0
        %v1089 = vsub.f32 %v1087, 1.0
        %v1090 = vsel %vm1080, %v1078, %v1088
        %v1091 = vsel %vm1081, %v1079, %v1089
        %v1092 = vld [vmem:[#allocation7] sm:$0xff]
        %v1093 = vld [vmem:[#allocation7 + $0x8] sm:$0xff]
        %v1094 = vld [vmem:[#allocation8] sm:$0x1]
        %v1096 = vlaneseq
        %v1097 = vshrl.u32 %v1096, 7
        %v1098 = vsub.s32 0, %v1097
        %v1099 = vrot.slane %v1094, %v1098
        %v1102 = vsel %vm817, %v1090, 0
        %v1105 = vsel %vm817, %v1091, 0
        %1107 = vmatprep.subr.mxu0 0.0
        %1108 = vmatpush1.msra.mxu0 0.0
        %1109 = vmatprep.subr.mxu0 0.0
        %1110 = vmatpush1.msra.mxu0 0.0
        %1111 = vmatprep.subr.mxu0 0.0
        %1112 = vmatpush1.msra.mxu0 0.0
        %1113 = vmatprep.subr.mxu0 0.0
        %1114 = vmatpush1.msra.mxu0 0.0
        %1115 = vmatprep.subr.mxu0 0.0
        %1116 = vmatpush1.msra.mxu0 0.0
        %1117 = vmatprep.subr.mxu0 0.0
        %1118 = vmatpush1.msra.mxu0 0.0
        %1119 = vmatprep.subr.mxu0 0.0
        %1120 = vmatpush1.msra.mxu0 0.0
        %1121 = vmatprep.subr.mxu0 0.0
        %1122 = vmatpush1.msra.mxu0 0.0
        %1123 = vmatprep.subr.mxu0 0.0
        %1124 = vmatpush1.msra.mxu0 0.0
        %1125 = vmatprep.subr.mxu0 0.0
        %1126 = vmatpush1.msra.mxu0 0.0
        %1127 = vmatprep.subr.mxu0 0.0
        %1128 = vmatpush1.msra.mxu0 0.0
        %1129 = vmatprep.subr.mxu0 0.0
        %1130 = vmatpush1.msra.mxu0 0.0
        %1131 = vmatprep.subr.mxu0 0.0
        %1132 = vmatpush1.msra.mxu0 0.0
        %1133 = vmatprep.subr.mxu0 0.0
        %1134 = vmatpush1.msra.mxu0 0.0
        %1135 = vmatprep.subr.mxu0 0.0
        %1136 = vmatpush1.msra.mxu0 %v1093
        %1137 = vmatprep.subr.mxu0 0.0
        %1138 = vmatpush1.msra.mxu0 %v1092
        %1139 = vmatprep.subr.mxu0 0.0
        %1140 = vmatpush2.msra.mxu0 0.0
        %1141 = vmatprep.subr.mxu0 0.0
        %1142 = vmatpush2.msra.mxu0 0.0
        %1143 = vmatprep.subr.mxu0 0.0
        %1144 = vmatpush2.msra.mxu0 0.0
        %1145 = vmatprep.subr.mxu0 0.0
        %1146 = vmatpush2.msra.mxu0 0.0
        %1147 = vmatprep.subr.mxu0 0.0
        %1148 = vmatpush2.msra.mxu0 0.0
        %1149 = vmatprep.subr.mxu0 0.0
        %1150 = vmatpush2.msra.mxu0 0.0
        %1151 = vmatprep.subr.mxu0 0.0
        %1152 = vmatpush2.msra.mxu0 0.0
        %1153 = vmatprep.subr.mxu0 0.0
        %1154 = vmatpush2.msra.mxu0 0.0
        %1155 = vmatprep.subr.mxu0 0.0
        %1156 = vmatpush2.msra.mxu0 0.0
        %1157 = vmatprep.subr.mxu0 0.0
        %1158 = vmatpush2.msra.mxu0 0.0
        %1159 = vmatprep.subr.mxu0 0.0
        %1160 = vmatpush2.msra.mxu0 0.0
        %1161 = vmatprep.subr.mxu0 0.0
        %1162 = vmatpush2.msra.mxu0 0.0
        %1163 = vmatprep.subr.mxu0 0.0
        %1164 = vmatpush2.msra.mxu0 0.0
        %1165 = vmatprep.subr.mxu0 0.0
        %1166 = vmatpush2.msra.mxu0 0.0
        %1167 = vmatprep.subr.mxu0 0.0
        %1168 = vmatpush2.msra.mxu0 0.0
        %1169 = vmatprep.subr.mxu0 0.0
        %1170 = vmatpush2.msra.mxu0 0.0
        %1171 = vmatprep.mubr.f32.mxu0 0.0
        %1172 = vmatmul.mubr.f32.gmra.mxu0 %v1102
        %v1173 = vpop.f32.mrf.mxu0
        %v1174 = vadd.f32 %v1099, %v1173
        %v1175 = vpop.f32.mrf.mxu0
        %1176 = vmatprep.mubr.f32.mxu0 0.0
        %1177 = vmatmul.mubr.f32.gmra.mxu0 %v1105
        %v1178 = vpop.f32.mrf.mxu0
        %v1179 = vadd.f32 %v1099, %v1178
        %v1180 = vpop.f32.mrf.mxu0
        %1181 = vdwg.mxu0
        %vm1182 = vcmp.ge.f32.partialorder %v1174, 0.0
        %vm1183 = vcmp.ge.f32.partialorder %v1179, 0.0
        %v1184 = vmul.f32 %v1174, 0.2
        %v1185 = vmul.f32 %v1179, 0.2
        %v1186 = vsel %vm1182, %v1174, %v1184
        %v1187 = vsel %vm1183, %v1179, %v1185
        %v1188 = vld [vmem:[#allocation10] sm:$0x1]
        %v1190 = vlaneseq
        %v1191 = vshrl.u32 %v1190, 7
        %v1192 = vsub.s32 0, %v1191
        %v1193 = vrot.slane %v1188, %v1192
        %v1195 = vmul.f32 %v1186, %v1193
        %v1196 = vmul.f32 %v1187, %v1193
        %v1197 = vld [vmem:[#allocation11] sm:$0x1]
        %v1199 = vlaneseq
        %v1200 = vshrl.u32 %v1199, 7
        %v1201 = vsub.s32 0, %v1200
        %v1202 = vrot.slane %v1197, %v1201
        %v1204 = vadd.f32 %v1195, %v1202
        %v1205 = vadd.f32 %v1196, %v1202
        %vm1206 = vcmp.ge.f32.partialorder %v1204, 0.0
        %vm1207 = vcmp.ge.f32.partialorder %v1205, 0.0
        %v1208 = vmin.f32 %v1204, 0.0
        %v1209 = vmin.f32 %v1205, 0.0
        %v1210 = vmul.f32 %v1208, 1.442695
        %v1211 = vpow.pop %v1210
        %v1212 = vmul.f32 %v1209, 1.442695
        %v1213 = vpow.pop %v1212
        %v1214 = vsub.f32 %v1211, 1.0
        %v1215 = vsub.f32 %v1213, 1.0
        %v1216 = vsel %vm1206, %v1204, %v1214
        %v1217 = vsel %vm1207, %v1205, %v1215
        %s1218 = scalar_lea.vmem %s5, 96
        %v1219 = vld [vmem:[%s1218] sm:$0xff]
        %v1220 = vld [vmem:[%s1218 + $0x8] sm:$0xff]
        %v1221 = vld [vmem:[%s1218 + $0x10] sm:$0xff]
        %v1222 = vld [vmem:[%s1218 + $0x18] sm:$0xff]
        %s1223 = scalar_lea.vmem %s6, 3
        %v1224 = vld [vmem:[%s1223] sm:$0x1]
        %v1226 = vlaneseq
        %v1227 = vshrl.u32 %v1226, 7
        %v1228 = vsub.s32 0, %v1227
        %v1229 = vrot.slane %v1224, %v1228
        %v1232 = vsel %vm974, %v961, 0
        %v1235 = vsel %vm974, %v962, 0
        %1237 = vmatprep.subr.mxu0 0.0
        %1238 = vmatpush1.msra.mxu0 0.0
        %1239 = vmatprep.subr.mxu0 0.0
        %1240 = vmatpush1.msra.mxu0 0.0
        %1241 = vmatprep.subr.mxu0 0.0
        %1242 = vmatpush1.msra.mxu0 0.0
        %1243 = vmatprep.subr.mxu0 0.0
        %1244 = vmatpush1.msra.mxu0 0.0
        %1245 = vmatprep.subr.mxu0 0.0
        %1246 = vmatpush1.msra.mxu0 0.0
        %1247 = vmatprep.subr.mxu0 0.0
        %1248 = vmatpush1.msra.mxu0 0.0
        %1249 = vmatprep.subr.mxu0 0.0
        %1250 = vmatpush1.msra.mxu0 0.0
        %1251 = vmatprep.subr.mxu0 0.0
        %1252 = vmatpush1.msra.mxu0 0.0
        %1253 = vmatprep.subr.mxu0 0.0
        %1254 = vmatpush1.msra.mxu0 0.0
        %1255 = vmatprep.subr.mxu0 0.0
        %1256 = vmatpush1.msra.mxu0 0.0
        %1257 = vmatprep.subr.mxu0 0.0
        %1258 = vmatpush1.msra.mxu0 0.0
        %1259 = vmatprep.subr.mxu0 0.0
        %1260 = vmatpush1.msra.mxu0 0.0
        %1261 = vmatprep.subr.mxu0 0.0
        %1262 = vmatpush1.msra.mxu0 %v1222
        %1263 = vmatprep.subr.mxu0 0.0
        %1264 = vmatpush1.msra.mxu0 %v1221
        %1265 = vmatprep.subr.mxu0 0.0
        %1266 = vmatpush1.msra.mxu0 %v1220
        %1267 = vmatprep.subr.mxu0 0.0
        %1268 = vmatpush1.msra.mxu0 %v1219
        %1269 = vmatprep.subr.mxu0 0.0
        %1270 = vmatpush2.msra.mxu0 0.0
        %1271 = vmatprep.subr.mxu0 0.0
        %1272 = vmatpush2.msra.mxu0 0.0
        %1273 = vmatprep.subr.mxu0 0.0
        %1274 = vmatpush2.msra.mxu0 0.0
        %1275 = vmatprep.subr.mxu0 0.0
        %1276 = vmatpush2.msra.mxu0 0.0
        %1277 = vmatprep.subr.mxu0 0.0
        %1278 = vmatpush2.msra.mxu0 0.0
        %1279 = vmatprep.subr.mxu0 0.0
        %1280 = vmatpush2.msra.mxu0 0.0
        %1281 = vmatprep.subr.mxu0 0.0
        %1282 = vmatpush2.msra.mxu0 0.0
        %1283 = vmatprep.subr.mxu0 0.0
        %1284 = vmatpush2.msra.mxu0 0.0
        %1285 = vmatprep.subr.mxu0 0.0
        %1286 = vmatpush2.msra.mxu0 0.0
        %1287 = vmatprep.subr.mxu0 0.0
        %1288 = vmatpush2.msra.mxu0 0.0
        %1289 = vmatprep.subr.mxu0 0.0
        %1290 = vmatpush2.msra.mxu0 0.0
        %1291 = vmatprep.subr.mxu0 0.0
        %1292 = vmatpush2.msra.mxu0 0.0
        %1293 = vmatprep.subr.mxu0 0.0
        %1294 = vmatpush2.msra.mxu0 0.0
        %1295 = vmatprep.subr.mxu0 0.0
        %1296 = vmatpush2.msra.mxu0 0.0
        %1297 = vmatprep.subr.mxu0 0.0
        %1298 = vmatpush2.msra.mxu0 0.0
        %1299 = vmatprep.subr.mxu0 0.0
        %1300 = vmatpush2.msra.mxu0 0.0
        %1301 = vmatprep.mubr.f32.mxu0 0.0
        %1302 = vmatmul.mubr.f32.gmra.mxu0 %v1232
        %v1303 = vpop.f32.mrf.mxu0
        %v1304 = vadd.f32 %v1229, %v1303
        %v1305 = vpop.f32.mrf.mxu0
        %1306 = vmatprep.mubr.f32.mxu0 0.0
        %1307 = vmatmul.mubr.f32.gmra.mxu0 %v1235
        %v1308 = vpop.f32.mrf.mxu0
        %v1309 = vadd.f32 %v1229, %v1308
        %v1310 = vpop.f32.mrf.mxu0
        %1311 = vdwg.mxu0
        %vm1312 = vcmp.ge.f32.partialorder %v1304, 0.0
        %vm1313 = vcmp.ge.f32.partialorder %v1309, 0.0
        %v1314 = vmul.f32 %v1304, 0.2
        %v1315 = vmul.f32 %v1309, 0.2
        %v1316 = vsel %vm1312, %v1304, %v1314
        %v1317 = vsel %vm1313, %v1309, %v1315
        %s1318 = scalar_lea.vmem %s7, 3
        %v1319 = vld [vmem:[%s1318] sm:$0x1]
        %v1321 = vlaneseq
        %v1322 = vshrl.u32 %v1321, 7
        %v1323 = vsub.s32 0, %v1322
        %v1324 = vrot.slane %v1319, %v1323
        %v1326 = vmul.f32 %v1316, %v1324
        %v1327 = vmul.f32 %v1317, %v1324
        %s1328 = scalar_lea.vmem [#allocation5], 3
        %v1329 = vld [vmem:[%s1328] sm:$0x1]
        %v1331 = vlaneseq
        %v1332 = vshrl.u32 %v1331, 7
        %v1333 = vsub.s32 0, %v1332
        %v1334 = vrot.slane %v1329, %v1333
        %v1336 = vadd.f32 %v1326, %v1334
        %v1337 = vadd.f32 %v1327, %v1334
        %vm1338 = vcmp.ge.f32.partialorder %v1336, 0.0
        %vm1339 = vcmp.ge.f32.partialorder %v1337, 0.0
        %v1340 = vmin.f32 %v1336, 0.0
        %v1341 = vmin.f32 %v1337, 0.0
        %v1342 = vmul.f32 %v1340, 1.442695
        %v1343 = vpow.pop %v1342
        %v1344 = vmul.f32 %v1341, 1.442695
        %v1345 = vpow.pop %v1344
        %v1346 = vsub.f32 %v1343, 1.0
        %v1347 = vsub.f32 %v1345, 1.0
        %v1348 = vsel %vm1338, %v1336, %v1346
        %v1349 = vsel %vm1339, %v1337, %v1347
        %s1350 = scalar_lea.vmem [#allocation7], 48
        %v1351 = vld [vmem:[%s1350] sm:$0xff]
        %v1352 = vld [vmem:[%s1350 + $0x8] sm:$0xff]
        %s1353 = scalar_lea.vmem [#allocation8], 3
        %v1354 = vld [vmem:[%s1353] sm:$0x1]
        %v1356 = vlaneseq
        %v1357 = vshrl.u32 %v1356, 7
        %v1358 = vsub.s32 0, %v1357
        %v1359 = vrot.slane %v1354, %v1358
        %v1362 = vsel %vm817, %v1348, 0
        %v1365 = vsel %vm817, %v1349, 0
        %1367 = vmatprep.subr.mxu0 0.0
        %1368 = vmatpush1.msra.mxu0 0.0
        %1369 = vmatprep.subr.mxu0 0.0
        %1370 = vmatpush1.msra.mxu0 0.0
        %1371 = vmatprep.subr.mxu0 0.0
        %1372 = vmatpush1.msra.mxu0 0.0
        %1373 = vmatprep.subr.mxu0 0.0
        %1374 = vmatpush1.msra.mxu0 0.0
        %1375 = vmatprep.subr.mxu0 0.0
        %1376 = vmatpush1.msra.mxu0 0.0
        %1377 = vmatprep.subr.mxu0 0.0
        %1378 = vmatpush1.msra.mxu0 0.0
        %1379 = vmatprep.subr.mxu0 0.0
        %1380 = vmatpush1.msra.mxu0 0.0
        %1381 = vmatprep.subr.mxu0 0.0
        %1382 = vmatpush1.msra.mxu0 0.0
        %1383 = vmatprep.subr.mxu0 0.0
        %1384 = vmatpush1.msra.mxu0 0.0
        %1385 = vmatprep.subr.mxu0 0.0
        %1386 = vmatpush1.msra.mxu0 0.0
        %1387 = vmatprep.subr.mxu0 0.0
        %1388 = vmatpush1.msra.mxu0 0.0
        %1389 = vmatprep.subr.mxu0 0.0
        %1390 = vmatpush1.msra.mxu0 0.0
        %1391 = vmatprep.subr.mxu0 0.0
        %1392 = vmatpush1.msra.mxu0 0.0
        %1393 = vmatprep.subr.mxu0 0.0
        %1394 = vmatpush1.msra.mxu0 0.0
        %1395 = vmatprep.subr.mxu0 0.0
        %1396 = vmatpush1.msra.mxu0 %v1352
        %1397 = vmatprep.subr.mxu0 0.0
        %1398 = vmatpush1.msra.mxu0 %v1351
        %1399 = vmatprep.subr.mxu0 0.0
        %1400 = vmatpush2.msra.mxu0 0.0
        %1401 = vmatprep.subr.mxu0 0.0
        %1402 = vmatpush2.msra.mxu0 0.0
        %1403 = vmatprep.subr.mxu0 0.0
        %1404 = vmatpush2.msra.mxu0 0.0
        %1405 = vmatprep.subr.mxu0 0.0
        %1406 = vmatpush2.msra.mxu0 0.0
        %1407 = vmatprep.subr.mxu0 0.0
        %1408 = vmatpush2.msra.mxu0 0.0
        %1409 = vmatprep.subr.mxu0 0.0
        %1410 = vmatpush2.msra.mxu0 0.0
        %1411 = vmatprep.subr.mxu0 0.0
        %1412 = vmatpush2.msra.mxu0 0.0
        %1413 = vmatprep.subr.mxu0 0.0
        %1414 = vmatpush2.msra.mxu0 0.0
        %1415 = vmatprep.subr.mxu0 0.0
        %1416 = vmatpush2.msra.mxu0 0.0
        %1417 = vmatprep.subr.mxu0 0.0
        %1418 = vmatpush2.msra.mxu0 0.0
        %1419 = vmatprep.subr.mxu0 0.0
        %1420 = vmatpush2.msra.mxu0 0.0
        %1421 = vmatprep.subr.mxu0 0.0
        %1422 = vmatpush2.msra.mxu0 0.0
        %1423 = vmatprep.subr.mxu0 0.0
        %1424 = vmatpush2.msra.mxu0 0.0
        %1425 = vmatprep.subr.mxu0 0.0
        %1426 = vmatpush2.msra.mxu0 0.0
        %1427 = vmatprep.subr.mxu0 0.0
        %1428 = vmatpush2.msra.mxu0 0.0
        %1429 = vmatprep.subr.mxu0 0.0
        %1430 = vmatpush2.msra.mxu0 0.0
        %1431 = vmatprep.mubr.f32.mxu0 0.0
        %1432 = vmatmul.mubr.f32.gmra.mxu0 %v1362
        %v1433 = vpop.f32.mrf.mxu0
        %v1434 = vadd.f32 %v1359, %v1433
        %v1435 = vpop.f32.mrf.mxu0
        %1436 = vmatprep.mubr.f32.mxu0 0.0
        %1437 = vmatmul.mubr.f32.gmra.mxu0 %v1365
        %v1438 = vpop.f32.mrf.mxu0
        %v1439 = vadd.f32 %v1359, %v1438
        %v1440 = vpop.f32.mrf.mxu0
        %1441 = vdwg.mxu0
        %vm1442 = vcmp.ge.f32.partialorder %v1434, 0.0
        %vm1443 = vcmp.ge.f32.partialorder %v1439, 0.0
        %v1444 = vmul.f32 %v1434, 0.2
        %v1445 = vmul.f32 %v1439, 0.2
        %v1446 = vsel %vm1442, %v1434, %v1444
        %v1447 = vsel %vm1443, %v1439, %v1445
        %s1448 = scalar_lea.vmem [#allocation10], 3
        %v1449 = vld [vmem:[%s1448] sm:$0x1]
        %v1451 = vlaneseq
        %v1452 = vshrl.u32 %v1451, 7
        %v1453 = vsub.s32 0, %v1452
        %v1454 = vrot.slane %v1449, %v1453
        %v1456 = vmul.f32 %v1446, %v1454
        %v1457 = vmul.f32 %v1447, %v1454
        %s1458 = scalar_lea.vmem [#allocation11], 3
        %v1459 = vld [vmem:[%s1458] sm:$0x1]
        %v1461 = vlaneseq
        %v1462 = vshrl.u32 %v1461, 7
        %v1463 = vsub.s32 0, %v1462
        %v1464 = vrot.slane %v1459, %v1463
        %v1466 = vadd.f32 %v1456, %v1464
        %v1467 = vadd.f32 %v1457, %v1464
        %vm1468 = vcmp.ge.f32.partialorder %v1466, 0.0
        %vm1469 = vcmp.ge.f32.partialorder %v1467, 0.0
        %v1470 = vmin.f32 %v1466, 0.0
        %v1471 = vmin.f32 %v1467, 0.0
        %v1472 = vmul.f32 %v1470, 1.442695
        %v1473 = vpow.pop %v1472
        %v1474 = vmul.f32 %v1471, 1.442695
        %v1475 = vpow.pop %v1474
        %v1476 = vsub.f32 %v1473, 1.0
        %v1477 = vsub.f32 %v1475, 1.0
        %v1478 = vsel %vm1468, %v1466, %v1476
        %v1479 = vsel %vm1469, %v1467, %v1477
        %v1481 = vsel %vm974, %v1478, 0
        %v1484 = vsel %vm974, %v1479, 0
        %1486 = vmatprep.subr.mxu0 0.0
        %1487 = vmatpush1.msra.mxu0 0.0
        %1488 = vmatprep.subr.mxu0 0.0
        %1489 = vmatpush1.msra.mxu0 0.0
        %1490 = vmatprep.subr.mxu0 0.0
        %1491 = vmatpush1.msra.mxu0 0.0
        %1492 = vmatprep.subr.mxu0 0.0
        %1493 = vmatpush1.msra.mxu0 0.0
        %1494 = vmatprep.subr.mxu0 0.0
        %1495 = vmatpush1.msra.mxu0 0.0
        %1496 = vmatprep.subr.mxu0 0.0
        %1497 = vmatpush1.msra.mxu0 0.0
        %1498 = vmatprep.subr.mxu0 0.0
        %1499 = vmatpush1.msra.mxu0 0.0
        %1500 = vmatprep.subr.mxu0 0.0
        %1501 = vmatpush1.msra.mxu0 0.0
        %1502 = vmatprep.subr.mxu0 0.0
        %1503 = vmatpush1.msra.mxu0 0.0
        %1504 = vmatprep.subr.mxu0 0.0
        %1505 = vmatpush1.msra.mxu0 0.0
        %1506 = vmatprep.subr.mxu0 0.0
        %1507 = vmatpush1.msra.mxu0 0.0
        %1508 = vmatprep.subr.mxu0 0.0
        %1509 = vmatpush1.msra.mxu0 0.0
        %1510 = vmatprep.subr.mxu0 0.0
        %1511 = vmatpush1.msra.mxu0 %v930
        %1512 = vmatprep.subr.mxu0 0.0
        %1513 = vmatpush1.msra.mxu0 %v929
        %1514 = vmatprep.subr.mxu0 0.0
        %1515 = vmatpush1.msra.mxu0 %v928
        %1516 = vmatprep.subr.mxu0 0.0
        %1517 = vmatpush1.msra.mxu0 %v927
        %1518 = vmatprep.subr.mxu0 0.0
        %1519 = vmatpush2.msra.mxu0 0.0
        %1520 = vmatprep.subr.mxu0 0.0
        %1521 = vmatpush2.msra.mxu0 0.0
        %1522 = vmatprep.subr.mxu0 0.0
        %1523 = vmatpush2.msra.mxu0 0.0
        %1524 = vmatprep.subr.mxu0 0.0
        %1525 = vmatpush2.msra.mxu0 0.0
        %1526 = vmatprep.subr.mxu0 0.0
        %1527 = vmatpush2.msra.mxu0 0.0
        %1528 = vmatprep.subr.mxu0 0.0
        %1529 = vmatpush2.msra.mxu0 0.0
        %1530 = vmatprep.subr.mxu0 0.0
        %1531 = vmatpush2.msra.mxu0 0.0
        %1532 = vmatprep.subr.mxu0 0.0
        %1533 = vmatpush2.msra.mxu0 0.0
        %1534 = vmatprep.subr.mxu0 0.0
        %1535 = vmatpush2.msra.mxu0 0.0
        %1536 = vmatprep.subr.mxu0 0.0
        %1537 = vmatpush2.msra.mxu0 0.0
        %1538 = vmatprep.subr.mxu0 0.0
        %1539 = vmatpush2.msra.mxu0 0.0
        %1540 = vmatprep.subr.mxu0 0.0
        %1541 = vmatpush2.msra.mxu0 0.0
        %1542 = vmatprep.subr.mxu0 0.0
        %1543 = vmatpush2.msra.mxu0 0.0
        %1544 = vmatprep.subr.mxu0 0.0
        %1545 = vmatpush2.msra.mxu0 0.0
        %1546 = vmatprep.subr.mxu0 0.0
        %1547 = vmatpush2.msra.mxu0 0.0
        %1548 = vmatprep.subr.mxu0 0.0
        %1549 = vmatpush2.msra.mxu0 0.0
        %1550 = vmatprep.mubr.f32.mxu0 0.0
        %1551 = vmatmul.mubr.f32.gmra.mxu0 %v1481
        %v1552 = vpop.f32.mrf.mxu0
        %v1553 = vadd.f32 0.0, %v1552
        %v1554 = vpop.f32.mrf.mxu0
        %1555 = vmatprep.mubr.f32.mxu0 0.0
        %1556 = vmatmul.mubr.f32.gmra.mxu0 %v1484
        %v1557 = vpop.f32.mrf.mxu0
        %v1558 = vadd.f32 0.0, %v1557
        %v1559 = vpop.f32.mrf.mxu0
        %1560 = vdwg.mxu0
        %v1562 = vsel %vm974, %v1216, 0
        %v1565 = vsel %vm974, %v1217, 0
        %1567 = vmatprep.subr.mxu0 0.0
        %1568 = vmatpush1.msra.mxu0 0.0
        %1569 = vmatprep.subr.mxu0 0.0
        %1570 = vmatpush1.msra.mxu0 0.0
        %1571 = vmatprep.subr.mxu0 0.0
        %1572 = vmatpush1.msra.mxu0 0.0
        %1573 = vmatprep.subr.mxu0 0.0
        %1574 = vmatpush1.msra.mxu0 0.0
        %1575 = vmatprep.subr.mxu0 0.0
        %1576 = vmatpush1.msra.mxu0 0.0
        %1577 = vmatprep.subr.mxu0 0.0
        %1578 = vmatpush1.msra.mxu0 0.0
        %1579 = vmatprep.subr.mxu0 0.0
        %1580 = vmatpush1.msra.mxu0 0.0
        %1581 = vmatprep.subr.mxu0 0.0
        %1582 = vmatpush1.msra.mxu0 0.0
        %1583 = vmatprep.subr.mxu0 0.0
        %1584 = vmatpush1.msra.mxu0 0.0
        %1585 = vmatprep.subr.mxu0 0.0
        %1586 = vmatpush1.msra.mxu0 0.0
        %1587 = vmatprep.subr.mxu0 0.0
        %1588 = vmatpush1.msra.mxu0 0.0
        %1589 = vmatprep.subr.mxu0 0.0
        %1590 = vmatpush1.msra.mxu0 0.0
        %1591 = vmatprep.subr.mxu0 0.0
        %1592 = vmatpush1.msra.mxu0 %v926
        %1593 = vmatprep.subr.mxu0 0.0
        %1594 = vmatpush1.msra.mxu0 %v925
        %1595 = vmatprep.subr.mxu0 0.0
        %1596 = vmatpush1.msra.mxu0 %v924
        %1597 = vmatprep.subr.mxu0 0.0
        %1598 = vmatpush1.msra.mxu0 %v923
        %1599 = vmatprep.subr.mxu0 0.0
        %1600 = vmatpush2.msra.mxu0 0.0
        %1601 = vmatprep.subr.mxu0 0.0
        %1602 = vmatpush2.msra.mxu0 0.0
        %1603 = vmatprep.subr.mxu0 0.0
        %1604 = vmatpush2.msra.mxu0 0.0
        %1605 = vmatprep.subr.mxu0 0.0
        %1606 = vmatpush2.msra.mxu0 0.0
        %1607 = vmatprep.subr.mxu0 0.0
        %1608 = vmatpush2.msra.mxu0 0.0
        %1609 = vmatprep.subr.mxu0 0.0
        %1610 = vmatpush2.msra.mxu0 0.0
        %1611 = vmatprep.subr.mxu0 0.0
        %1612 = vmatpush2.msra.mxu0 0.0
        %1613 = vmatprep.subr.mxu0 0.0
        %1614 = vmatpush2.msra.mxu0 0.0
        %1615 = vmatprep.subr.mxu0 0.0
        %1616 = vmatpush2.msra.mxu0 0.0
        %1617 = vmatprep.subr.mxu0 0.0
        %1618 = vmatpush2.msra.mxu0 0.0
        %1619 = vmatprep.subr.mxu0 0.0
        %1620 = vmatpush2.msra.mxu0 0.0
        %1621 = vmatprep.subr.mxu0 0.0
        %1622 = vmatpush2.msra.mxu0 0.0
        %1623 = vmatprep.subr.mxu0 0.0
        %1624 = vmatpush2.msra.mxu0 0.0
        %1625 = vmatprep.subr.mxu0 0.0
        %1626 = vmatpush2.msra.mxu0 0.0
        %1627 = vmatprep.subr.mxu0 0.0
        %1628 = vmatpush2.msra.mxu0 0.0
        %1629 = vmatprep.subr.mxu0 0.0
        %1630 = vmatpush2.msra.mxu0 0.0
        %1631 = vmatprep.mubr.f32.mxu0 0.0
        %1632 = vmatmul.mubr.f32.gmra.mxu0 %v1562
        %v1633 = vpop.f32.mrf.mxu0
        %v1634 = vadd.f32 %v1553, %v1633
        %v1635 = vpop.f32.mrf.mxu0
        %1636 = vmatprep.mubr.f32.mxu0 0.0
        %1637 = vmatmul.mubr.f32.gmra.mxu0 %v1565
        %v1638 = vpop.f32.mrf.mxu0
        %v1639 = vadd.f32 %v1558, %v1638
        %v1640 = vpop.f32.mrf.mxu0
        %1641 = vdwg.mxu0
        %v1643 = vlaneseq
        %v1644 = vshrl.u32 %v1643, 7
        %v1645 = vsub.s32 0, %v1644
        %v1646 = vrot.slane %v931, %v1645
        %v1648 = vadd.f32 %v1634, %v1646
        %v1649 = vadd.f32 %v1639, %v1646
        %vm1650 = vcmp.ge.f32.partialorder %v1648, 0.0
        %vm1651 = vcmp.ge.f32.partialorder %v1649, 0.0
        %v1652 = vmul.f32 %v1648, 0.01
        %v1653 = vmul.f32 %v1649, 0.01
        %v1654 = vsel %vm1650, %v1648, %v1652
        %v1655 = vsel %vm1651, %v1649, %v1653
        %v1656 = vld [vmem:[%s16] sm:$0xff]
        %v1657 = vld [vmem:[%s16 + $0x8] sm:$0xff]
        %v1658 = vld [vmem:[%s16 + $0x10] sm:$0xff]
        %v1659 = vld [vmem:[%s16 + $0x18] sm:$0xff]
        %v1660 = vld [vmem:[%s16 + $0x20] sm:$0xff]
        %v1661 = vld [vmem:[%s16 + $0x28] sm:$0xff]
        %v1662 = vld [vmem:[%s16 + $0x30] sm:$0xff]
        %v1663 = vld [vmem:[%s16 + $0x38] sm:$0xff]
        %v1664 = vld [vmem:[%s16 + $0x40] sm:$0xff]
        %v1665 = vld [vmem:[%s16 + $0x48] sm:$0xff]
        %v1666 = vld [vmem:[%s16 + $0x50] sm:$0xff]
        %v1667 = vld [vmem:[%s16 + $0x58] sm:$0xff]
        %v1668 = vld [vmem:[%s16 + $0x60] sm:$0xff]
        %v1669 = vld [vmem:[%s16 + $0x68] sm:$0xff]
        %v1670 = vld [vmem:[%s16 + $0x70] sm:$0xff]
        %v1671 = vld [vmem:[%s16 + $0x78] sm:$0xff]
        %1672 = vmatprep.subr.mxu0 0.0
        %1673 = vmatpush1.msra.mxu0 %v1671
        %1674 = vmatprep.subr.mxu0 0.0
        %1675 = vmatpush1.msra.mxu0 %v1670
        %1676 = vmatprep.subr.mxu0 0.0
        %1677 = vmatpush1.msra.mxu0 %v1669
        %1678 = vmatprep.subr.mxu0 0.0
        %1679 = vmatpush1.msra.mxu0 %v1668
        %1680 = vmatprep.subr.mxu0 0.0
        %1681 = vmatpush1.msra.mxu0 %v1667
        %1682 = vmatprep.subr.mxu0 0.0
        %1683 = vmatpush1.msra.mxu0 %v1666
        %1684 = vmatprep.subr.mxu0 0.0
        %1685 = vmatpush1.msra.mxu0 %v1665
        %1686 = vmatprep.subr.mxu0 0.0
        %1687 = vmatpush1.msra.mxu0 %v1664
        %1688 = vmatprep.subr.mxu0 0.0
        %1689 = vmatpush1.msra.mxu0 %v1663
        %1690 = vmatprep.subr.mxu0 0.0
        %1691 = vmatpush1.msra.mxu0 %v1662
        %1692 = vmatprep.subr.mxu0 0.0
        %1693 = vmatpush1.msra.mxu0 %v1661
        %1694 = vmatprep.subr.mxu0 0.0
        %1695 = vmatpush1.msra.mxu0 %v1660
        %1696 = vmatprep.subr.mxu0 0.0
        %1697 = vmatpush1.msra.mxu0 %v1659
        %1698 = vmatprep.subr.mxu0 0.0
        %1699 = vmatpush1.msra.mxu0 %v1658
        %1700 = vmatprep.subr.mxu0 0.0
        %1701 = vmatpush1.msra.mxu0 %v1657
        %1702 = vmatprep.subr.mxu0 0.0
        %1703 = vmatpush1.msra.mxu0 %v1656
        %1704 = vmatprep.subr.mxu0 0.0
        %1705 = vmatpush2.msra.mxu0 0.0
        %1706 = vmatprep.subr.mxu0 0.0
        %1707 = vmatpush2.msra.mxu0 0.0
        %1708 = vmatprep.subr.mxu0 0.0
        %1709 = vmatpush2.msra.mxu0 0.0
        %1710 = vmatprep.subr.mxu0 0.0
        %1711 = vmatpush2.msra.mxu0 0.0
        %1712 = vmatprep.subr.mxu0 0.0
        %1713 = vmatpush2.msra.mxu0 0.0
        %1714 = vmatprep.subr.mxu0 0.0
        %1715 = vmatpush2.msra.mxu0 0.0
        %1716 = vmatprep.subr.mxu0 0.0
        %1717 = vmatpush2.msra.mxu0 0.0
        %1718 = vmatprep.subr.mxu0 0.0
        %1719 = vmatpush2.msra.mxu0 0.0
        %1720 = vmatprep.subr.mxu0 0.0
        %1721 = vmatpush2.msra.mxu0 0.0
        %1722 = vmatprep.subr.mxu0 0.0
        %1723 = vmatpush2.msra.mxu0 0.0
        %1724 = vmatprep.subr.mxu0 0.0
        %1725 = vmatpush2.msra.mxu0 0.0
        %1726 = vmatprep.subr.mxu0 0.0
        %1727 = vmatpush2.msra.mxu0 0.0
        %1728 = vmatprep.subr.mxu0 0.0
        %1729 = vmatpush2.msra.mxu0 0.0
        %1730 = vmatprep.subr.mxu0 0.0
        %1731 = vmatpush2.msra.mxu0 0.0
        %1732 = vmatprep.subr.mxu0 0.0
        %1733 = vmatpush2.msra.mxu0 0.0
        %1734 = vmatprep.subr.mxu0 0.0
        %1735 = vmatpush2.msra.mxu0 0.0
        %1736 = vmatprep.mubr.f32.mxu0 0.0
        %1737 = vmatmul.mubr.f32.gmra.mxu0 %v1654
        %v1738 = vpop.f32.mrf.mxu0
        %v1739 = vadd.f32 0.0, %v1738
        %v1740 = vpop.f32.mrf.mxu0
        %1741 = vmatprep.mubr.f32.mxu0 0.0
        %1742 = vmatmul.mubr.f32.gmra.mxu0 %v1655
        %v1743 = vpop.f32.mrf.mxu0
        %v1744 = vadd.f32 0.0, %v1743
        %v1745 = vpop.f32.mrf.mxu0
        %1746 = vdwg.mxu0
        %v1747 = vadd.f32 %v939, %v1739
        %v1748 = vadd.f32 %v939, %v1744
        %s1749 = scalar_lea.vmem %s4, 1
        %v1750 = vld [vmem:[%s1749] sm:$0x1]
        %v1752 = vlaneseq
        %v1753 = vshrl.u32 %v1752, 7
        %v1754 = vsub.s32 0, %v1753
        %v1755 = vrot.slane %v1750, %v1754
        %v1757 = vmul.f32 %v1755, %v801
        %v1758 = vmul.f32 %v1755, %v806
        %v1759 = vadd.f32 %v856, %v1757
        %v1760 = vadd.f32 %v859, %v1758
        %s1761 = scalar_lea.vmem %s4, 4
        %v1762 = vld [vmem:[%s1761] sm:$0x1]
        %v1764 = vlaneseq
        %v1765 = vshrl.u32 %v1764, 7
        %v1766 = vsub.s32 0, %v1765
        %v1767 = vrot.slane %v1762, %v1766
        %v1769 = vmul.f32 %v1767, %v801
        %v1770 = vmul.f32 %v1767, %v806
        %v1771 = vadd.f32 %v917, %v1769
        %v1772 = vadd.f32 %v920, %v1770
        %s1773 = scalar_lea.vmem %s5, 32
        %v1774 = vld [vmem:[%s1773] sm:$0xff]
        %v1775 = vld [vmem:[%s1773 + $0x8] sm:$0xff]
        %v1776 = vld [vmem:[%s1773 + $0x10] sm:$0xff]
        %v1777 = vld [vmem:[%s1773 + $0x18] sm:$0xff]
        %s1778 = scalar_lea.vmem %s6, 1
        %v1779 = vld [vmem:[%s1778] sm:$0x1]
        %v1781 = vlaneseq
        %v1782 = vshrl.u32 %v1781, 7
        %v1783 = vsub.s32 0, %v1782
        %v1784 = vrot.slane %v1779, %v1783
        %v1787 = vsel %vm974, %v1759, 0
        %v1790 = vsel %vm974, %v1760, 0
        %1792 = vmatprep.subr.mxu0 0.0
        %1793 = vmatpush1.msra.mxu0 0.0
        %1794 = vmatprep.subr.mxu0 0.0
        %1795 = vmatpush1.msra.mxu0 0.0
        %1796 = vmatprep.subr.mxu0 0.0
        %1797 = vmatpush1.msra.mxu0 0.0
        %1798 = vmatprep.subr.mxu0 0.0
        %1799 = vmatpush1.msra.mxu0 0.0
        %1800 = vmatprep.subr.mxu0 0.0
        %1801 = vmatpush1.msra.mxu0 0.0
        %1802 = vmatprep.subr.mxu0 0.0
        %1803 = vmatpush1.msra.mxu0 0.0
        %1804 = vmatprep.subr.mxu0 0.0
        %1805 = vmatpush1.msra.mxu0 0.0
        %1806 = vmatprep.subr.mxu0 0.0
        %1807 = vmatpush1.msra.mxu0 0.0
        %1808 = vmatprep.subr.mxu0 0.0
        %1809 = vmatpush1.msra.mxu0 0.0
        %1810 = vmatprep.subr.mxu0 0.0
        %1811 = vmatpush1.msra.mxu0 0.0
        %1812 = vmatprep.subr.mxu0 0.0
        %1813 = vmatpush1.msra.mxu0 0.0
        %1814 = vmatprep.subr.mxu0 0.0
        %1815 = vmatpush1.msra.mxu0 0.0
        %1816 = vmatprep.subr.mxu0 0.0
        %1817 = vmatpush1.msra.mxu0 %v1777
        %1818 = vmatprep.subr.mxu0 0.0
        %1819 = vmatpush1.msra.mxu0 %v1776
        %1820 = vmatprep.subr.mxu0 0.0
        %1821 = vmatpush1.msra.mxu0 %v1775
        %1822 = vmatprep.subr.mxu0 0.0
        %1823 = vmatpush1.msra.mxu0 %v1774
        %1824 = vmatprep.subr.mxu0 0.0
        %1825 = vmatpush2.msra.mxu0 0.0
        %1826 = vmatprep.subr.mxu0 0.0
        %1827 = vmatpush2.msra.mxu0 0.0
        %1828 = vmatprep.subr.mxu0 0.0
        %1829 = vmatpush2.msra.mxu0 0.0
        %1830 = vmatprep.subr.mxu0 0.0
        %1831 = vmatpush2.msra.mxu0 0.0
        %1832 = vmatprep.subr.mxu0 0.0
        %1833 = vmatpush2.msra.mxu0 0.0
        %1834 = vmatprep.subr.mxu0 0.0
        %1835 = vmatpush2.msra.mxu0 0.0
        %1836 = vmatprep.subr.mxu0 0.0
        %1837 = vmatpush2.msra.mxu0 0.0
        %1838 = vmatprep.subr.mxu0 0.0
        %1839 = vmatpush2.msra.mxu0 0.0
        %1840 = vmatprep.subr.mxu0 0.0
        %1841 = vmatpush2.msra.mxu0 0.0
        %1842 = vmatprep.subr.mxu0 0.0
        %1843 = vmatpush2.msra.mxu0 0.0
        %1844 = vmatprep.subr.mxu0 0.0
        %1845 = vmatpush2.msra.mxu0 0.0
        %1846 = vmatprep.subr.mxu0 0.0
        %1847 = vmatpush2.msra.mxu0 0.0
        %1848 = vmatprep.subr.mxu0 0.0
        %1849 = vmatpush2.msra.mxu0 0.0
        %1850 = vmatprep.subr.mxu0 0.0
        %1851 = vmatpush2.msra.mxu0 0.0
        %1852 = vmatprep.subr.mxu0 0.0
        %1853 = vmatpush2.msra.mxu0 0.0
        %1854 = vmatprep.subr.mxu0 0.0
        %1855 = vmatpush2.msra.mxu0 0.0
        %1856 = vmatprep.mubr.f32.mxu0 0.0
        %1857 = vmatmul.mubr.f32.gmra.mxu0 %v1787
        %v1858 = vpop.f32.mrf.mxu0
        %v1859 = vadd.f32 %v1784, %v1858
        %v1860 = vpop.f32.mrf.mxu0
        %1861 = vmatprep.mubr.f32.mxu0 0.0
        %1862 = vmatmul.mubr.f32.gmra.mxu0 %v1790
        %v1863 = vpop.f32.mrf.mxu0
        %v1864 = vadd.f32 %v1784, %v1863
        %v1865 = vpop.f32.mrf.mxu0
        %1866 = vdwg.mxu0
        %vm1867 = vcmp.ge.f32.partialorder %v1859, 0.0
        %vm1868 = vcmp.ge.f32.partialorder %v1864, 0.0
        %v1869 = vmul.f32 %v1859, 0.2
        %v1870 = vmul.f32 %v1864, 0.2
        %v1871 = vsel %vm1867, %v1859, %v1869
        %v1872 = vsel %vm1868, %v1864, %v1870
        %s1873 = scalar_lea.vmem %s7, 1
        %v1874 = vld [vmem:[%s1873] sm:$0x1]
        %v1876 = vlaneseq
        %v1877 = vshrl.u32 %v1876, 7
        %v1878 = vsub.s32 0, %v1877
        %v1879 = vrot.slane %v1874, %v1878
        %v1881 = vmul.f32 %v1871, %v1879
        %v1882 = vmul.f32 %v1872, %v1879
        %s1883 = scalar_lea.vmem [#allocation5], 1
        %v1884 = vld [vmem:[%s1883] sm:$0x1]
        %v1886 = vlaneseq
        %v1887 = vshrl.u32 %v1886, 7
        %v1888 = vsub.s32 0, %v1887
        %v1889 = vrot.slane %v1884, %v1888
        %v1891 = vadd.f32 %v1881, %v1889
        %v1892 = vadd.f32 %v1882, %v1889
        %vm1893 = vcmp.ge.f32.partialorder %v1891, 0.0
        %vm1894 = vcmp.ge.f32.partialorder %v1892, 0.0
        %v1895 = vmin.f32 %v1891, 0.0
        %v1896 = vmin.f32 %v1892, 0.0
        %v1897 = vmul.f32 %v1895, 1.442695
        %v1898 = vpow.pop %v1897
        %v1899 = vmul.f32 %v1896, 1.442695
        %v1900 = vpow.pop %v1899
        %v1901 = vsub.f32 %v1898, 1.0
        %v1902 = vsub.f32 %v1900, 1.0
        %v1903 = vsel %vm1893, %v1891, %v1901
        %v1904 = vsel %vm1894, %v1892, %v1902
        %s1905 = scalar_lea.vmem [#allocation7], 16
        %v1906 = vld [vmem:[%s1905] sm:$0xff]
        %v1907 = vld [vmem:[%s1905 + $0x8] sm:$0xff]
        %s1908 = scalar_lea.vmem [#allocation8], 1
        %v1909 = vld [vmem:[%s1908] sm:$0x1]
        %v1911 = vlaneseq
        %v1912 = vshrl.u32 %v1911, 7
        %v1913 = vsub.s32 0, %v1912
        %v1914 = vrot.slane %v1909, %v1913
        %v1917 = vsel %vm817, %v1903, 0
        %v1920 = vsel %vm817, %v1904, 0
        %1922 = vmatprep.subr.mxu0 0.0
        %1923 = vmatpush1.msra.mxu0 0.0
        %1924 = vmatprep.subr.mxu0 0.0
        %1925 = vmatpush1.msra.mxu0 0.0
        %1926 = vmatprep.subr.mxu0 0.0
        %1927 = vmatpush1.msra.mxu0 0.0
        %1928 = vmatprep.subr.mxu0 0.0
        %1929 = vmatpush1.msra.mxu0 0.0
        %1930 = vmatprep.subr.mxu0 0.0
        %1931 = vmatpush1.msra.mxu0 0.0
        %1932 = vmatprep.subr.mxu0 0.0
        %1933 = vmatpush1.msra.mxu0 0.0
        %1934 = vmatprep.subr.mxu0 0.0
        %1935 = vmatpush1.msra.mxu0 0.0
        %1936 = vmatprep.subr.mxu0 0.0
        %1937 = vmatpush1.msra.mxu0 0.0
        %1938 = vmatprep.subr.mxu0 0.0
        %1939 = vmatpush1.msra.mxu0 0.0
        %1940 = vmatprep.subr.mxu0 0.0
        %1941 = vmatpush1.msra.mxu0 0.0
        %1942 = vmatprep.subr.mxu0 0.0
        %1943 = vmatpush1.msra.mxu0 0.0
        %1944 = vmatprep.subr.mxu0 0.0
        %1945 = vmatpush1.msra.mxu0 0.0
        %1946 = vmatprep.subr.mxu0 0.0
        %1947 = vmatpush1.msra.mxu0 0.0
        %1948 = vmatprep.subr.mxu0 0.0
        %1949 = vmatpush1.msra.mxu0 0.0
        %1950 = vmatprep.subr.mxu0 0.0
        %1951 = vmatpush1.msra.mxu0 %v1907
        %1952 = vmatprep.subr.mxu0 0.0
        %1953 = vmatpush1.msra.mxu0 %v1906
        %1954 = vmatprep.subr.mxu0 0.0
        %1955 = vmatpush2.msra.mxu0 0.0
        %1956 = vmatprep.subr.mxu0 0.0
        %1957 = vmatpush2.msra.mxu0 0.0
        %1958 = vmatprep.subr.mxu0 0.0
        %1959 = vmatpush2.msra.mxu0 0.0
        %1960 = vmatprep.subr.mxu0 0.0
        %1961 = vmatpush2.msra.mxu0 0.0
        %1962 = vmatprep.subr.mxu0 0.0
        %1963 = vmatpush2.msra.mxu0 0.0
        %1964 = vmatprep.subr.mxu0 0.0
        %1965 = vmatpush2.msra.mxu0 0.0
        %1966 = vmatprep.subr.mxu0 0.0
        %1967 = vmatpush2.msra.mxu0 0.0
        %1968 = vmatprep.subr.mxu0 0.0
        %1969 = vmatpush2.msra.mxu0 0.0
        %1970 = vmatprep.subr.mxu0 0.0
        %1971 = vmatpush2.msra.mxu0 0.0
        %1972 = vmatprep.subr.mxu0 0.0
        %1973 = vmatpush2.msra.mxu0 0.0
        %1974 = vmatprep.subr.mxu0 0.0
        %1975 = vmatpush2.msra.mxu0 0.0
        %1976 = vmatprep.subr.mxu0 0.0
        %1977 = vmatpush2.msra.mxu0 0.0
        %1978 = vmatprep.subr.mxu0 0.0
        %1979 = vmatpush2.msra.mxu0 0.0
        %1980 = vmatprep.subr.mxu0 0.0
        %1981 = vmatpush2.msra.mxu0 0.0
        %1982 = vmatprep.subr.mxu0 0.0
        %1983 = vmatpush2.msra.mxu0 0.0
        %1984 = vmatprep.subr.mxu0 0.0
        %1985 = vmatpush2.msra.mxu0 0.0
        %1986 = vmatprep.mubr.f32.mxu0 0.0
        %1987 = vmatmul.mubr.f32.gmra.mxu0 %v1917
        %v1988 = vpop.f32.mrf.mxu0
        %v1989 = vadd.f32 %v1914, %v1988
        %v1990 = vpop.f32.mrf.mxu0
        %1991 = vmatprep.mubr.f32.mxu0 0.0
        %1992 = vmatmul.mubr.f32.gmra.mxu0 %v1920
        %v1993 = vpop.f32.mrf.mxu0
        %v1994 = vadd.f32 %v1914, %v1993
        %v1995 = vpop.f32.mrf.mxu0
        %1996 = vdwg.mxu0
        %vm1997 = vcmp.ge.f32.partialorder %v1989, 0.0
        %vm1998 = vcmp.ge.f32.partialorder %v1994, 0.0
        %v1999 = vmul.f32 %v1989, 0.2
        %v2000 = vmul.f32 %v1994, 0.2
        %v2001 = vsel %vm1997, %v1989, %v1999
        %v2002 = vsel %vm1998, %v1994, %v2000
        %s2003 = scalar_lea.vmem [#allocation10], 1
        %v2004 = vld [vmem:[%s2003] sm:$0x1]
        %v2006 = vlaneseq
        %v2007 = vshrl.u32 %v2006, 7
        %v2008 = vsub.s32 0, %v2007
        %v2009 = vrot.slane %v2004, %v2008
        %v2011 = vmul.f32 %v2001, %v2009
        %v2012 = vmul.f32 %v2002, %v2009
        %s2013 = scalar_lea.vmem [#allocation11], 1
        %v2014 = vld [vmem:[%s2013] sm:$0x1]
        %v2016 = vlaneseq
        %v2017 = vshrl.u32 %v2016, 7
        %v2018 = vsub.s32 0, %v2017
        %v2019 = vrot.slane %v2014, %v2018
        %v2021 = vadd.f32 %v2011, %v2019
        %v2022 = vadd.f32 %v2012, %v2019
        %vm2023 = vcmp.ge.f32.partialorder %v2021, 0.0
        %vm2024 = vcmp.ge.f32.partialorder %v2022, 0.0
        %v2025 = vmin.f32 %v2021, 0.0
        %v2026 = vmin.f32 %v2022, 0.0
        %v2027 = vmul.f32 %v2025, 1.442695
        %v2028 = vpow.pop %v2027
        %v2029 = vmul.f32 %v2026, 1.442695
        %v2030 = vpow.pop %v2029
        %v2031 = vsub.f32 %v2028, 1.0
        %v2032 = vsub.f32 %v2030, 1.0
        %v2033 = vsel %vm2023, %v2021, %v2031
        %v2034 = vsel %vm2024, %v2022, %v2032
        %s2035 = scalar_lea.vmem %s5, 128
        %v2036 = vld [vmem:[%s2035] sm:$0xff]
        %v2037 = vld [vmem:[%s2035 + $0x8] sm:$0xff]
        %v2038 = vld [vmem:[%s2035 + $0x10] sm:$0xff]
        %v2039 = vld [vmem:[%s2035 + $0x18] sm:$0xff]
        %s2040 = scalar_lea.vmem %s6, 4
        %v2041 = vld [vmem:[%s2040] sm:$0x1]
        %v2043 = vlaneseq
        %v2044 = vshrl.u32 %v2043, 7
        %v2045 = vsub.s32 0, %v2044
        %v2046 = vrot.slane %v2041, %v2045
        %v2049 = vsel %vm974, %v1771, 0
        %v2052 = vsel %vm974, %v1772, 0
        %2054 = vmatprep.subr.mxu0 0.0
        %2055 = vmatpush1.msra.mxu0 0.0
        %2056 = vmatprep.subr.mxu0 0.0
        %2057 = vmatpush1.msra.mxu0 0.0
        %2058 = vmatprep.subr.mxu0 0.0
        %2059 = vmatpush1.msra.mxu0 0.0
        %2060 = vmatprep.subr.mxu0 0.0
        %2061 = vmatpush1.msra.mxu0 0.0
        %2062 = vmatprep.subr.mxu0 0.0
        %2063 = vmatpush1.msra.mxu0 0.0
        %2064 = vmatprep.subr.mxu0 0.0
        %2065 = vmatpush1.msra.mxu0 0.0
        %2066 = vmatprep.subr.mxu0 0.0
        %2067 = vmatpush1.msra.mxu0 0.0
        %2068 = vmatprep.subr.mxu0 0.0
        %2069 = vmatpush1.msra.mxu0 0.0
        %2070 = vmatprep.subr.mxu0 0.0
        %2071 = vmatpush1.msra.mxu0 0.0
        %2072 = vmatprep.subr.mxu0 0.0
        %2073 = vmatpush1.msra.mxu0 0.0
        %2074 = vmatprep.subr.mxu0 0.0
        %2075 = vmatpush1.msra.mxu0 0.0
        %2076 = vmatprep.subr.mxu0 0.0
        %2077 = vmatpush1.msra.mxu0 0.0
        %2078 = vmatprep.subr.mxu0 0.0
        %2079 = vmatpush1.msra.mxu0 %v2039
        %2080 = vmatprep.subr.mxu0 0.0
        %2081 = vmatpush1.msra.mxu0 %v2038
        %2082 = vmatprep.subr.mxu0 0.0
        %2083 = vmatpush1.msra.mxu0 %v2037
        %2084 = vmatprep.subr.mxu0 0.0
        %2085 = vmatpush1.msra.mxu0 %v2036
        %2086 = vmatprep.subr.mxu0 0.0
        %2087 = vmatpush2.msra.mxu0 0.0
        %2088 = vmatprep.subr.mxu0 0.0
        %2089 = vmatpush2.msra.mxu0 0.0
        %2090 = vmatprep.subr.mxu0 0.0
        %2091 = vmatpush2.msra.mxu0 0.0
        %2092 = vmatprep.subr.mxu0 0.0
        %2093 = vmatpush2.msra.mxu0 0.0
        %2094 = vmatprep.subr.mxu0 0.0
        %2095 = vmatpush2.msra.mxu0 0.0
        %2096 = vmatprep.subr.mxu0 0.0
        %2097 = vmatpush2.msra.mxu0 0.0
        %2098 = vmatprep.subr.mxu0 0.0
        %2099 = vmatpush2.msra.mxu0 0.0
        %2100 = vmatprep.subr.mxu0 0.0
        %2101 = vmatpush2.msra.mxu0 0.0
        %2102 = vmatprep.subr.mxu0 0.0
        %2103 = vmatpush2.msra.mxu0 0.0
        %2104 = vmatprep.subr.mxu0 0.0
        %2105 = vmatpush2.msra.mxu0 0.0
        %2106 = vmatprep.subr.mxu0 0.0
        %2107 = vmatpush2.msra.mxu0 0.0
        %2108 = vmatprep.subr.mxu0 0.0
        %2109 = vmatpush2.msra.mxu0 0.0
        %2110 = vmatprep.subr.mxu0 0.0
        %2111 = vmatpush2.msra.mxu0 0.0
        %2112 = vmatprep.subr.mxu0 0.0
        %2113 = vmatpush2.msra.mxu0 0.0
        %2114 = vmatprep.subr.mxu0 0.0
        %2115 = vmatpush2.msra.mxu0 0.0
        %2116 = vmatprep.subr.mxu0 0.0
        %2117 = vmatpush2.msra.mxu0 0.0
        %2118 = vmatprep.mubr.f32.mxu0 0.0
        %2119 = vmatmul.mubr.f32.gmra.mxu0 %v2049
        %v2120 = vpop.f32.mrf.mxu0
        %v2121 = vadd.f32 %v2046, %v2120
        %v2122 = vpop.f32.mrf.mxu0
        %2123 = vmatprep.mubr.f32.mxu0 0.0
        %2124 = vmatmul.mubr.f32.gmra.mxu0 %v2052
        %v2125 = vpop.f32.mrf.mxu0
        %v2126 = vadd.f32 %v2046, %v2125
        %v2127 = vpop.f32.mrf.mxu0
        %2128 = vdwg.mxu0
        %vm2129 = vcmp.ge.f32.partialorder %v2121, 0.0
        %vm2130 = vcmp.ge.f32.partialorder %v2126, 0.0
        %v2131 = vmul.f32 %v2121, 0.2
        %v2132 = vmul.f32 %v2126, 0.2
        %v2133 = vsel %vm2129, %v2121, %v2131
        %v2134 = vsel %vm2130, %v2126, %v2132
        %s2135 = scalar_lea.vmem %s7, 4
        %v2136 = vld [vmem:[%s2135] sm:$0x1]
        %v2138 = vlaneseq
        %v2139 = vshrl.u32 %v2138, 7
        %v2140 = vsub.s32 0, %v2139
        %v2141 = vrot.slane %v2136, %v2140
        %v2143 = vmul.f32 %v2133, %v2141
        %v2144 = vmul.f32 %v2134, %v2141
        %s2145 = scalar_lea.vmem [#allocation5], 4
        %v2146 = vld [vmem:[%s2145] sm:$0x1]
        %v2148 = vlaneseq
        %v2149 = vshrl.u32 %v2148, 7
        %v2150 = vsub.s32 0, %v2149
        %v2151 = vrot.slane %v2146, %v2150
        %v2153 = vadd.f32 %v2143, %v2151
        %v2154 = vadd.f32 %v2144, %v2151
        %vm2155 = vcmp.ge.f32.partialorder %v2153, 0.0
        %vm2156 = vcmp.ge.f32.partialorder %v2154, 0.0
        %v2157 = vmin.f32 %v2153, 0.0
        %v2158 = vmin.f32 %v2154, 0.0
        %v2159 = vmul.f32 %v2157, 1.442695
        %v2160 = vpow.pop %v2159
        %v2161 = vmul.f32 %v2158, 1.442695
        %v2162 = vpow.pop %v2161
        %v2163 = vsub.f32 %v2160, 1.0
        %v2164 = vsub.f32 %v2162, 1.0
        %v2165 = vsel %vm2155, %v2153, %v2163
        %v2166 = vsel %vm2156, %v2154, %v2164
        %s2167 = scalar_lea.vmem [#allocation7], 64
        %v2168 = vld [vmem:[%s2167] sm:$0xff]
        %v2169 = vld [vmem:[%s2167 + $0x8] sm:$0xff]
        %s2170 = scalar_lea.vmem [#allocation8], 4
        %v2171 = vld [vmem:[%s2170] sm:$0x1]
        %v2173 = vlaneseq
        %v2174 = vshrl.u32 %v2173, 7
        %v2175 = vsub.s32 0, %v2174
        %v2176 = vrot.slane %v2171, %v2175
        %v2179 = vsel %vm817, %v2165, 0
        %v2182 = vsel %vm817, %v2166, 0
        %2184 = vmatprep.subr.mxu0 0.0
        %2185 = vmatpush1.msra.mxu0 0.0
        %2186 = vmatprep.subr.mxu0 0.0
        %2187 = vmatpush1.msra.mxu0 0.0
        %2188 = vmatprep.subr.mxu0 0.0
        %2189 = vmatpush1.msra.mxu0 0.0
        %2190 = vmatprep.subr.mxu0 0.0
        %2191 = vmatpush1.msra.mxu0 0.0
        %2192 = vmatprep.subr.mxu0 0.0
        %2193 = vmatpush1.msra.mxu0 0.0
        %2194 = vmatprep.subr.mxu0 0.0
        %2195 = vmatpush1.msra.mxu0 0.0
        %2196 = vmatprep.subr.mxu0 0.0
        %2197 = vmatpush1.msra.mxu0 0.0
        %2198 = vmatprep.subr.mxu0 0.0
        %2199 = vmatpush1.msra.mxu0 0.0
        %2200 = vmatprep.subr.mxu0 0.0
        %2201 = vmatpush1.msra.mxu0 0.0
        %2202 = vmatprep.subr.mxu0 0.0
        %2203 = vmatpush1.msra.mxu0 0.0
        %2204 = vmatprep.subr.mxu0 0.0
        %2205 = vmatpush1.msra.mxu0 0.0
        %2206 = vmatprep.subr.mxu0 0.0
        %2207 = vmatpush1.msra.mxu0 0.0
        %2208 = vmatprep.subr.mxu0 0.0
        %2209 = vmatpush1.msra.mxu0 0.0
        %2210 = vmatprep.subr.mxu0 0.0
        %2211 = vmatpush1.msra.mxu0 0.0
        %2212 = vmatprep.subr.mxu0 0.0
        %2213 = vmatpush1.msra.mxu0 %v2169
        %2214 = vmatprep.subr.mxu0 0.0
        %2215 = vmatpush1.msra.mxu0 %v2168
        %2216 = vmatprep.subr.mxu0 0.0
        %2217 = vmatpush2.msra.mxu0 0.0
        %2218 = vmatprep.subr.mxu0 0.0
        %2219 = vmatpush2.msra.mxu0 0.0
        %2220 = vmatprep.subr.mxu0 0.0
        %2221 = vmatpush2.msra.mxu0 0.0
        %2222 = vmatprep.subr.mxu0 0.0
        %2223 = vmatpush2.msra.mxu0 0.0
        %2224 = vmatprep.subr.mxu0 0.0
        %2225 = vmatpush2.msra.mxu0 0.0
        %2226 = vmatprep.subr.mxu0 0.0
        %2227 = vmatpush2.msra.mxu0 0.0
        %2228 = vmatprep.subr.mxu0 0.0
        %2229 = vmatpush2.msra.mxu0 0.0
        %2230 = vmatprep.subr.mxu0 0.0
        %2231 = vmatpush2.msra.mxu0 0.0
        %2232 = vmatprep.subr.mxu0 0.0
        %2233 = vmatpush2.msra.mxu0 0.0
        %2234 = vmatprep.subr.mxu0 0.0
        %2235 = vmatpush2.msra.mxu0 0.0
        %2236 = vmatprep.subr.mxu0 0.0
        %2237 = vmatpush2.msra.mxu0 0.0
        %2238 = vmatprep.subr.mxu0 0.0
        %2239 = vmatpush2.msra.mxu0 0.0
        %2240 = vmatprep.subr.mxu0 0.0
        %2241 = vmatpush2.msra.mxu0 0.0
        %2242 = vmatprep.subr.mxu0 0.0
        %2243 = vmatpush2.msra.mxu0 0.0
        %2244 = vmatprep.subr.mxu0 0.0
        %2245 = vmatpush2.msra.mxu0 0.0
        %2246 = vmatprep.subr.mxu0 0.0
        %2247 = vmatpush2.msra.mxu0 0.0
        %2248 = vmatprep.mubr.f32.mxu0 0.0
        %2249 = vmatmul.mubr.f32.gmra.mxu0 %v2179
        %v2250 = vpop.f32.mrf.mxu0
        %v2251 = vadd.f32 %v2176, %v2250
        %v2252 = vpop.f32.mrf.mxu0
        %2253 = vmatprep.mubr.f32.mxu0 0.0
        %2254 = vmatmul.mubr.f32.gmra.mxu0 %v2182
        %v2255 = vpop.f32.mrf.mxu0
        %v2256 = vadd.f32 %v2176, %v2255
        %v2257 = vpop.f32.mrf.mxu0
        %2258 = vdwg.mxu0
        %vm2259 = vcmp.ge.f32.partialorder %v2251, 0.0
        %vm2260 = vcmp.ge.f32.partialorder %v2256, 0.0
        %v2261 = vmul.f32 %v2251, 0.2
        %v2262 = vmul.f32 %v2256, 0.2
        %v2263 = vsel %vm2259, %v2251, %v2261
        %v2264 = vsel %vm2260, %v2256, %v2262
        %s2265 = scalar_lea.vmem [#allocation10], 4
        %v2266 = vld [vmem:[%s2265] sm:$0x1]
        %v2268 = vlaneseq
        %v2269 = vshrl.u32 %v2268, 7
        %v2270 = vsub.s32 0, %v2269
        %v2271 = vrot.slane %v2266, %v2270
        %v2273 = vmul.f32 %v2263, %v2271
        %v2274 = vmul.f32 %v2264, %v2271
        %s2275 = scalar_lea.vmem [#allocation11], 4
        %v2276 = vld [vmem:[%s2275] sm:$0x1]
        %v2278 = vlaneseq
        %v2279 = vshrl.u32 %v2278, 7
        %v2280 = vsub.s32 0, %v2279
        %v2281 = vrot.slane %v2276, %v2280
        %v2283 = vadd.f32 %v2273, %v2281
        %v2284 = vadd.f32 %v2274, %v2281
        %vm2285 = vcmp.ge.f32.partialorder %v2283, 0.0
        %vm2286 = vcmp.ge.f32.partialorder %v2284, 0.0
        %v2287 = vmin.f32 %v2283, 0.0
        %v2288 = vmin.f32 %v2284, 0.0
        %v2289 = vmul.f32 %v2287, 1.442695
        %v2290 = vpow.pop %v2289
        %v2291 = vmul.f32 %v2288, 1.442695
        %v2292 = vpow.pop %v2291
        %v2293 = vsub.f32 %v2290, 1.0
        %v2294 = vsub.f32 %v2292, 1.0
        %v2295 = vsel %vm2285, %v2283, %v2293
        %v2296 = vsel %vm2286, %v2284, %v2294
        %v2298 = vsel %vm974, %v2295, 0
        %v2301 = vsel %vm974, %v2296, 0
        %2303 = vmatprep.subr.mxu0 0.0
        %2304 = vmatpush1.msra.mxu0 0.0
        %2305 = vmatprep.subr.mxu0 0.0
        %2306 = vmatpush1.msra.mxu0 0.0
        %2307 = vmatprep.subr.mxu0 0.0
        %2308 = vmatpush1.msra.mxu0 0.0
        %2309 = vmatprep.subr.mxu0 0.0
        %2310 = vmatpush1.msra.mxu0 0.0
        %2311 = vmatprep.subr.mxu0 0.0
        %2312 = vmatpush1.msra.mxu0 0.0
        %2313 = vmatprep.subr.mxu0 0.0
        %2314 = vmatpush1.msra.mxu0 0.0
        %2315 = vmatprep.subr.mxu0 0.0
        %2316 = vmatpush1.msra.mxu0 0.0
        %2317 = vmatprep.subr.mxu0 0.0
        %2318 = vmatpush1.msra.mxu0 0.0
        %2319 = vmatprep.subr.mxu0 0.0
        %2320 = vmatpush1.msra.mxu0 0.0
        %2321 = vmatprep.subr.mxu0 0.0
        %2322 = vmatpush1.msra.mxu0 0.0
        %2323 = vmatprep.subr.mxu0 0.0
        %2324 = vmatpush1.msra.mxu0 0.0
        %2325 = vmatprep.subr.mxu0 0.0
        %2326 = vmatpush1.msra.mxu0 0.0
        %2327 = vmatprep.subr.mxu0 0.0
        %2328 = vmatpush1.msra.mxu0 %v930
        %2329 = vmatprep.subr.mxu0 0.0
        %2330 = vmatpush1.msra.mxu0 %v929
        %2331 = vmatprep.subr.mxu0 0.0
        %2332 = vmatpush1.msra.mxu0 %v928
        %2333 = vmatprep.subr.mxu0 0.0
        %2334 = vmatpush1.msra.mxu0 %v927
        %2335 = vmatprep.subr.mxu0 0.0
        %2336 = vmatpush2.msra.mxu0 0.0
        %2337 = vmatprep.subr.mxu0 0.0
        %2338 = vmatpush2.msra.mxu0 0.0
        %2339 = vmatprep.subr.mxu0 0.0
        %2340 = vmatpush2.msra.mxu0 0.0
        %2341 = vmatprep.subr.mxu0 0.0
        %2342 = vmatpush2.msra.mxu0 0.0
        %2343 = vmatprep.subr.mxu0 0.0
        %2344 = vmatpush2.msra.mxu0 0.0
        %2345 = vmatprep.subr.mxu0 0.0
        %2346 = vmatpush2.msra.mxu0 0.0
        %2347 = vmatprep.subr.mxu0 0.0
        %2348 = vmatpush2.msra.mxu0 0.0
        %2349 = vmatprep.subr.mxu0 0.0
        %2350 = vmatpush2.msra.mxu0 0.0
        %2351 = vmatprep.subr.mxu0 0.0
        %2352 = vmatpush2.msra.mxu0 0.0
        %2353 = vmatprep.subr.mxu0 0.0
        %2354 = vmatpush2.msra.mxu0 0.0
        %2355 = vmatprep.subr.mxu0 0.0
        %2356 = vmatpush2.msra.mxu0 0.0
        %2357 = vmatprep.subr.mxu0 0.0
        %2358 = vmatpush2.msra.mxu0 0.0
        %2359 = vmatprep.subr.mxu0 0.0
        %2360 = vmatpush2.msra.mxu0 0.0
        %2361 = vmatprep.subr.mxu0 0.0
        %2362 = vmatpush2.msra.mxu0 0.0
        %2363 = vmatprep.subr.mxu0 0.0
        %2364 = vmatpush2.msra.mxu0 0.0
        %2365 = vmatprep.subr.mxu0 0.0
        %2366 = vmatpush2.msra.mxu0 0.0
        %2367 = vmatprep.mubr.f32.mxu0 0.0
        %2368 = vmatmul.mubr.f32.gmra.mxu0 %v2298
        %v2369 = vpop.f32.mrf.mxu0
        %v2370 = vadd.f32 0.0, %v2369
        %v2371 = vpop.f32.mrf.mxu0
        %2372 = vmatprep.mubr.f32.mxu0 0.0
        %2373 = vmatmul.mubr.f32.gmra.mxu0 %v2301
        %v2374 = vpop.f32.mrf.mxu0
        %v2375 = vadd.f32 0.0, %v2374
        %v2376 = vpop.f32.mrf.mxu0
        %2377 = vdwg.mxu0
        %v2379 = vsel %vm974, %v2033, 0
        %v2382 = vsel %vm974, %v2034, 0
        %2384 = vmatprep.subr.mxu0 0.0
        %2385 = vmatpush1.msra.mxu0 0.0
        %2386 = vmatprep.subr.mxu0 0.0
        %2387 = vmatpush1.msra.mxu0 0.0
        %2388 = vmatprep.subr.mxu0 0.0
        %2389 = vmatpush1.msra.mxu0 0.0
        %2390 = vmatprep.subr.mxu0 0.0
        %2391 = vmatpush1.msra.mxu0 0.0
        %2392 = vmatprep.subr.mxu0 0.0
        %2393 = vmatpush1.msra.mxu0 0.0
        %2394 = vmatprep.subr.mxu0 0.0
        %2395 = vmatpush1.msra.mxu0 0.0
        %2396 = vmatprep.subr.mxu0 0.0
        %2397 = vmatpush1.msra.mxu0 0.0
        %2398 = vmatprep.subr.mxu0 0.0
        %2399 = vmatpush1.msra.mxu0 0.0
        %2400 = vmatprep.subr.mxu0 0.0
        %2401 = vmatpush1.msra.mxu0 0.0
        %2402 = vmatprep.subr.mxu0 0.0
        %2403 = vmatpush1.msra.mxu0 0.0
        %2404 = vmatprep.subr.mxu0 0.0
        %2405 = vmatpush1.msra.mxu0 0.0
        %2406 = vmatprep.subr.mxu0 0.0
        %2407 = vmatpush1.msra.mxu0 0.0
        %2408 = vmatprep.subr.mxu0 0.0
        %2409 = vmatpush1.msra.mxu0 %v926
        %2410 = vmatprep.subr.mxu0 0.0
        %2411 = vmatpush1.msra.mxu0 %v925
        %2412 = vmatprep.subr.mxu0 0.0
        %2413 = vmatpush1.msra.mxu0 %v924
        %2414 = vmatprep.subr.mxu0 0.0
        %2415 = vmatpush1.msra.mxu0 %v923
        %2416 = vmatprep.subr.mxu0 0.0
        %2417 = vmatpush2.msra.mxu0 0.0
        %2418 = vmatprep.subr.mxu0 0.0
        %2419 = vmatpush2.msra.mxu0 0.0
        %2420 = vmatprep.subr.mxu0 0.0
        %2421 = vmatpush2.msra.mxu0 0.0
        %2422 = vmatprep.subr.mxu0 0.0
        %2423 = vmatpush2.msra.mxu0 0.0
        %2424 = vmatprep.subr.mxu0 0.0
        %2425 = vmatpush2.msra.mxu0 0.0
        %2426 = vmatprep.subr.mxu0 0.0
        %2427 = vmatpush2.msra.mxu0 0.0
        %2428 = vmatprep.subr.mxu0 0.0
        %2429 = vmatpush2.msra.mxu0 0.0
        %2430 = vmatprep.subr.mxu0 0.0
        %2431 = vmatpush2.msra.mxu0 0.0
        %2432 = vmatprep.subr.mxu0 0.0
        %2433 = vmatpush2.msra.mxu0 0.0
        %2434 = vmatprep.subr.mxu0 0.0
        %2435 = vmatpush2.msra.mxu0 0.0
        %2436 = vmatprep.subr.mxu0 0.0
        %2437 = vmatpush2.msra.mxu0 0.0
        %2438 = vmatprep.subr.mxu0 0.0
        %2439 = vmatpush2.msra.mxu0 0.0
        %2440 = vmatprep.subr.mxu0 0.0
        %2441 = vmatpush2.msra.mxu0 0.0
        %2442 = vmatprep.subr.mxu0 0.0
        %2443 = vmatpush2.msra.mxu0 0.0
        %2444 = vmatprep.subr.mxu0 0.0
        %2445 = vmatpush2.msra.mxu0 0.0
        %2446 = vmatprep.subr.mxu0 0.0
        %2447 = vmatpush2.msra.mxu0 0.0
        %2448 = vmatprep.mubr.f32.mxu0 0.0
        %2449 = vmatmul.mubr.f32.gmra.mxu0 %v2379
        %v2450 = vpop.f32.mrf.mxu0
        %v2451 = vadd.f32 %v2370, %v2450
        %v2452 = vpop.f32.mrf.mxu0
        %2453 = vmatprep.mubr.f32.mxu0 0.0
        %2454 = vmatmul.mubr.f32.gmra.mxu0 %v2382
        %v2455 = vpop.f32.mrf.mxu0
        %v2456 = vadd.f32 %v2375, %v2455
        %v2457 = vpop.f32.mrf.mxu0
        %2458 = vdwg.mxu0
        %v2459 = vadd.f32 %v2451, %v1646
        %v2460 = vadd.f32 %v2456, %v1646
        %vm2461 = vcmp.ge.f32.partialorder %v2459, 0.0
        %vm2462 = vcmp.ge.f32.partialorder %v2460, 0.0
        %v2463 = vmul.f32 %v2459, 0.01
        %v2464 = vmul.f32 %v2460, 0.01
        %v2465 = vsel %vm2461, %v2459, %v2463
        %v2466 = vsel %vm2462, %v2460, %v2464
        %s2467 = scalar_lea.vmem %s16, 128
        %v2468 = vld [vmem:[%s2467] sm:$0xff]
        %v2469 = vld [vmem:[%s2467 + $0x8] sm:$0xff]
        %v2470 = vld [vmem:[%s2467 + $0x10] sm:$0xff]
        %v2471 = vld [vmem:[%s2467 + $0x18] sm:$0xff]
        %v2472 = vld [vmem:[%s2467 + $0x20] sm:$0xff]
        %v2473 = vld [vmem:[%s2467 + $0x28] sm:$0xff]
        %v2474 = vld [vmem:[%s2467 + $0x30] sm:$0xff]
        %v2475 = vld [vmem:[%s2467 + $0x38] sm:$0xff]
        %v2476 = vld [vmem:[%s2467 + $0x40] sm:$0xff]
        %v2477 = vld [vmem:[%s2467 + $0x48] sm:$0xff]
        %v2478 = vld [vmem:[%s2467 + $0x50] sm:$0xff]
        %v2479 = vld [vmem:[%s2467 + $0x58] sm:$0xff]
        %v2480 = vld [vmem:[%s2467 + $0x60] sm:$0xff]
        %v2481 = vld [vmem:[%s2467 + $0x68] sm:$0xff]
        %v2482 = vld [vmem:[%s2467 + $0x70] sm:$0xff]
        %v2483 = vld [vmem:[%s2467 + $0x78] sm:$0xff]
        %2484 = vmatprep.subr.mxu0 0.0
        %2485 = vmatpush1.msra.mxu0 %v2483
        %2486 = vmatprep.subr.mxu0 0.0
        %2487 = vmatpush1.msra.mxu0 %v2482
        %2488 = vmatprep.subr.mxu0 0.0
        %2489 = vmatpush1.msra.mxu0 %v2481
        %2490 = vmatprep.subr.mxu0 0.0
        %2491 = vmatpush1.msra.mxu0 %v2480
        %2492 = vmatprep.subr.mxu0 0.0
        %2493 = vmatpush1.msra.mxu0 %v2479
        %2494 = vmatprep.subr.mxu0 0.0
        %2495 = vmatpush1.msra.mxu0 %v2478
        %2496 = vmatprep.subr.mxu0 0.0
        %2497 = vmatpush1.msra.mxu0 %v2477
        %2498 = vmatprep.subr.mxu0 0.0
        %2499 = vmatpush1.msra.mxu0 %v2476
        %2500 = vmatprep.subr.mxu0 0.0
        %2501 = vmatpush1.msra.mxu0 %v2475
        %2502 = vmatprep.subr.mxu0 0.0
        %2503 = vmatpush1.msra.mxu0 %v2474
        %2504 = vmatprep.subr.mxu0 0.0
        %2505 = vmatpush1.msra.mxu0 %v2473
        %2506 = vmatprep.subr.mxu0 0.0
        %2507 = vmatpush1.msra.mxu0 %v2472
        %2508 = vmatprep.subr.mxu0 0.0
        %2509 = vmatpush1.msra.mxu0 %v2471
        %2510 = vmatprep.subr.mxu0 0.0
        %2511 = vmatpush1.msra.mxu0 %v2470
        %2512 = vmatprep.subr.mxu0 0.0
        %2513 = vmatpush1.msra.mxu0 %v2469
        %2514 = vmatprep.subr.mxu0 0.0
        %2515 = vmatpush1.msra.mxu0 %v2468
        %2516 = vmatprep.subr.mxu0 0.0
        %2517 = vmatpush2.msra.mxu0 0.0
        %2518 = vmatprep.subr.mxu0 0.0
        %2519 = vmatpush2.msra.mxu0 0.0
        %2520 = vmatprep.subr.mxu0 0.0
        %2521 = vmatpush2.msra.mxu0 0.0
        %2522 = vmatprep.subr.mxu0 0.0
        %2523 = vmatpush2.msra.mxu0 0.0
        %2524 = vmatprep.subr.mxu0 0.0
        %2525 = vmatpush2.msra.mxu0 0.0
        %2526 = vmatprep.subr.mxu0 0.0
        %2527 = vmatpush2.msra.mxu0 0.0
        %2528 = vmatprep.subr.mxu0 0.0
        %2529 = vmatpush2.msra.mxu0 0.0
        %2530 = vmatprep.subr.mxu0 0.0
        %2531 = vmatpush2.msra.mxu0 0.0
        %2532 = vmatprep.subr.mxu0 0.0
        %2533 = vmatpush2.msra.mxu0 0.0
        %2534 = vmatprep.subr.mxu0 0.0
        %2535 = vmatpush2.msra.mxu0 0.0
        %2536 = vmatprep.subr.mxu0 0.0
        %2537 = vmatpush2.msra.mxu0 0.0
        %2538 = vmatprep.subr.mxu0 0.0
        %2539 = vmatpush2.msra.mxu0 0.0
        %2540 = vmatprep.subr.mxu0 0.0
        %2541 = vmatpush2.msra.mxu0 0.0
        %2542 = vmatprep.subr.mxu0 0.0
        %2543 = vmatpush2.msra.mxu0 0.0
        %2544 = vmatprep.subr.mxu0 0.0
        %2545 = vmatpush2.msra.mxu0 0.0
        %2546 = vmatprep.subr.mxu0 0.0
        %2547 = vmatpush2.msra.mxu0 0.0
        %2548 = vmatprep.mubr.f32.mxu0 0.0
        %2549 = vmatmul.mubr.f32.gmra.mxu0 %v2465
        %v2550 = vpop.f32.mrf.mxu0
        %v2551 = vadd.f32 0.0, %v2550
        %v2552 = vpop.f32.mrf.mxu0
        %2553 = vmatprep.mubr.f32.mxu0 0.0
        %2554 = vmatmul.mubr.f32.gmra.mxu0 %v2466
        %v2555 = vpop.f32.mrf.mxu0
        %v2556 = vadd.f32 0.0, %v2555
        %v2557 = vpop.f32.mrf.mxu0
        %2558 = vdwg.mxu0
        %v2559 = vadd.f32 %v1747, %v2551
        %v2560 = vadd.f32 %v1748, %v2556
        %s2561 = scalar_lea.vmem %s4, 2
        %v2562 = vld [vmem:[%s2561] sm:$0x1]
        %v2564 = vlaneseq
        %v2565 = vshrl.u32 %v2564, 7
        %v2566 = vsub.s32 0, %v2565
        %v2567 = vrot.slane %v2562, %v2566
        %v2569 = vmul.f32 %v2567, %v801
        %v2570 = vmul.f32 %v2567, %v806
        %v2571 = vadd.f32 %v856, %v2569
        %v2572 = vadd.f32 %v859, %v2570
        %s2573 = scalar_lea.vmem %s4, 5
        %v2574 = vld [vmem:[%s2573] sm:$0x1]
        %v2576 = vlaneseq
        %v2577 = vshrl.u32 %v2576, 7
        %v2578 = vsub.s32 0, %v2577
        %v2579 = vrot.slane %v2574, %v2578
        %v2581 = vmul.f32 %v2579, %v801
        %v2582 = vmul.f32 %v2579, %v806
        %v2583 = vadd.f32 %v917, %v2581
        %v2584 = vadd.f32 %v920, %v2582
        %s2585 = scalar_lea.vmem %s5, 64
        %v2586 = vld [vmem:[%s2585] sm:$0xff]
        %v2587 = vld [vmem:[%s2585 + $0x8] sm:$0xff]
        %v2588 = vld [vmem:[%s2585 + $0x10] sm:$0xff]
        %v2589 = vld [vmem:[%s2585 + $0x18] sm:$0xff]
        %s2590 = scalar_lea.vmem %s6, 2
        %v2591 = vld [vmem:[%s2590] sm:$0x1]
        %v2593 = vlaneseq
        %v2594 = vshrl.u32 %v2593, 7
        %v2595 = vsub.s32 0, %v2594
        %v2596 = vrot.slane %v2591, %v2595
        %v2599 = vsel %vm974, %v2571, 0
        %v2602 = vsel %vm974, %v2572, 0
        %2604 = vmatprep.subr.mxu0 0.0
        %2605 = vmatpush1.msra.mxu0 0.0
        %2606 = vmatprep.subr.mxu0 0.0
        %2607 = vmatpush1.msra.mxu0 0.0
        %2608 = vmatprep.subr.mxu0 0.0
        %2609 = vmatpush1.msra.mxu0 0.0
        %2610 = vmatprep.subr.mxu0 0.0
        %2611 = vmatpush1.msra.mxu0 0.0
        %2612 = vmatprep.subr.mxu0 0.0
        %2613 = vmatpush1.msra.mxu0 0.0
        %2614 = vmatprep.subr.mxu0 0.0
        %2615 = vmatpush1.msra.mxu0 0.0
        %2616 = vmatprep.subr.mxu0 0.0
        %2617 = vmatpush1.msra.mxu0 0.0
        %2618 = vmatprep.subr.mxu0 0.0
        %2619 = vmatpush1.msra.mxu0 0.0
        %2620 = vmatprep.subr.mxu0 0.0
        %2621 = vmatpush1.msra.mxu0 0.0
        %2622 = vmatprep.subr.mxu0 0.0
        %2623 = vmatpush1.msra.mxu0 0.0
        %2624 = vmatprep.subr.mxu0 0.0
        %2625 = vmatpush1.msra.mxu0 0.0
        %2626 = vmatprep.subr.mxu0 0.0
        %2627 = vmatpush1.msra.mxu0 0.0
        %2628 = vmatprep.subr.mxu0 0.0
        %2629 = vmatpush1.msra.mxu0 %v2589
        %2630 = vmatprep.subr.mxu0 0.0
        %2631 = vmatpush1.msra.mxu0 %v2588
        %2632 = vmatprep.subr.mxu0 0.0
        %2633 = vmatpush1.msra.mxu0 %v2587
        %2634 = vmatprep.subr.mxu0 0.0
        %2635 = vmatpush1.msra.mxu0 %v2586
        %2636 = vmatprep.subr.mxu0 0.0
        %2637 = vmatpush2.msra.mxu0 0.0
        %2638 = vmatprep.subr.mxu0 0.0
        %2639 = vmatpush2.msra.mxu0 0.0
        %2640 = vmatprep.subr.mxu0 0.0
        %2641 = vmatpush2.msra.mxu0 0.0
        %2642 = vmatprep.subr.mxu0 0.0
        %2643 = vmatpush2.msra.mxu0 0.0
        %2644 = vmatprep.subr.mxu0 0.0
        %2645 = vmatpush2.msra.mxu0 0.0
        %2646 = vmatprep.subr.mxu0 0.0
        %2647 = vmatpush2.msra.mxu0 0.0
        %2648 = vmatprep.subr.mxu0 0.0
        %2649 = vmatpush2.msra.mxu0 0.0
        %2650 = vmatprep.subr.mxu0 0.0
        %2651 = vmatpush2.msra.mxu0 0.0
        %2652 = vmatprep.subr.mxu0 0.0
        %2653 = vmatpush2.msra.mxu0 0.0
        %2654 = vmatprep.subr.mxu0 0.0
        %2655 = vmatpush2.msra.mxu0 0.0
        %2656 = vmatprep.subr.mxu0 0.0
        %2657 = vmatpush2.msra.mxu0 0.0
        %2658 = vmatprep.subr.mxu0 0.0
        %2659 = vmatpush2.msra.mxu0 0.0
        %2660 = vmatprep.subr.mxu0 0.0
        %2661 = vmatpush2.msra.mxu0 0.0
        %2662 = vmatprep.subr.mxu0 0.0
        %2663 = vmatpush2.msra.mxu0 0.0
        %2664 = vmatprep.subr.mxu0 0.0
        %2665 = vmatpush2.msra.mxu0 0.0
        %2666 = vmatprep.subr.mxu0 0.0
        %2667 = vmatpush2.msra.mxu0 0.0
        %2668 = vmatprep.mubr.f32.mxu0 0.0
        %2669 = vmatmul.mubr.f32.gmra.mxu0 %v2599
        %v2670 = vpop.f32.mrf.mxu0
        %v2671 = vadd.f32 %v2596, %v2670
        %v2672 = vpop.f32.mrf.mxu0
        %2673 = vmatprep.mubr.f32.mxu0 0.0
        %2674 = vmatmul.mubr.f32.gmra.mxu0 %v2602
        %v2675 = vpop.f32.mrf.mxu0
        %v2676 = vadd.f32 %v2596, %v2675
        %v2677 = vpop.f32.mrf.mxu0
        %2678 = vdwg.mxu0
        %vm2679 = vcmp.ge.f32.partialorder %v2671, 0.0
        %vm2680 = vcmp.ge.f32.partialorder %v2676, 0.0
        %v2681 = vmul.f32 %v2671, 0.2
        %v2682 = vmul.f32 %v2676, 0.2
        %v2683 = vsel %vm2679, %v2671, %v2681
        %v2684 = vsel %vm2680, %v2676, %v2682
        %s2685 = scalar_lea.vmem %s7, 2
        %v2686 = vld [vmem:[%s2685] sm:$0x1]
        %v2688 = vlaneseq
        %v2689 = vshrl.u32 %v2688, 7
        %v2690 = vsub.s32 0, %v2689
        %v2691 = vrot.slane %v2686, %v2690
        %v2693 = vmul.f32 %v2683, %v2691
        %v2694 = vmul.f32 %v2684, %v2691
        %s2695 = scalar_lea.vmem [#allocation5], 2
        %v2696 = vld [vmem:[%s2695] sm:$0x1]
        %v2698 = vlaneseq
        %v2699 = vshrl.u32 %v2698, 7
        %v2700 = vsub.s32 0, %v2699
        %v2701 = vrot.slane %v2696, %v2700
        %v2703 = vadd.f32 %v2693, %v2701
        %v2704 = vadd.f32 %v2694, %v2701
        %vm2705 = vcmp.ge.f32.partialorder %v2703, 0.0
        %vm2706 = vcmp.ge.f32.partialorder %v2704, 0.0
        %v2707 = vmin.f32 %v2703, 0.0
        %v2708 = vmin.f32 %v2704, 0.0
        %v2709 = vmul.f32 %v2707, 1.442695
        %v2710 = vpow.pop %v2709
        %v2711 = vmul.f32 %v2708, 1.442695
        %v2712 = vpow.pop %v2711
        %v2713 = vsub.f32 %v2710, 1.0
        %v2714 = vsub.f32 %v2712, 1.0
        %v2715 = vsel %vm2705, %v2703, %v2713
        %v2716 = vsel %vm2706, %v2704, %v2714
        %s2717 = scalar_lea.vmem [#allocation7], 32
        %v2718 = vld [vmem:[%s2717] sm:$0xff]
        %v2719 = vld [vmem:[%s2717 + $0x8] sm:$0xff]
        %s2720 = scalar_lea.vmem [#allocation8], 2
        %v2721 = vld [vmem:[%s2720] sm:$0x1]
        %v2723 = vlaneseq
        %v2724 = vshrl.u32 %v2723, 7
        %v2725 = vsub.s32 0, %v2724
        %v2726 = vrot.slane %v2721, %v2725
        %v2729 = vsel %vm817, %v2715, 0
        %v2732 = vsel %vm817, %v2716, 0
        %2734 = vmatprep.subr.mxu0 0.0
        %2735 = vmatpush1.msra.mxu0 0.0
        %2736 = vmatprep.subr.mxu0 0.0
        %2737 = vmatpush1.msra.mxu0 0.0
        %2738 = vmatprep.subr.mxu0 0.0
        %2739 = vmatpush1.msra.mxu0 0.0
        %2740 = vmatprep.subr.mxu0 0.0
        %2741 = vmatpush1.msra.mxu0 0.0
        %2742 = vmatprep.subr.mxu0 0.0
        %2743 = vmatpush1.msra.mxu0 0.0
        %2744 = vmatprep.subr.mxu0 0.0
        %2745 = vmatpush1.msra.mxu0 0.0
        %2746 = vmatprep.subr.mxu0 0.0
        %2747 = vmatpush1.msra.mxu0 0.0
        %2748 = vmatprep.subr.mxu0 0.0
        %2749 = vmatpush1.msra.mxu0 0.0
        %2750 = vmatprep.subr.mxu0 0.0
        %2751 = vmatpush1.msra.mxu0 0.0
        %2752 = vmatprep.subr.mxu0 0.0
        %2753 = vmatpush1.msra.mxu0 0.0
        %2754 = vmatprep.subr.mxu0 0.0
        %2755 = vmatpush1.msra.mxu0 0.0
        %2756 = vmatprep.subr.mxu0 0.0
        %2757 = vmatpush1.msra.mxu0 0.0
        %2758 = vmatprep.subr.mxu0 0.0
        %2759 = vmatpush1.msra.mxu0 0.0
        %2760 = vmatprep.subr.mxu0 0.0
        %2761 = vmatpush1.msra.mxu0 0.0
        %2762 = vmatprep.subr.mxu0 0.0
        %2763 = vmatpush1.msra.mxu0 %v2719
        %2764 = vmatprep.subr.mxu0 0.0
        %2765 = vmatpush1.msra.mxu0 %v2718
        %2766 = vmatprep.subr.mxu0 0.0
        %2767 = vmatpush2.msra.mxu0 0.0
        %2768 = vmatprep.subr.mxu0 0.0
        %2769 = vmatpush2.msra.mxu0 0.0
        %2770 = vmatprep.subr.mxu0 0.0
        %2771 = vmatpush2.msra.mxu0 0.0
        %2772 = vmatprep.subr.mxu0 0.0
        %2773 = vmatpush2.msra.mxu0 0.0
        %2774 = vmatprep.subr.mxu0 0.0
        %2775 = vmatpush2.msra.mxu0 0.0
        %2776 = vmatprep.subr.mxu0 0.0
        %2777 = vmatpush2.msra.mxu0 0.0
        %2778 = vmatprep.subr.mxu0 0.0
        %2779 = vmatpush2.msra.mxu0 0.0
        %2780 = vmatprep.subr.mxu0 0.0
        %2781 = vmatpush2.msra.mxu0 0.0
        %2782 = vmatprep.subr.mxu0 0.0
        %2783 = vmatpush2.msra.mxu0 0.0
        %2784 = vmatprep.subr.mxu0 0.0
        %2785 = vmatpush2.msra.mxu0 0.0
        %2786 = vmatprep.subr.mxu0 0.0
        %2787 = vmatpush2.msra.mxu0 0.0
        %2788 = vmatprep.subr.mxu0 0.0
        %2789 = vmatpush2.msra.mxu0 0.0
        %2790 = vmatprep.subr.mxu0 0.0
        %2791 = vmatpush2.msra.mxu0 0.0
        %2792 = vmatprep.subr.mxu0 0.0
        %2793 = vmatpush2.msra.mxu0 0.0
        %2794 = vmatprep.subr.mxu0 0.0
        %2795 = vmatpush2.msra.mxu0 0.0
        %2796 = vmatprep.subr.mxu0 0.0
        %2797 = vmatpush2.msra.mxu0 0.0
        %2798 = vmatprep.mubr.f32.mxu0 0.0
        %2799 = vmatmul.mubr.f32.gmra.mxu0 %v2729
        %v2800 = vpop.f32.mrf.mxu0
        %v2801 = vadd.f32 %v2726, %v2800
        %v2802 = vpop.f32.mrf.mxu0
        %2803 = vmatprep.mubr.f32.mxu0 0.0
        %2804 = vmatmul.mubr.f32.gmra.mxu0 %v2732
        %v2805 = vpop.f32.mrf.mxu0
        %v2806 = vadd.f32 %v2726, %v2805
        %v2807 = vpop.f32.mrf.mxu0
        %2808 = vdwg.mxu0
        %vm2809 = vcmp.ge.f32.partialorder %v2801, 0.0
        %vm2810 = vcmp.ge.f32.partialorder %v2806, 0.0
        %v2811 = vmul.f32 %v2801, 0.2
        %v2812 = vmul.f32 %v2806, 0.2
        %v2813 = vsel %vm2809, %v2801, %v2811
        %v2814 = vsel %vm2810, %v2806, %v2812
        %s2815 = scalar_lea.vmem [#allocation10], 2
        %v2816 = vld [vmem:[%s2815] sm:$0x1]
        %v2818 = vlaneseq
        %v2819 = vshrl.u32 %v2818, 7
        %v2820 = vsub.s32 0, %v2819
        %v2821 = vrot.slane %v2816, %v2820
        %v2823 = vmul.f32 %v2813, %v2821
        %v2824 = vmul.f32 %v2814, %v2821
        %s2825 = scalar_lea.vmem [#allocation11], 2
        %v2826 = vld [vmem:[%s2825] sm:$0x1]
        %v2828 = vlaneseq
        %v2829 = vshrl.u32 %v2828, 7
        %v2830 = vsub.s32 0, %v2829
        %v2831 = vrot.slane %v2826, %v2830
        %v2833 = vadd.f32 %v2823, %v2831
        %v2834 = vadd.f32 %v2824, %v2831
        %vm2835 = vcmp.ge.f32.partialorder %v2833, 0.0
        %vm2836 = vcmp.ge.f32.partialorder %v2834, 0.0
        %v2837 = vmin.f32 %v2833, 0.0
        %v2838 = vmin.f32 %v2834, 0.0
        %v2839 = vmul.f32 %v2837, 1.442695
        %v2840 = vpow.pop %v2839
        %v2841 = vmul.f32 %v2838, 1.442695
        %v2842 = vpow.pop %v2841
        %v2843 = vsub.f32 %v2840, 1.0
        %v2844 = vsub.f32 %v2842, 1.0
        %v2845 = vsel %vm2835, %v2833, %v2843
        %v2846 = vsel %vm2836, %v2834, %v2844
        %s2847 = scalar_lea.vmem %s5, 160
        %v2848 = vld [vmem:[%s2847] sm:$0xff]
        %v2849 = vld [vmem:[%s2847 + $0x8] sm:$0xff]
        %v2850 = vld [vmem:[%s2847 + $0x10] sm:$0xff]
        %v2851 = vld [vmem:[%s2847 + $0x18] sm:$0xff]
        %s2852 = scalar_lea.vmem %s6, 5
        %v2853 = vld [vmem:[%s2852] sm:$0x1]
        %v2855 = vlaneseq
        %v2856 = vshrl.u32 %v2855, 7
        %v2857 = vsub.s32 0, %v2856
        %v2858 = vrot.slane %v2853, %v2857
        %v2861 = vsel %vm974, %v2583, 0
        %v2864 = vsel %vm974, %v2584, 0
        %2866 = vmatprep.subr.mxu0 0.0
        %2867 = vmatpush1.msra.mxu0 0.0
        %2868 = vmatprep.subr.mxu0 0.0
        %2869 = vmatpush1.msra.mxu0 0.0
        %2870 = vmatprep.subr.mxu0 0.0
        %2871 = vmatpush1.msra.mxu0 0.0
        %2872 = vmatprep.subr.mxu0 0.0
        %2873 = vmatpush1.msra.mxu0 0.0
        %2874 = vmatprep.subr.mxu0 0.0
        %2875 = vmatpush1.msra.mxu0 0.0
        %2876 = vmatprep.subr.mxu0 0.0
        %2877 = vmatpush1.msra.mxu0 0.0
        %2878 = vmatprep.subr.mxu0 0.0
        %2879 = vmatpush1.msra.mxu0 0.0
        %2880 = vmatprep.subr.mxu0 0.0
        %2881 = vmatpush1.msra.mxu0 0.0
        %2882 = vmatprep.subr.mxu0 0.0
        %2883 = vmatpush1.msra.mxu0 0.0
        %2884 = vmatprep.subr.mxu0 0.0
        %2885 = vmatpush1.msra.mxu0 0.0
        %2886 = vmatprep.subr.mxu0 0.0
        %2887 = vmatpush1.msra.mxu0 0.0
        %2888 = vmatprep.subr.mxu0 0.0
        %2889 = vmatpush1.msra.mxu0 0.0
        %2890 = vmatprep.subr.mxu0 0.0
        %2891 = vmatpush1.msra.mxu0 %v2851
        %2892 = vmatprep.subr.mxu0 0.0
        %2893 = vmatpush1.msra.mxu0 %v2850
        %2894 = vmatprep.subr.mxu0 0.0
        %2895 = vmatpush1.msra.mxu0 %v2849
        %2896 = vmatprep.subr.mxu0 0.0
        %2897 = vmatpush1.msra.mxu0 %v2848
        %2898 = vmatprep.subr.mxu0 0.0
        %2899 = vmatpush2.msra.mxu0 0.0
        %2900 = vmatprep.subr.mxu0 0.0
        %2901 = vmatpush2.msra.mxu0 0.0
        %2902 = vmatprep.subr.mxu0 0.0
        %2903 = vmatpush2.msra.mxu0 0.0
        %2904 = vmatprep.subr.mxu0 0.0
        %2905 = vmatpush2.msra.mxu0 0.0
        %2906 = vmatprep.subr.mxu0 0.0
        %2907 = vmatpush2.msra.mxu0 0.0
        %2908 = vmatprep.subr.mxu0 0.0
        %2909 = vmatpush2.msra.mxu0 0.0
        %2910 = vmatprep.subr.mxu0 0.0
        %2911 = vmatpush2.msra.mxu0 0.0
        %2912 = vmatprep.subr.mxu0 0.0
        %2913 = vmatpush2.msra.mxu0 0.0
        %2914 = vmatprep.subr.mxu0 0.0
        %2915 = vmatpush2.msra.mxu0 0.0
        %2916 = vmatprep.subr.mxu0 0.0
        %2917 = vmatpush2.msra.mxu0 0.0
        %2918 = vmatprep.subr.mxu0 0.0
        %2919 = vmatpush2.msra.mxu0 0.0
        %2920 = vmatprep.subr.mxu0 0.0
        %2921 = vmatpush2.msra.mxu0 0.0
        %2922 = vmatprep.subr.mxu0 0.0
        %2923 = vmatpush2.msra.mxu0 0.0
        %2924 = vmatprep.subr.mxu0 0.0
        %2925 = vmatpush2.msra.mxu0 0.0
        %2926 = vmatprep.subr.mxu0 0.0
        %2927 = vmatpush2.msra.mxu0 0.0
        %2928 = vmatprep.subr.mxu0 0.0
        %2929 = vmatpush2.msra.mxu0 0.0
        %2930 = vmatprep.mubr.f32.mxu0 0.0
        %2931 = vmatmul.mubr.f32.gmra.mxu0 %v2861
        %v2932 = vpop.f32.mrf.mxu0
        %v2933 = vadd.f32 %v2858, %v2932
        %v2934 = vpop.f32.mrf.mxu0
        %2935 = vmatprep.mubr.f32.mxu0 0.0
        %2936 = vmatmul.mubr.f32.gmra.mxu0 %v2864
        %v2937 = vpop.f32.mrf.mxu0
        %v2938 = vadd.f32 %v2858, %v2937
        %v2939 = vpop.f32.mrf.mxu0
        %2940 = vdwg.mxu0
        %vm2941 = vcmp.ge.f32.partialorder %v2933, 0.0
        %vm2942 = vcmp.ge.f32.partialorder %v2938, 0.0
        %v2943 = vmul.f32 %v2933, 0.2
        %v2944 = vmul.f32 %v2938, 0.2
        %v2945 = vsel %vm2941, %v2933, %v2943
        %v2946 = vsel %vm2942, %v2938, %v2944
        %s2947 = scalar_lea.vmem %s7, 5
        %v2948 = vld [vmem:[%s2947] sm:$0x1]
        %v2950 = vlaneseq
        %v2951 = vshrl.u32 %v2950, 7
        %v2952 = vsub.s32 0, %v2951
        %v2953 = vrot.slane %v2948, %v2952
        %v2955 = vmul.f32 %v2945, %v2953
        %v2956 = vmul.f32 %v2946, %v2953
        %s2957 = scalar_lea.vmem [#allocation5], 5
        %v2958 = vld [vmem:[%s2957] sm:$0x1]
        %v2960 = vlaneseq
        %v2961 = vshrl.u32 %v2960, 7
        %v2962 = vsub.s32 0, %v2961
        %v2963 = vrot.slane %v2958, %v2962
        %v2965 = vadd.f32 %v2955, %v2963
        %v2966 = vadd.f32 %v2956, %v2963
        %vm2967 = vcmp.ge.f32.partialorder %v2965, 0.0
        %vm2968 = vcmp.ge.f32.partialorder %v2966, 0.0
        %v2969 = vmin.f32 %v2965, 0.0
        %v2970 = vmin.f32 %v2966, 0.0
        %v2971 = vmul.f32 %v2969, 1.442695
        %v2972 = vpow.pop %v2971
        %v2973 = vmul.f32 %v2970, 1.442695
        %v2974 = vpow.pop %v2973
        %v2975 = vsub.f32 %v2972, 1.0
        %v2976 = vsub.f32 %v2974, 1.0
        %v2977 = vsel %vm2967, %v2965, %v2975
        %v2978 = vsel %vm2968, %v2966, %v2976
        %s2979 = scalar_lea.vmem [#allocation7], 80
        %v2980 = vld [vmem:[%s2979] sm:$0xff]
        %v2981 = vld [vmem:[%s2979 + $0x8] sm:$0xff]
        %s2982 = scalar_lea.vmem [#allocation8], 5
        %v2983 = vld [vmem:[%s2982] sm:$0x1]
        %v2985 = vlaneseq
        %v2986 = vshrl.u32 %v2985, 7
        %v2987 = vsub.s32 0, %v2986
        %v2988 = vrot.slane %v2983, %v2987
        %v2991 = vsel %vm817, %v2977, 0
        %v2994 = vsel %vm817, %v2978, 0
        %2996 = vmatprep.subr.mxu0 0.0
        %2997 = vmatpush1.msra.mxu0 0.0
        %2998 = vmatprep.subr.mxu0 0.0
        %2999 = vmatpush1.msra.mxu0 0.0
        %3000 = vmatprep.subr.mxu0 0.0
        %3001 = vmatpush1.msra.mxu0 0.0
        %3002 = vmatprep.subr.mxu0 0.0
        %3003 = vmatpush1.msra.mxu0 0.0
        %3004 = vmatprep.subr.mxu0 0.0
        %3005 = vmatpush1.msra.mxu0 0.0
        %3006 = vmatprep.subr.mxu0 0.0
        %3007 = vmatpush1.msra.mxu0 0.0
        %3008 = vmatprep.subr.mxu0 0.0
        %3009 = vmatpush1.msra.mxu0 0.0
        %3010 = vmatprep.subr.mxu0 0.0
        %3011 = vmatpush1.msra.mxu0 0.0
        %3012 = vmatprep.subr.mxu0 0.0
        %3013 = vmatpush1.msra.mxu0 0.0
        %3014 = vmatprep.subr.mxu0 0.0
        %3015 = vmatpush1.msra.mxu0 0.0
        %3016 = vmatprep.subr.mxu0 0.0
        %3017 = vmatpush1.msra.mxu0 0.0
        %3018 = vmatprep.subr.mxu0 0.0
        %3019 = vmatpush1.msra.mxu0 0.0
        %3020 = vmatprep.subr.mxu0 0.0
        %3021 = vmatpush1.msra.mxu0 0.0
        %3022 = vmatprep.subr.mxu0 0.0
        %3023 = vmatpush1.msra.mxu0 0.0
        %3024 = vmatprep.subr.mxu0 0.0
        %3025 = vmatpush1.msra.mxu0 %v2981
        %3026 = vmatprep.subr.mxu0 0.0
        %3027 = vmatpush1.msra.mxu0 %v2980
        %3028 = vmatprep.subr.mxu0 0.0
        %3029 = vmatpush2.msra.mxu0 0.0
        %3030 = vmatprep.subr.mxu0 0.0
        %3031 = vmatpush2.msra.mxu0 0.0
        %3032 = vmatprep.subr.mxu0 0.0
        %3033 = vmatpush2.msra.mxu0 0.0
        %3034 = vmatprep.subr.mxu0 0.0
        %3035 = vmatpush2.msra.mxu0 0.0
        %3036 = vmatprep.subr.mxu0 0.0
        %3037 = vmatpush2.msra.mxu0 0.0
        %3038 = vmatprep.subr.mxu0 0.0
        %3039 = vmatpush2.msra.mxu0 0.0
        %3040 = vmatprep.subr.mxu0 0.0
        %3041 = vmatpush2.msra.mxu0 0.0
        %3042 = vmatprep.subr.mxu0 0.0
        %3043 = vmatpush2.msra.mxu0 0.0
        %3044 = vmatprep.subr.mxu0 0.0
        %3045 = vmatpush2.msra.mxu0 0.0
        %3046 = vmatprep.subr.mxu0 0.0
        %3047 = vmatpush2.msra.mxu0 0.0
        %3048 = vmatprep.subr.mxu0 0.0
        %3049 = vmatpush2.msra.mxu0 0.0
        %3050 = vmatprep.subr.mxu0 0.0
        %3051 = vmatpush2.msra.mxu0 0.0
        %3052 = vmatprep.subr.mxu0 0.0
        %3053 = vmatpush2.msra.mxu0 0.0
        %3054 = vmatprep.subr.mxu0 0.0
        %3055 = vmatpush2.msra.mxu0 0.0
        %3056 = vmatprep.subr.mxu0 0.0
        %3057 = vmatpush2.msra.mxu0 0.0
        %3058 = vmatprep.subr.mxu0 0.0
        %3059 = vmatpush2.msra.mxu0 0.0
        %3060 = vmatprep.mubr.f32.mxu0 0.0
        %3061 = vmatmul.mubr.f32.gmra.mxu0 %v2991
        %v3062 = vpop.f32.mrf.mxu0
        %v3063 = vadd.f32 %v2988, %v3062
        %v3064 = vpop.f32.mrf.mxu0
        %3065 = vmatprep.mubr.f32.mxu0 0.0
        %3066 = vmatmul.mubr.f32.gmra.mxu0 %v2994
        %v3067 = vpop.f32.mrf.mxu0
        %v3068 = vadd.f32 %v2988, %v3067
        %v3069 = vpop.f32.mrf.mxu0
        %3070 = vdwg.mxu0
        %vm3071 = vcmp.ge.f32.partialorder %v3063, 0.0
        %vm3072 = vcmp.ge.f32.partialorder %v3068, 0.0
        %v3073 = vmul.f32 %v3063, 0.2
        %v3074 = vmul.f32 %v3068, 0.2
        %v3075 = vsel %vm3071, %v3063, %v3073
        %v3076 = vsel %vm3072, %v3068, %v3074
        %s3077 = scalar_lea.vmem [#allocation10], 5
        %v3078 = vld [vmem:[%s3077] sm:$0x1]
        %v3080 = vlaneseq
        %v3081 = vshrl.u32 %v3080, 7
        %v3082 = vsub.s32 0, %v3081
        %v3083 = vrot.slane %v3078, %v3082
        %v3085 = vmul.f32 %v3075, %v3083
        %v3086 = vmul.f32 %v3076, %v3083
        %s3087 = scalar_lea.vmem [#allocation11], 5
        %v3088 = vld [vmem:[%s3087] sm:$0x1]
        %v3090 = vlaneseq
        %v3091 = vshrl.u32 %v3090, 7
        %v3092 = vsub.s32 0, %v3091
        %v3093 = vrot.slane %v3088, %v3092
        %v3095 = vadd.f32 %v3085, %v3093
        %v3096 = vadd.f32 %v3086, %v3093
        %vm3097 = vcmp.ge.f32.partialorder %v3095, 0.0
        %vm3098 = vcmp.ge.f32.partialorder %v3096, 0.0
        %v3099 = vmin.f32 %v3095, 0.0
        %v3100 = vmin.f32 %v3096, 0.0
        %v3101 = vmul.f32 %v3099, 1.442695
        %v3102 = vpow.pop %v3101
        %v3103 = vmul.f32 %v3100, 1.442695
        %v3104 = vpow.pop %v3103
        %v3105 = vsub.f32 %v3102, 1.0
        %v3106 = vsub.f32 %v3104, 1.0
        %v3107 = vsel %vm3097, %v3095, %v3105
        %v3108 = vsel %vm3098, %v3096, %v3106
        %v3110 = vsel %vm974, %v3107, 0
        %v3113 = vsel %vm974, %v3108, 0
        %3115 = vmatprep.subr.mxu0 0.0
        %3116 = vmatpush1.msra.mxu0 0.0
        %3117 = vmatprep.subr.mxu0 0.0
        %3118 = vmatpush1.msra.mxu0 0.0
        %3119 = vmatprep.subr.mxu0 0.0
        %3120 = vmatpush1.msra.mxu0 0.0
        %3121 = vmatprep.subr.mxu0 0.0
        %3122 = vmatpush1.msra.mxu0 0.0
        %3123 = vmatprep.subr.mxu0 0.0
        %3124 = vmatpush1.msra.mxu0 0.0
        %3125 = vmatprep.subr.mxu0 0.0
        %3126 = vmatpush1.msra.mxu0 0.0
        %3127 = vmatprep.subr.mxu0 0.0
        %3128 = vmatpush1.msra.mxu0 0.0
        %3129 = vmatprep.subr.mxu0 0.0
        %3130 = vmatpush1.msra.mxu0 0.0
        %3131 = vmatprep.subr.mxu0 0.0
        %3132 = vmatpush1.msra.mxu0 0.0
        %3133 = vmatprep.subr.mxu0 0.0
        %3134 = vmatpush1.msra.mxu0 0.0
        %3135 = vmatprep.subr.mxu0 0.0
        %3136 = vmatpush1.msra.mxu0 0.0
        %3137 = vmatprep.subr.mxu0 0.0
        %3138 = vmatpush1.msra.mxu0 0.0
        %3139 = vmatprep.subr.mxu0 0.0
        %3140 = vmatpush1.msra.mxu0 %v930
        %3141 = vmatprep.subr.mxu0 0.0
        %3142 = vmatpush1.msra.mxu0 %v929
        %3143 = vmatprep.subr.mxu0 0.0
        %3144 = vmatpush1.msra.mxu0 %v928
        %3145 = vmatprep.subr.mxu0 0.0
        %3146 = vmatpush1.msra.mxu0 %v927
        %3147 = vmatprep.subr.mxu0 0.0
        %3148 = vmatpush2.msra.mxu0 0.0
        %3149 = vmatprep.subr.mxu0 0.0
        %3150 = vmatpush2.msra.mxu0 0.0
        %3151 = vmatprep.subr.mxu0 0.0
        %3152 = vmatpush2.msra.mxu0 0.0
        %3153 = vmatprep.subr.mxu0 0.0
        %3154 = vmatpush2.msra.mxu0 0.0
        %3155 = vmatprep.subr.mxu0 0.0
        %3156 = vmatpush2.msra.mxu0 0.0
        %3157 = vmatprep.subr.mxu0 0.0
        %3158 = vmatpush2.msra.mxu0 0.0
        %3159 = vmatprep.subr.mxu0 0.0
        %3160 = vmatpush2.msra.mxu0 0.0
        %3161 = vmatprep.subr.mxu0 0.0
        %3162 = vmatpush2.msra.mxu0 0.0
        %3163 = vmatprep.subr.mxu0 0.0
        %3164 = vmatpush2.msra.mxu0 0.0
        %3165 = vmatprep.subr.mxu0 0.0
        %3166 = vmatpush2.msra.mxu0 0.0
        %3167 = vmatprep.subr.mxu0 0.0
        %3168 = vmatpush2.msra.mxu0 0.0
        %3169 = vmatprep.subr.mxu0 0.0
        %3170 = vmatpush2.msra.mxu0 0.0
        %3171 = vmatprep.subr.mxu0 0.0
        %3172 = vmatpush2.msra.mxu0 0.0
        %3173 = vmatprep.subr.mxu0 0.0
        %3174 = vmatpush2.msra.mxu0 0.0
        %3175 = vmatprep.subr.mxu0 0.0
        %3176 = vmatpush2.msra.mxu0 0.0
        %3177 = vmatprep.subr.mxu0 0.0
        %3178 = vmatpush2.msra.mxu0 0.0
        %3179 = vmatprep.mubr.f32.mxu0 0.0
        %3180 = vmatmul.mubr.f32.gmra.mxu0 %v3110
        %v3181 = vpop.f32.mrf.mxu0
        %v3182 = vadd.f32 0.0, %v3181
        %v3183 = vpop.f32.mrf.mxu0
        %3184 = vmatprep.mubr.f32.mxu0 0.0
        %3185 = vmatmul.mubr.f32.gmra.mxu0 %v3113
        %v3186 = vpop.f32.mrf.mxu0
        %v3187 = vadd.f32 0.0, %v3186
        %v3188 = vpop.f32.mrf.mxu0
        %3189 = vdwg.mxu0
        %v3191 = vsel %vm974, %v2845, 0
        %v3194 = vsel %vm974, %v2846, 0
        %3196 = vmatprep.subr.mxu0 0.0
        %3197 = vmatpush1.msra.mxu0 0.0
        %3198 = vmatprep.subr.mxu0 0.0
        %3199 = vmatpush1.msra.mxu0 0.0
        %3200 = vmatprep.subr.mxu0 0.0
        %3201 = vmatpush1.msra.mxu0 0.0
        %3202 = vmatprep.subr.mxu0 0.0
        %3203 = vmatpush1.msra.mxu0 0.0
        %3204 = vmatprep.subr.mxu0 0.0
        %3205 = vmatpush1.msra.mxu0 0.0
        %3206 = vmatprep.subr.mxu0 0.0
        %3207 = vmatpush1.msra.mxu0 0.0
        %3208 = vmatprep.subr.mxu0 0.0
        %3209 = vmatpush1.msra.mxu0 0.0
        %3210 = vmatprep.subr.mxu0 0.0
        %3211 = vmatpush1.msra.mxu0 0.0
        %3212 = vmatprep.subr.mxu0 0.0
        %3213 = vmatpush1.msra.mxu0 0.0
        %3214 = vmatprep.subr.mxu0 0.0
        %3215 = vmatpush1.msra.mxu0 0.0
        %3216 = vmatprep.subr.mxu0 0.0
        %3217 = vmatpush1.msra.mxu0 0.0
        %3218 = vmatprep.subr.mxu0 0.0
        %3219 = vmatpush1.msra.mxu0 0.0
        %3220 = vmatprep.subr.mxu0 0.0
        %3221 = vmatpush1.msra.mxu0 %v926
        %3222 = vmatprep.subr.mxu0 0.0
        %3223 = vmatpush1.msra.mxu0 %v925
        %3224 = vmatprep.subr.mxu0 0.0
        %3225 = vmatpush1.msra.mxu0 %v924
        %3226 = vmatprep.subr.mxu0 0.0
        %3227 = vmatpush1.msra.mxu0 %v923
        %3228 = vmatprep.subr.mxu0 0.0
        %3229 = vmatpush2.msra.mxu0 0.0
        %3230 = vmatprep.subr.mxu0 0.0
        %3231 = vmatpush2.msra.mxu0 0.0
        %3232 = vmatprep.subr.mxu0 0.0
        %3233 = vmatpush2.msra.mxu0 0.0
        %3234 = vmatprep.subr.mxu0 0.0
        %3235 = vmatpush2.msra.mxu0 0.0
        %3236 = vmatprep.subr.mxu0 0.0
        %3237 = vmatpush2.msra.mxu0 0.0
        %3238 = vmatprep.subr.mxu0 0.0
        %3239 = vmatpush2.msra.mxu0 0.0
        %3240 = vmatprep.subr.mxu0 0.0
        %3241 = vmatpush2.msra.mxu0 0.0
        %3242 = vmatprep.subr.mxu0 0.0
        %3243 = vmatpush2.msra.mxu0 0.0
        %3244 = vmatprep.subr.mxu0 0.0
        %3245 = vmatpush2.msra.mxu0 0.0
        %3246 = vmatprep.subr.mxu0 0.0
        %3247 = vmatpush2.msra.mxu0 0.0
        %3248 = vmatprep.subr.mxu0 0.0
        %3249 = vmatpush2.msra.mxu0 0.0
        %3250 = vmatprep.subr.mxu0 0.0
        %3251 = vmatpush2.msra.mxu0 0.0
        %3252 = vmatprep.subr.mxu0 0.0
        %3253 = vmatpush2.msra.mxu0 0.0
        %3254 = vmatprep.subr.mxu0 0.0
        %3255 = vmatpush2.msra.mxu0 0.0
        %3256 = vmatprep.subr.mxu0 0.0
        %3257 = vmatpush2.msra.mxu0 0.0
        %3258 = vmatprep.subr.mxu0 0.0
        %3259 = vmatpush2.msra.mxu0 0.0
        %3260 = vmatprep.mubr.f32.mxu0 0.0
        %3261 = vmatmul.mubr.f32.gmra.mxu0 %v3191
        %v3262 = vpop.f32.mrf.mxu0
        %v3263 = vadd.f32 %v3182, %v3262
        %v3264 = vpop.f32.mrf.mxu0
        %3265 = vmatprep.mubr.f32.mxu0 0.0
        %3266 = vmatmul.mubr.f32.gmra.mxu0 %v3194
        %v3267 = vpop.f32.mrf.mxu0
        %v3268 = vadd.f32 %v3187, %v3267
        %v3269 = vpop.f32.mrf.mxu0
        %3270 = vdwg.mxu0
        %v3271 = vadd.f32 %v3263, %v1646
        %v3272 = vadd.f32 %v3268, %v1646
        %vm3273 = vcmp.ge.f32.partialorder %v3271, 0.0
        %vm3274 = vcmp.ge.f32.partialorder %v3272, 0.0
        %v3275 = vmul.f32 %v3271, 0.01
        %v3276 = vmul.f32 %v3272, 0.01
        %v3277 = vsel %vm3273, %v3271, %v3275
        %v3278 = vsel %vm3274, %v3272, %v3276
        %s3279 = scalar_lea.vmem %s16, 256
        %v3280 = vld [vmem:[%s3279] sm:$0xff]
        %v3281 = vld [vmem:[%s3279 + $0x8] sm:$0xff]
        %v3282 = vld [vmem:[%s3279 + $0x10] sm:$0xff]
        %v3283 = vld [vmem:[%s3279 + $0x18] sm:$0xff]
        %v3284 = vld [vmem:[%s3279 + $0x20] sm:$0xff]
        %v3285 = vld [vmem:[%s3279 + $0x28] sm:$0xff]
        %v3286 = vld [vmem:[%s3279 + $0x30] sm:$0xff]
        %v3287 = vld [vmem:[%s3279 + $0x38] sm:$0xff]
        %v3288 = vld [vmem:[%s3279 + $0x40] sm:$0xff]
        %v3289 = vld [vmem:[%s3279 + $0x48] sm:$0xff]
        %v3290 = vld [vmem:[%s3279 + $0x50] sm:$0xff]
        %v3291 = vld [vmem:[%s3279 + $0x58] sm:$0xff]
        %v3292 = vld [vmem:[%s3279 + $0x60] sm:$0xff]
        %v3293 = vld [vmem:[%s3279 + $0x68] sm:$0xff]
        %v3294 = vld [vmem:[%s3279 + $0x70] sm:$0xff]
        %v3295 = vld [vmem:[%s3279 + $0x78] sm:$0xff]
        %3296 = vmatprep.subr.mxu0 0.0
        %3297 = vmatpush1.msra.mxu0 %v3295
        %3298 = vmatprep.subr.mxu0 0.0
        %3299 = vmatpush1.msra.mxu0 %v3294
        %3300 = vmatprep.subr.mxu0 0.0
        %3301 = vmatpush1.msra.mxu0 %v3293
        %3302 = vmatprep.subr.mxu0 0.0
        %3303 = vmatpush1.msra.mxu0 %v3292
        %3304 = vmatprep.subr.mxu0 0.0
        %3305 = vmatpush1.msra.mxu0 %v3291
        %3306 = vmatprep.subr.mxu0 0.0
        %3307 = vmatpush1.msra.mxu0 %v3290
        %3308 = vmatprep.subr.mxu0 0.0
        %3309 = vmatpush1.msra.mxu0 %v3289
        %3310 = vmatprep.subr.mxu0 0.0
        %3311 = vmatpush1.msra.mxu0 %v3288
        %3312 = vmatprep.subr.mxu0 0.0
        %3313 = vmatpush1.msra.mxu0 %v3287
        %3314 = vmatprep.subr.mxu0 0.0
        %3315 = vmatpush1.msra.mxu0 %v3286
        %3316 = vmatprep.subr.mxu0 0.0
        %3317 = vmatpush1.msra.mxu0 %v3285
        %3318 = vmatprep.subr.mxu0 0.0
        %3319 = vmatpush1.msra.mxu0 %v3284
        %3320 = vmatprep.subr.mxu0 0.0
        %3321 = vmatpush1.msra.mxu0 %v3283
        %3322 = vmatprep.subr.mxu0 0.0
        %3323 = vmatpush1.msra.mxu0 %v3282
        %3324 = vmatprep.subr.mxu0 0.0
        %3325 = vmatpush1.msra.mxu0 %v3281
        %3326 = vmatprep.subr.mxu0 0.0
        %3327 = vmatpush1.msra.mxu0 %v3280
        %3328 = vmatprep.subr.mxu0 0.0
        %3329 = vmatpush2.msra.mxu0 0.0
        %3330 = vmatprep.subr.mxu0 0.0
        %3331 = vmatpush2.msra.mxu0 0.0
        %3332 = vmatprep.subr.mxu0 0.0
        %3333 = vmatpush2.msra.mxu0 0.0
        %3334 = vmatprep.subr.mxu0 0.0
        %3335 = vmatpush2.msra.mxu0 0.0
        %3336 = vmatprep.subr.mxu0 0.0
        %3337 = vmatpush2.msra.mxu0 0.0
        %3338 = vmatprep.subr.mxu0 0.0
        %3339 = vmatpush2.msra.mxu0 0.0
        %3340 = vmatprep.subr.mxu0 0.0
        %3341 = vmatpush2.msra.mxu0 0.0
        %3342 = vmatprep.subr.mxu0 0.0
        %3343 = vmatpush2.msra.mxu0 0.0
        %3344 = vmatprep.subr.mxu0 0.0
        %3345 = vmatpush2.msra.mxu0 0.0
        %3346 = vmatprep.subr.mxu0 0.0
        %3347 = vmatpush2.msra.mxu0 0.0
        %3348 = vmatprep.subr.mxu0 0.0
        %3349 = vmatpush2.msra.mxu0 0.0
        %3350 = vmatprep.subr.mxu0 0.0
        %3351 = vmatpush2.msra.mxu0 0.0
        %3352 = vmatprep.subr.mxu0 0.0
        %3353 = vmatpush2.msra.mxu0 0.0
        %3354 = vmatprep.subr.mxu0 0.0
        %3355 = vmatpush2.msra.mxu0 0.0
        %3356 = vmatprep.subr.mxu0 0.0
        %3357 = vmatpush2.msra.mxu0 0.0
        %3358 = vmatprep.subr.mxu0 0.0
        %3359 = vmatpush2.msra.mxu0 0.0
        %3360 = vmatprep.mubr.f32.mxu0 0.0
        %3361 = vmatmul.mubr.f32.gmra.mxu0 %v3277
        %v3362 = vpop.f32.mrf.mxu0
        %v3363 = vadd.f32 0.0, %v3362
        %v3364 = vpop.f32.mrf.mxu0
        %3365 = vmatprep.mubr.f32.mxu0 0.0
        %3366 = vmatmul.mubr.f32.gmra.mxu0 %v3278
        %v3367 = vpop.f32.mrf.mxu0
        %v3368 = vadd.f32 0.0, %v3367
        %v3369 = vpop.f32.mrf.mxu0
        %3370 = vdwg.mxu0
        %v3371 = vadd.f32 %v2559, %v3363
        %v3372 = vadd.f32 %v2560, %v3368
        %3373 = vst [vmem:[%s710] sm:$0xff] %v3371
        %3374 = vst [vmem:[%s710 + $0x8] sm:$0xff] %v3372
        %s3375 = sand.u32 %s435, 1
        %s3376 = scalar_lea.sflag [#allocation4], %s3375
        %s3377 = sand.u32 %s435, 1
        %s3378 = smul.addr %s3377, 16
        %s3379 = scalar_lea.vmem [#allocation16], %s3378
        // Predicated region
        $region125: #{tpu_custom_call.1} parent=91 // pred_check
          %p3380 = pneg %p445
        $region126: #{tpu_custom_call.1} parent=91 // pred_check_branch
          %3382 = sbr.rel (%p3380) target = $region128
        $region127: #{tpu_custom_call.1} parent=91 // pred_region
          %s3384 = ssub.s32 256, 256
          %3385 = vsyncadd %s3376, %s3384
          %s3386 = smul.addr %s39, 2
          %s3387 = smul.addr %s3386, 128
          %s3388 = scalar_lea.hbm %s18, %s3387
          %s3389 = sshll.u32 %s3379, 4
          %s3390 = int_to_ptr.vmem [resolvable:$true] %s3389
          %3395 = dma.vmem_to_hbm [thread:$0]  %s3390, 256, %s3388, %s3376, 128, 128, 8
        $region128: #{tpu_custom_call.1} parent=91 // pred_fallthru
          _
      $region92: #{tpu_custom_call.1} parent=5 // pred_fallthru
        _
      %p3396 = scmp.le.s32.totalorder 2, %s34
      // Predicated region
      $region129: #{tpu_custom_call.1} parent=5 // pred_check
        %p3397 = pneg %p3396
      $region130: #{tpu_custom_call.1} parent=5 // pred_check_branch
        %3399 = sbr.rel (%p3397) target = $region132
      $region131: #{tpu_custom_call.1} parent=5 // pred_region
        %s3400 = ssub.s32 %s34, 2
        // Predicated region
        $region133: #{tpu_custom_call.1} parent=131 // pred_check
          %p3401 = pneg %p451
        $region134: #{tpu_custom_call.1} parent=131 // pred_check_branch
          %3403 = sbr.rel (%p3401) target = $region136
        $region135: #{tpu_custom_call.1} parent=131 // pred_region
          %s3404 = sand.u32 %s436, 1
          %s3405 = scalar_lea.sflag [#allocation4], %s3404
          %s3406 = sand.u32 %s436, 1
          %s3407 = smul.addr %s3406, 16
          %s3408 = scalar_lea.vmem [#allocation16], %s3407
          %3409 = dma.done %s3405, 256
        $region136: #{tpu_custom_call.1} parent=131 // pred_fallthru
          _
      $region132: #{tpu_custom_call.1} parent=5 // pred_fallthru
        _
    $region6: #{tpu_custom_call.1} parent=1 // loop_footer
      %s38 = sadd.s32 1, %s34
    $region7: #{tpu_custom_call.1} parent=1 // loop_footer_branch
      %33 = sbr.rel target = $region3
    $region8: #{tpu_custom_call.1} parent=1 // loop_exit
      _
    %3410 = vsyncpa [#allocation3], 1
    %s3411 = scalar_lea.sflag [#allocation3], 1
    %3412 = vsyncpa %s3411, 1
    %3413 = vsyncpa [#allocation6], 1
    %3414 = vsyncpa [#allocation9], 1
    %3415 = vsyncpa [#allocation12], 1
    %3416 = vsyncpa [#allocation15], 1
    %3417 = vsyncpa [#allocation4], 1
    %s3418 = scalar_lea.sflag [#allocation4], 1
    %3419 = vsyncpa %s3418, 1

</llo_original>
